<compile_context>
chip_gen: v6e
topology: v6e:2x2x1
jax: 0.10.0
libtpu: 0.0.40
codegen_flags: <defaults>
</compile_context>

<pallas_src>
import functools

import jax
import jax.numpy as jnp
import numpy as np
from jax.experimental import pallas as pl
from jax.experimental.pallas import tpu as pltpu  # noqa: F401  (TPU backend assumed)

LANES = 128  # lane width of the final (softmax) output block


def _round_up(x, m):
    return (x + m - 1) // m * m


# ------------------------------ fused kernel --------------------------------

def _gather_conv(p_ref, w_ref, h, n_taps):
    """sum_t (P_t @ h) @ W_t  — in-kernel im2col-as-matmul for a conv layer.

    P_t is a 0/1 row-selection matrix (gathers the input rows each output
    position needs for kernel tap t); W_t is that tap's (Cin, Cout) weight
    slice.  Unrolled Python loop -> 2*n_taps small MXU matmuls, fully visible
    to the LLO scheduler.
    """
    f32 = jnp.float32
    acc = jnp.dot(jnp.dot(p_ref[0], h, preferred_element_type=f32),
                  w_ref[0], preferred_element_type=f32)
    for t in range(1, n_taps):
        acc = acc + jnp.dot(jnp.dot(p_ref[t], h, preferred_element_type=f32),
                            w_ref[t], preferred_element_type=f32)
    return acc


def _actor_fused_kernel(patches_ref, w1_ref, b1_ref,
                        p2_ref, w2_ref, b2_ref,
                        p3_ref, w3_ref, b3_ref,
                        wfc1_ref, bfc1_ref, wfc2_ref, bfc2_ref,
                        out_ref, *, n_taps2, n_taps3, n_actions):
    f32 = jnp.float32

    # conv1: im2col patches (M1, 256) @ (256, 32) + bias, ReLU.
    h1 = jnp.dot(patches_ref[...], w1_ref[...], preferred_element_type=f32)
    h1 = jnp.maximum(h1 + b1_ref[...], 0.0)                     # (M1, 32)

    # conv2 (16 taps) and conv3 (9 taps) via selection-matmul gathers.
    h2 = jnp.maximum(_gather_conv(p2_ref, w2_ref, h1, n_taps2) + b2_ref[...], 0.0)  # (M2, 64)
    h3 = jnp.maximum(_gather_conv(p3_ref, w3_ref, h2, n_taps3) + b3_ref[...], 0.0)  # (M3, 64)

    # fc1 + ReLU.
    h4 = jnp.dot(h3, wfc1_ref[...], preferred_element_type=f32)
    h4 = jnp.maximum(h4 + bfc1_ref[...], 0.0)                   # (M3, 256)

    # fc2 + masked, numerically-stable softmax (lanes >= n_actions are pad).
    logits = jnp.dot(h4, wfc2_ref[...], preferred_element_type=f32) + bfc2_ref[...]
    lane = jax.lax.broadcasted_iota(jnp.int32, logits.shape, 1)
    logits = jnp.where(lane < n_actions, logits, -1e30)
    m = jnp.max(logits, axis=-1, keepdims=True)
    e = jnp.exp(logits - m)
    # Exact division keeps the tight match vs. the f32 reference
    # (pl.reciprocal(..., approx=True) is the EUP-slot variant if tolerance is relaxed).
    out_ref[...] = e / jnp.sum(e, axis=-1, keepdims=True)


# --------------------------- parameter preparation --------------------------

def init_actor_params(num_channels=4, output_dim=5, seed=0):
    """Kaiming-normal(fan_out) weights / zero biases, PyTorch layouts."""
    key = jax.random.PRNGKey(seed)
    ks = jax.random.split(key, 5)

    def kaiming(k, shape, fan_out):
        return jax.random.normal(k, shape, jnp.float32) * np.sqrt(2.0 / fan_out)

    return {
        "w1": kaiming(ks[0], (32, num_channels, 8, 8), 32 * 8 * 8),
        "b1": jnp.zeros((32,), jnp.float32),
        "w2": kaiming(ks[1], (64, 32, 4, 4), 64 * 4 * 4),
        "b2": jnp.zeros((64,), jnp.float32),
        "w3": kaiming(ks[2], (64, 64, 3, 3), 64 * 3 * 3),
        "b3": jnp.zeros((64,), jnp.float32),
        "fc1_w": kaiming(ks[3], (256, 64), 256),      # PyTorch (out, in)
        "fc1_b": jnp.zeros((256,), jnp.float32),
        "fc2_w": kaiming(ks[4], (output_dim, 256), output_dim),
        "fc2_b": jnp.zeros((output_dim,), jnp.float32),
    }


def prepare_params(params, output_dim=5):
    """One-time transpose/reshape of all weights to kernel layouts.

    No 128-lane zero padding of the hidden layers: weights keep their exact
    channel widths (32/64/256), minimizing HBM->VMEM DMA per call.  Only fc2's
    output is padded to 128 lanes so the final HBM store is lane-dense.
    """
    f32 = jnp.float32
    w1, w2, w3 = params["w1"], params["w2"], params["w3"]
    oc1, ic1, k1, _ = w1.shape          # (32, C, 8, 8)
    oc2, ic2, k2, _ = w2.shape          # (64, 32, 4, 4)
    oc3, ic3, k3, _ = w3.shape          # (64, 64, 3, 3)

    # conv1 as a (C*KH*KW, 32) matmul weight; K ordering = (c, kh, kw).
    w1m = w1.reshape(oc1, -1).T.astype(f32)                       # (256, 32)
    b1p = params["b1"].reshape(1, oc1).astype(f32)

    # conv2/conv3: per-tap (Cin, Cout) weight slices, tap order t = kh*K + kw.
    w2s = w2.transpose(2, 3, 1, 0).reshape(k2 * k2, ic2, oc2).astype(f32)   # (16, 32, 64)
    b2p = params["b2"].reshape(1, oc2).astype(f32)

    w3s = w3.transpose(2, 3, 1, 0).reshape(k3 * k3, ic3, oc3).astype(f32)   # (9, 64, 64)
    b3p = params["b3"].reshape(1, oc3).astype(f32)

    d_fc1 = params["fc1_w"].shape[0]    # 256
    wfc1 = params["fc1_w"].T.astype(f32)                          # (64, 256)
    bfc1 = params["fc1_b"].reshape(1, d_fc1).astype(f32)

    # fc2 padded to 128 lanes: lane-dense output block + room for the softmax mask.
    wfc2 = jnp.zeros((d_fc1, LANES), f32).at[:, :output_dim].set(params["fc2_w"].T.astype(f32))
    bfc2 = jnp.zeros((1, LANES), f32).at[0, :output_dim].set(params["fc2_b"])

    return dict(w1m=w1m, b1p=b1p, w2s=w2s, b2p=b2p, w3s=w3s, b3p=b3p,
                wfc1=wfc1, bfc1=bfc1, wfc2=wfc2, bfc2=bfc2,
                k1=int(k1), k2=int(k2), k3=int(k3), output_dim=int(output_dim))


def _row_select_matrices(batch, hw_in, hw_out, ksize, stride, rows_in_pad, rows_out_pad):
    """0/1 matrices P[t] of shape (rows_out_pad, rows_in_pad); output row
    r=(b,p,q) of the conv picks input row (b, stride*p+kh, stride*q+kw) for
    kernel tap t = kh*K + kw. Padded rows/cols stay all-zero."""
    p = np.zeros((ksize * ksize, rows_out_pad, rows_in_pad), np.float32)
    for kh in range(ksize):
        for kw in range(ksize):
            t = kh * ksize + kw
            for b in range(batch):
                for i in range(hw_out):
                    for j in range(hw_out):
                        r = (b * hw_out + i) * hw_out + j
                        src = (b * hw_in + stride * i + kh) * hw_in + stride * j + kw
                        p[t, r, src] = 1.0
    return jnp.asarray(p)


# ------------------------------- forward pass --------------------------------

def make_actor_forward(prep):
    k1, k2, k3 = prep["k1"], prep["k2"], prep["k3"]
    n_act = prep["output_dim"]
    weights = {k: prep[k] for k in ("w1m", "b1p", "w2s", "b2p", "w3s", "b3p",
                                    "wfc1", "bfc1", "wfc2", "bfc2")}

    @jax.jit
    def forward(w, x):
        B, C, H, W = x.shape
        oh1 = (H - k1) // 4 + 1
        ow1 = (W - k1) // 4 + 1
        oh2 = (oh1 - k2) // 2 + 1
        oh3 = (oh2 - k3) // 1 + 1
        assert oh3 == 1 and ow1 == oh1, "Actor expects 36x36 inputs (fc1 takes 64 features)"

        # conv1 im2col (only per-call host glue): two static gathers + reshape.
        idx = 4 * np.arange(oh1)[:, None] + np.arange(k1)[None, :]      # (8, 8)
        xg = x[:, :, idx, :]                                            # (B, C, oh, kh, W)
        xg = xg[..., idx]                                               # (B, C, oh, kh, ow, kw)
        patches = xg.transpose(0, 2, 4, 1, 3, 5).reshape(
            B * oh1 * ow1, C * k1 * k1).astype(jnp.float32)             # K order = (c, kh, kw)

        m1 = B * oh1 * ow1                   # 128 for B=2 (multiple of 8 by construction)
        m2 = _round_up(B * oh2 * oh2, 8)     # 24
        m3 = _round_up(B, 8)                 # 8

        # Selection matrices are trace-time constants (baked into the jitted graph).
        p2 = _row_select_matrices(B, oh1, oh2, k2, 2, m1, m2)   # (16, m2, m1)
        p3 = _row_select_matrices(B, oh2, oh3, k3, 1, m2, m3)   # (9,  m3, m2)

        kernel = functools.partial(_actor_fused_kernel,
                                   n_taps2=k2 * k2, n_taps3=k3 * k3, n_actions=n_act)
        full = lambda a: pl.BlockSpec(a.shape)

        # TODO(synk): for large batches, add a grid over row blocks with
        # dimension_semantics=("parallel",) so v7x's two TensorCores split the work.
        probs_pad = pl.pallas_call(
            kernel,
            out_shape=jax.ShapeDtypeStruct((m3, LANES), jnp.float32),
            in_specs=[
                full(patches), full(w["w1m"]), full(w["b1p"]),
                full(p2), full(w["w2s"]), full(w["b2p"]),
                full(p3), full(w["w3s"]), full(w["b3p"]),
                full(w["wfc1"]), full(w["bfc1"]), full(w["wfc2"]), full(w["bfc2"]),
            ],
            out_specs=pl.BlockSpec((m3, LANES)),
        )(patches, w["w1m"], w["b1p"],
          p2, w["w2s"], w["b2p"],
          p3, w["w3s"], w["b3p"],
          w["wfc1"], w["bfc1"], w["wfc2"], w["bfc2"])

        return probs_pad[:B, :n_act]

    return lambda x: forward(weights, x)


# ------------------------------ pure-JAX reference ---------------------------

def actor_forward_ref(params, x):
    def conv(h, w, b, s):
        y = jax.lax.conv_general_dilated(
            h, w, window_strides=(s, s), padding="VALID",
            dimension_numbers=("NCHW", "OIHW", "NCHW"))
        return jax.nn.relu(y + b.reshape(1, -1, 1, 1))
    h = conv(x, params["w1"], params["b1"], 4)
    h = conv(h, params["w2"], params["b2"], 2)
    h = conv(h, params["w3"], params["b3"], 1)
    h = h.reshape(h.shape[0], -1)
    h = jax.nn.relu(h @ params["fc1_w"].T + params["fc1_b"])
    return jax.nn.softmax(h @ params["fc2_w"].T + params["fc2_b"], axis=-1)


if __name__ == "__main__":
    B, C, H, W = 2, 4, 36, 36    # 36x36 is forced by fc1 expecting 64 flat features
    x = jax.random.normal(jax.random.PRNGKey(0), (B, C, H, W), dtype=jnp.float32)

    params = init_actor_params(num_channels=C, output_dim=5, seed=0)
    prep = prepare_params(params, output_dim=5)
    actor_forward = make_actor_forward(prep)

    out = jax.block_until_ready(actor_forward(x))
    ref = jax.block_until_ready(actor_forward_ref(params, x))

    assert out.shape == (B, 5)
    assert np.allclose(np.asarray(out), np.asarray(ref), atol=2e-4, rtol=2e-4)
    assert np.allclose(np.asarray(out).sum(axis=-1), 1.0, atol=1e-5)

    print("KERNEL_OK")
</pallas_src>

<mosaic_0001>
module attributes {stable_mosaic.version = 11 : i64} {
  func.func @_actor_fused_kernel(%arg0: memref<128x256xf32, #tpu.memory_space<vmem>>, %arg1: memref<256x32xf32, #tpu.memory_space<vmem>>, %arg2: memref<1x32xf32, #tpu.memory_space<vmem>>, %arg3: memref<16x24x128xf32, #tpu.memory_space<vmem>>, %arg4: memref<16x32x64xf32, #tpu.memory_space<vmem>>, %arg5: memref<1x64xf32, #tpu.memory_space<vmem>>, %arg6: memref<9x8x24xf32, #tpu.memory_space<vmem>>, %arg7: memref<9x64x64xf32, #tpu.memory_space<vmem>>, %arg8: memref<1x64xf32, #tpu.memory_space<vmem>>, %arg9: memref<64x256xf32, #tpu.memory_space<vmem>>, %arg10: memref<1x256xf32, #tpu.memory_space<vmem>>, %arg11: memref<256x128xf32, #tpu.memory_space<vmem>>, %arg12: memref<1x128xf32, #tpu.memory_space<vmem>>, %arg13: memref<8x128xf32, #tpu.memory_space<vmem>>) attributes {dimension_semantics = [], scalar_prefetch = 0 : i64, scratch_operands = 0 : i64, tpu.core_type = #tpu.core_type<tc>} {
    %c0 = arith.constant 0 : index
    %c0_0 = arith.constant 0 : index
    %0 = vector.load %arg0[%c0, %c0_0] : memref<128x256xf32, #tpu.memory_space<vmem>>, vector<128x256xf32>
    %c0_1 = arith.constant 0 : index
    %c0_2 = arith.constant 0 : index
    %1 = vector.load %arg1[%c0_1, %c0_2] : memref<256x32xf32, #tpu.memory_space<vmem>>, vector<256x32xf32>
    %cst = arith.constant dense<0.000000e+00> : vector<128x32xf32>
    %2 = tpu.matmul %0, %1, %cst {dimension_numbers = #tpu.dot_dimension_numbers<[1], [0], [0], [1], [0, 0, 1, 1], [], []>} : vector<128x256xf32>, vector<256x32xf32>, vector<128x32xf32> -> vector<128x32xf32>
    %c0_3 = arith.constant 0 : index
    %c0_4 = arith.constant 0 : index
    %3 = vector.load %arg2[%c0_3, %c0_4] : memref<1x32xf32, #tpu.memory_space<vmem>>, vector<1x32xf32>
    %4 = vector.broadcast %3 : vector<1x32xf32> to vector<128x32xf32>
    %5 = arith.addf %2, %4 : vector<128x32xf32>
    %cst_5 = arith.constant 0.000000e+00 : f32
    %6 = vector.broadcast %cst_5 : f32 to vector<128x32xf32>
    %7 = arith.maximumf %5, %6 : vector<128x32xf32>
    %c0_6 = arith.constant 0 : index
    %c0_7 = arith.constant 0 : index
    %c0_8 = arith.constant 0 : index
    %8 = vector.load %arg3[%c0_6, %c0_7, %c0_8] : memref<16x24x128xf32, #tpu.memory_space<vmem>>, vector<1x24x128xf32>
    %9 = vector.shape_cast %8 : vector<1x24x128xf32> to vector<24x128xf32>
    %cst_9 = arith.constant dense<0.000000e+00> : vector<24x32xf32>
    %10 = tpu.matmul %9, %7, %cst_9 {dimension_numbers = #tpu.dot_dimension_numbers<[1], [0], [0], [1], [0, 0, 1, 1], [], []>} : vector<24x128xf32>, vector<128x32xf32>, vector<24x32xf32> -> vector<24x32xf32>
    %c0_10 = arith.constant 0 : index
    %c0_11 = arith.constant 0 : index
    %c0_12 = arith.constant 0 : index
    %11 = vector.load %arg4[%c0_10, %c0_11, %c0_12] : memref<16x32x64xf32, #tpu.memory_space<vmem>>, vector<1x32x64xf32>
    %12 = vector.shape_cast %11 : vector<1x32x64xf32> to vector<32x64xf32>
    %cst_13 = arith.constant dense<0.000000e+00> : vector<24x64xf32>
    %13 = tpu.matmul %10, %12, %cst_13 {dimension_numbers = #tpu.dot_dimension_numbers<[1], [0], [0], [1], [0, 0, 1, 1], [], []>} : vector<24x32xf32>, vector<32x64xf32>, vector<24x64xf32> -> vector<24x64xf32>
    %c1 = arith.constant 1 : index
    %c0_14 = arith.constant 0 : index
    %c0_15 = arith.constant 0 : index
    %14 = vector.load %arg3[%c1, %c0_14, %c0_15] : memref<16x24x128xf32, #tpu.memory_space<vmem>>, vector<1x24x128xf32>
    %15 = vector.shape_cast %14 : vector<1x24x128xf32> to vector<24x128xf32>
    %cst_16 = arith.constant dense<0.000000e+00> : vector<24x32xf32>
    %16 = tpu.matmul %15, %7, %cst_16 {dimension_numbers = #tpu.dot_dimension_numbers<[1], [0], [0], [1], [0, 0, 1, 1], [], []>} : vector<24x128xf32>, vector<128x32xf32>, vector<24x32xf32> -> vector<24x32xf32>
    %c1_17 = arith.constant 1 : index
    %c0_18 = arith.constant 0 : index
    %c0_19 = arith.constant 0 : index
    %17 = vector.load %arg4[%c1_17, %c0_18, %c0_19] : memref<16x32x64xf32, #tpu.memory_space<vmem>>, vector<1x32x64xf32>
    %18 = vector.shape_cast %17 : vector<1x32x64xf32> to vector<32x64xf32>
    %cst_20 = arith.constant dense<0.000000e+00> : vector<24x64xf32>
    %19 = tpu.matmul %16, %18, %cst_20 {dimension_numbers = #tpu.dot_dimension_numbers<[1], [0], [0], [1], [0, 0, 1, 1], [], []>} : vector<24x32xf32>, vector<32x64xf32>, vector<24x64xf32> -> vector<24x64xf32>
    %20 = arith.addf %13, %19 : vector<24x64xf32>
    %c2 = arith.constant 2 : index
    %c0_21 = arith.constant 0 : index
    %c0_22 = arith.constant 0 : index
    %21 = vector.load %arg3[%c2, %c0_21, %c0_22] : memref<16x24x128xf32, #tpu.memory_space<vmem>>, vector<1x24x128xf32>
    %22 = vector.shape_cast %21 : vector<1x24x128xf32> to vector<24x128xf32>
    %cst_23 = arith.constant dense<0.000000e+00> : vector<24x32xf32>
    %23 = tpu.matmul %22, %7, %cst_23 {dimension_numbers = #tpu.dot_dimension_numbers<[1], [0], [0], [1], [0, 0, 1, 1], [], []>} : vector<24x128xf32>, vector<128x32xf32>, vector<24x32xf32> -> vector<24x32xf32>
    %c2_24 = arith.constant 2 : index
    %c0_25 = arith.constant 0 : index
    %c0_26 = arith.constant 0 : index
    %24 = vector.load %arg4[%c2_24, %c0_25, %c0_26] : memref<16x32x64xf32, #tpu.memory_space<vmem>>, vector<1x32x64xf32>
    %25 = vector.shape_cast %24 : vector<1x32x64xf32> to vector<32x64xf32>
    %cst_27 = arith.constant dense<0.000000e+00> : vector<24x64xf32>
    %26 = tpu.matmul %23, %25, %cst_27 {dimension_numbers = #tpu.dot_dimension_numbers<[1], [0], [0], [1], [0, 0, 1, 1], [], []>} : vector<24x32xf32>, vector<32x64xf32>, vector<24x64xf32> -> vector<24x64xf32>
    %27 = arith.addf %20, %26 : vector<24x64xf32>
    %c3 = arith.constant 3 : index
    %c0_28 = arith.constant 0 : index
    %c0_29 = arith.constant 0 : index
    %28 = vector.load %arg3[%c3, %c0_28, %c0_29] : memref<16x24x128xf32, #tpu.memory_space<vmem>>, vector<1x24x128xf32>
    %29 = vector.shape_cast %28 : vector<1x24x128xf32> to vector<24x128xf32>
    %cst_30 = arith.constant dense<0.000000e+00> : vector<24x32xf32>
    %30 = tpu.matmul %29, %7, %cst_30 {dimension_numbers = #tpu.dot_dimension_numbers<[1], [0], [0], [1], [0, 0, 1, 1], [], []>} : vector<24x128xf32>, vector<128x32xf32>, vector<24x32xf32> -> vector<24x32xf32>
    %c3_31 = arith.constant 3 : index
    %c0_32 = arith.constant 0 : index
    %c0_33 = arith.constant 0 : index
    %31 = vector.load %arg4[%c3_31, %c0_32, %c0_33] : memref<16x32x64xf32, #tpu.memory_space<vmem>>, vector<1x32x64xf32>
    %32 = vector.shape_cast %31 : vector<1x32x64xf32> to vector<32x64xf32>
    %cst_34 = arith.constant dense<0.000000e+00> : vector<24x64xf32>
    %33 = tpu.matmul %30, %32, %cst_34 {dimension_numbers = #tpu.dot_dimension_numbers<[1], [0], [0], [1], [0, 0, 1, 1], [], []>} : vector<24x32xf32>, vector<32x64xf32>, vector<24x64xf32> -> vector<24x64xf32>
    %34 = arith.addf %27, %33 : vector<24x64xf32>
    %c4 = arith.constant 4 : index
    %c0_35 = arith.constant 0 : index
    %c0_36 = arith.constant 0 : index
    %35 = vector.load %arg3[%c4, %c0_35, %c0_36] : memref<16x24x128xf32, #tpu.memory_space<vmem>>, vector<1x24x128xf32>
    %36 = vector.shape_cast %35 : vector<1x24x128xf32> to vector<24x128xf32>
    %cst_37 = arith.constant dense<0.000000e+00> : vector<24x32xf32>
    %37 = tpu.matmul %36, %7, %cst_37 {dimension_numbers = #tpu.dot_dimension_numbers<[1], [0], [0], [1], [0, 0, 1, 1], [], []>} : vector<24x128xf32>, vector<128x32xf32>, vector<24x32xf32> -> vector<24x32xf32>
    %c4_38 = arith.constant 4 : index
    %c0_39 = arith.constant 0 : index
    %c0_40 = arith.constant 0 : index
    %38 = vector.load %arg4[%c4_38, %c0_39, %c0_40] : memref<16x32x64xf32, #tpu.memory_space<vmem>>, vector<1x32x64xf32>
    %39 = vector.shape_cast %38 : vector<1x32x64xf32> to vector<32x64xf32>
    %cst_41 = arith.constant dense<0.000000e+00> : vector<24x64xf32>
    %40 = tpu.matmul %37, %39, %cst_41 {dimension_numbers = #tpu.dot_dimension_numbers<[1], [0], [0], [1], [0, 0, 1, 1], [], []>} : vector<24x32xf32>, vector<32x64xf32>, vector<24x64xf32> -> vector<24x64xf32>
    %41 = arith.addf %34, %40 : vector<24x64xf32>
    %c5 = arith.constant 5 : index
    %c0_42 = arith.constant 0 : index
    %c0_43 = arith.constant 0 : index
    %42 = vector.load %arg3[%c5, %c0_42, %c0_43] : memref<16x24x128xf32, #tpu.memory_space<vmem>>, vector<1x24x128xf32>
    %43 = vector.shape_cast %42 : vector<1x24x128xf32> to vector<24x128xf32>
    %cst_44 = arith.constant dense<0.000000e+00> : vector<24x32xf32>
    %44 = tpu.matmul %43, %7, %cst_44 {dimension_numbers = #tpu.dot_dimension_numbers<[1], [0], [0], [1], [0, 0, 1, 1], [], []>} : vector<24x128xf32>, vector<128x32xf32>, vector<24x32xf32> -> vector<24x32xf32>
    %c5_45 = arith.constant 5 : index
    %c0_46 = arith.constant 0 : index
    %c0_47 = arith.constant 0 : index
    %45 = vector.load %arg4[%c5_45, %c0_46, %c0_47] : memref<16x32x64xf32, #tpu.memory_space<vmem>>, vector<1x32x64xf32>
    %46 = vector.shape_cast %45 : vector<1x32x64xf32> to vector<32x64xf32>
    %cst_48 = arith.constant dense<0.000000e+00> : vector<24x64xf32>
    %47 = tpu.matmul %44, %46, %cst_48 {dimension_numbers = #tpu.dot_dimension_numbers<[1], [0], [0], [1], [0, 0, 1, 1], [], []>} : vector<24x32xf32>, vector<32x64xf32>, vector<24x64xf32> -> vector<24x64xf32>
    %48 = arith.addf %41, %47 : vector<24x64xf32>
    %c6 = arith.constant 6 : index
    %c0_49 = arith.constant 0 : index
    %c0_50 = arith.constant 0 : index
    %49 = vector.load %arg3[%c6, %c0_49, %c0_50] : memref<16x24x128xf32, #tpu.memory_space<vmem>>, vector<1x24x128xf32>
    %50 = vector.shape_cast %49 : vector<1x24x128xf32> to vector<24x128xf32>
    %cst_51 = arith.constant dense<0.000000e+00> : vector<24x32xf32>
    %51 = tpu.matmul %50, %7, %cst_51 {dimension_numbers = #tpu.dot_dimension_numbers<[1], [0], [0], [1], [0, 0, 1, 1], [], []>} : vector<24x128xf32>, vector<128x32xf32>, vector<24x32xf32> -> vector<24x32xf32>
    %c6_52 = arith.constant 6 : index
    %c0_53 = arith.constant 0 : index
    %c0_54 = arith.constant 0 : index
    %52 = vector.load %arg4[%c6_52, %c0_53, %c0_54] : memref<16x32x64xf32, #tpu.memory_space<vmem>>, vector<1x32x64xf32>
    %53 = vector.shape_cast %52 : vector<1x32x64xf32> to vector<32x64xf32>
    %cst_55 = arith.constant dense<0.000000e+00> : vector<24x64xf32>
    %54 = tpu.matmul %51, %53, %cst_55 {dimension_numbers = #tpu.dot_dimension_numbers<[1], [0], [0], [1], [0, 0, 1, 1], [], []>} : vector<24x32xf32>, vector<32x64xf32>, vector<24x64xf32> -> vector<24x64xf32>
    %55 = arith.addf %48, %54 : vector<24x64xf32>
    %c7 = arith.constant 7 : index
    %c0_56 = arith.constant 0 : index
    %c0_57 = arith.constant 0 : index
    %56 = vector.load %arg3[%c7, %c0_56, %c0_57] : memref<16x24x128xf32, #tpu.memory_space<vmem>>, vector<1x24x128xf32>
    %57 = vector.shape_cast %56 : vector<1x24x128xf32> to vector<24x128xf32>
    %cst_58 = arith.constant dense<0.000000e+00> : vector<24x32xf32>
    %58 = tpu.matmul %57, %7, %cst_58 {dimension_numbers = #tpu.dot_dimension_numbers<[1], [0], [0], [1], [0, 0, 1, 1], [], []>} : vector<24x128xf32>, vector<128x32xf32>, vector<24x32xf32> -> vector<24x32xf32>
    %c7_59 = arith.constant 7 : index
    %c0_60 = arith.constant 0 : index
    %c0_61 = arith.constant 0 : index
    %59 = vector.load %arg4[%c7_59, %c0_60, %c0_61] : memref<16x32x64xf32, #tpu.memory_space<vmem>>, vector<1x32x64xf32>
    %60 = vector.shape_cast %59 : vector<1x32x64xf32> to vector<32x64xf32>
    %cst_62 = arith.constant dense<0.000000e+00> : vector<24x64xf32>
    %61 = tpu.matmul %58, %60, %cst_62 {dimension_numbers = #tpu.dot_dimension_numbers<[1], [0], [0], [1], [0, 0, 1, 1], [], []>} : vector<24x32xf32>, vector<32x64xf32>, vector<24x64xf32> -> vector<24x64xf32>
    %62 = arith.addf %55, %61 : vector<24x64xf32>
    %c8 = arith.constant 8 : index
    %c0_63 = arith.constant 0 : index
    %c0_64 = arith.constant 0 : index
    %63 = vector.load %arg3[%c8, %c0_63, %c0_64] : memref<16x24x128xf32, #tpu.memory_space<vmem>>, vector<1x24x128xf32>
    %64 = vector.shape_cast %63 : vector<1x24x128xf32> to vector<24x128xf32>
    %cst_65 = arith.constant dense<0.000000e+00> : vector<24x32xf32>
    %65 = tpu.matmul %64, %7, %cst_65 {dimension_numbers = #tpu.dot_dimension_numbers<[1], [0], [0], [1], [0, 0, 1, 1], [], []>} : vector<24x128xf32>, vector<128x32xf32>, vector<24x32xf32> -> vector<24x32xf32>
    %c8_66 = arith.constant 8 : index
    %c0_67 = arith.constant 0 : index
    %c0_68 = arith.constant 0 : index
    %66 = vector.load %arg4[%c8_66, %c0_67, %c0_68] : memref<16x32x64xf32, #tpu.memory_space<vmem>>, vector<1x32x64xf32>
    %67 = vector.shape_cast %66 : vector<1x32x64xf32> to vector<32x64xf32>
    %cst_69 = arith.constant dense<0.000000e+00> : vector<24x64xf32>
    %68 = tpu.matmul %65, %67, %cst_69 {dimension_numbers = #tpu.dot_dimension_numbers<[1], [0], [0], [1], [0, 0, 1, 1], [], []>} : vector<24x32xf32>, vector<32x64xf32>, vector<24x64xf32> -> vector<24x64xf32>
    %69 = arith.addf %62, %68 : vector<24x64xf32>
    %c9 = arith.constant 9 : index
    %c0_70 = arith.constant 0 : index
    %c0_71 = arith.constant 0 : index
    %70 = vector.load %arg3[%c9, %c0_70, %c0_71] : memref<16x24x128xf32, #tpu.memory_space<vmem>>, vector<1x24x128xf32>
    %71 = vector.shape_cast %70 : vector<1x24x128xf32> to vector<24x128xf32>
    %cst_72 = arith.constant dense<0.000000e+00> : vector<24x32xf32>
    %72 = tpu.matmul %71, %7, %cst_72 {dimension_numbers = #tpu.dot_dimension_numbers<[1], [0], [0], [1], [0, 0, 1, 1], [], []>} : vector<24x128xf32>, vector<128x32xf32>, vector<24x32xf32> -> vector<24x32xf32>
    %c9_73 = arith.constant 9 : index
    %c0_74 = arith.constant 0 : index
    %c0_75 = arith.constant 0 : index
    %73 = vector.load %arg4[%c9_73, %c0_74, %c0_75] : memref<16x32x64xf32, #tpu.memory_space<vmem>>, vector<1x32x64xf32>
    %74 = vector.shape_cast %73 : vector<1x32x64xf32> to vector<32x64xf32>
    %cst_76 = arith.constant dense<0.000000e+00> : vector<24x64xf32>
    %75 = tpu.matmul %72, %74, %cst_76 {dimension_numbers = #tpu.dot_dimension_numbers<[1], [0], [0], [1], [0, 0, 1, 1], [], []>} : vector<24x32xf32>, vector<32x64xf32>, vector<24x64xf32> -> vector<24x64xf32>
    %76 = arith.addf %69, %75 : vector<24x64xf32>
    %c10 = arith.constant 10 : index
    %c0_77 = arith.constant 0 : index
    %c0_78 = arith.constant 0 : index
    %77 = vector.load %arg3[%c10, %c0_77, %c0_78] : memref<16x24x128xf32, #tpu.memory_space<vmem>>, vector<1x24x128xf32>
    %78 = vector.shape_cast %77 : vector<1x24x128xf32> to vector<24x128xf32>
    %cst_79 = arith.constant dense<0.000000e+00> : vector<24x32xf32>
    %79 = tpu.matmul %78, %7, %cst_79 {dimension_numbers = #tpu.dot_dimension_numbers<[1], [0], [0], [1], [0, 0, 1, 1], [], []>} : vector<24x128xf32>, vector<128x32xf32>, vector<24x32xf32> -> vector<24x32xf32>
    %c10_80 = arith.constant 10 : index
    %c0_81 = arith.constant 0 : index
    %c0_82 = arith.constant 0 : index
    %80 = vector.load %arg4[%c10_80, %c0_81, %c0_82] : memref<16x32x64xf32, #tpu.memory_space<vmem>>, vector<1x32x64xf32>
    %81 = vector.shape_cast %80 : vector<1x32x64xf32> to vector<32x64xf32>
    %cst_83 = arith.constant dense<0.000000e+00> : vector<24x64xf32>
    %82 = tpu.matmul %79, %81, %cst_83 {dimension_numbers = #tpu.dot_dimension_numbers<[1], [0], [0], [1], [0, 0, 1, 1], [], []>} : vector<24x32xf32>, vector<32x64xf32>, vector<24x64xf32> -> vector<24x64xf32>
    %83 = arith.addf %76, %82 : vector<24x64xf32>
    %c11 = arith.constant 11 : index
    %c0_84 = arith.constant 0 : index
    %c0_85 = arith.constant 0 : index
    %84 = vector.load %arg3[%c11, %c0_84, %c0_85] : memref<16x24x128xf32, #tpu.memory_space<vmem>>, vector<1x24x128xf32>
    %85 = vector.shape_cast %84 : vector<1x24x128xf32> to vector<24x128xf32>
    %cst_86 = arith.constant dense<0.000000e+00> : vector<24x32xf32>
    %86 = tpu.matmul %85, %7, %cst_86 {dimension_numbers = #tpu.dot_dimension_numbers<[1], [0], [0], [1], [0, 0, 1, 1], [], []>} : vector<24x128xf32>, vector<128x32xf32>, vector<24x32xf32> -> vector<24x32xf32>
    %c11_87 = arith.constant 11 : index
    %c0_88 = arith.constant 0 : index
    %c0_89 = arith.constant 0 : index
    %87 = vector.load %arg4[%c11_87, %c0_88, %c0_89] : memref<16x32x64xf32, #tpu.memory_space<vmem>>, vector<1x32x64xf32>
    %88 = vector.shape_cast %87 : vector<1x32x64xf32> to vector<32x64xf32>
    %cst_90 = arith.constant dense<0.000000e+00> : vector<24x64xf32>
    %89 = tpu.matmul %86, %88, %cst_90 {dimension_numbers = #tpu.dot_dimension_numbers<[1], [0], [0], [1], [0, 0, 1, 1], [], []>} : vector<24x32xf32>, vector<32x64xf32>, vector<24x64xf32> -> vector<24x64xf32>
    %90 = arith.addf %83, %89 : vector<24x64xf32>
    %c12 = arith.constant 12 : index
    %c0_91 = arith.constant 0 : index
    %c0_92 = arith.constant 0 : index
    %91 = vector.load %arg3[%c12, %c0_91, %c0_92] : memref<16x24x128xf32, #tpu.memory_space<vmem>>, vector<1x24x128xf32>
    %92 = vector.shape_cast %91 : vector<1x24x128xf32> to vector<24x128xf32>
    %cst_93 = arith.constant dense<0.000000e+00> : vector<24x32xf32>
    %93 = tpu.matmul %92, %7, %cst_93 {dimension_numbers = #tpu.dot_dimension_numbers<[1], [0], [0], [1], [0, 0, 1, 1], [], []>} : vector<24x128xf32>, vector<128x32xf32>, vector<24x32xf32> -> vector<24x32xf32>
    %c12_94 = arith.constant 12 : index
    %c0_95 = arith.constant 0 : index
    %c0_96 = arith.constant 0 : index
    %94 = vector.load %arg4[%c12_94, %c0_95, %c0_96] : memref<16x32x64xf32, #tpu.memory_space<vmem>>, vector<1x32x64xf32>
    %95 = vector.shape_cast %94 : vector<1x32x64xf32> to vector<32x64xf32>
    %cst_97 = arith.constant dense<0.000000e+00> : vector<24x64xf32>
    %96 = tpu.matmul %93, %95, %cst_97 {dimension_numbers = #tpu.dot_dimension_numbers<[1], [0], [0], [1], [0, 0, 1, 1], [], []>} : vector<24x32xf32>, vector<32x64xf32>, vector<24x64xf32> -> vector<24x64xf32>
    %97 = arith.addf %90, %96 : vector<24x64xf32>
    %c13 = arith.constant 13 : index
    %c0_98 = arith.constant 0 : index
    %c0_99 = arith.constant 0 : index
    %98 = vector.load %arg3[%c13, %c0_98, %c0_99] : memref<16x24x128xf32, #tpu.memory_space<vmem>>, vector<1x24x128xf32>
    %99 = vector.shape_cast %98 : vector<1x24x128xf32> to vector<24x128xf32>
    %cst_100 = arith.constant dense<0.000000e+00> : vector<24x32xf32>
    %100 = tpu.matmul %99, %7, %cst_100 {dimension_numbers = #tpu.dot_dimension_numbers<[1], [0], [0], [1], [0, 0, 1, 1], [], []>} : vector<24x128xf32>, vector<128x32xf32>, vector<24x32xf32> -> vector<24x32xf32>
    %c13_101 = arith.constant 13 : index
    %c0_102 = arith.constant 0 : index
    %c0_103 = arith.constant 0 : index
    %101 = vector.load %arg4[%c13_101, %c0_102, %c0_103] : memref<16x32x64xf32, #tpu.memory_space<vmem>>, vector<1x32x64xf32>
    %102 = vector.shape_cast %101 : vector<1x32x64xf32> to vector<32x64xf32>
    %cst_104 = arith.constant dense<0.000000e+00> : vector<24x64xf32>
    %103 = tpu.matmul %100, %102, %cst_104 {dimension_numbers = #tpu.dot_dimension_numbers<[1], [0], [0], [1], [0, 0, 1, 1], [], []>} : vector<24x32xf32>, vector<32x64xf32>, vector<24x64xf32> -> vector<24x64xf32>
    %104 = arith.addf %97, %103 : vector<24x64xf32>
    %c14 = arith.constant 14 : index
    %c0_105 = arith.constant 0 : index
    %c0_106 = arith.constant 0 : index
    %105 = vector.load %arg3[%c14, %c0_105, %c0_106] : memref<16x24x128xf32, #tpu.memory_space<vmem>>, vector<1x24x128xf32>
    %106 = vector.shape_cast %105 : vector<1x24x128xf32> to vector<24x128xf32>
    %cst_107 = arith.constant dense<0.000000e+00> : vector<24x32xf32>
    %107 = tpu.matmul %106, %7, %cst_107 {dimension_numbers = #tpu.dot_dimension_numbers<[1], [0], [0], [1], [0, 0, 1, 1], [], []>} : vector<24x128xf32>, vector<128x32xf32>, vector<24x32xf32> -> vector<24x32xf32>
    %c14_108 = arith.constant 14 : index
    %c0_109 = arith.constant 0 : index
    %c0_110 = arith.constant 0 : index
    %108 = vector.load %arg4[%c14_108, %c0_109, %c0_110] : memref<16x32x64xf32, #tpu.memory_space<vmem>>, vector<1x32x64xf32>
    %109 = vector.shape_cast %108 : vector<1x32x64xf32> to vector<32x64xf32>
    %cst_111 = arith.constant dense<0.000000e+00> : vector<24x64xf32>
    %110 = tpu.matmul %107, %109, %cst_111 {dimension_numbers = #tpu.dot_dimension_numbers<[1], [0], [0], [1], [0, 0, 1, 1], [], []>} : vector<24x32xf32>, vector<32x64xf32>, vector<24x64xf32> -> vector<24x64xf32>
    %111 = arith.addf %104, %110 : vector<24x64xf32>
    %c15 = arith.constant 15 : index
    %c0_112 = arith.constant 0 : index
    %c0_113 = arith.constant 0 : index
    %112 = vector.load %arg3[%c15, %c0_112, %c0_113] : memref<16x24x128xf32, #tpu.memory_space<vmem>>, vector<1x24x128xf32>
    %113 = vector.shape_cast %112 : vector<1x24x128xf32> to vector<24x128xf32>
    %cst_114 = arith.constant dense<0.000000e+00> : vector<24x32xf32>
    %114 = tpu.matmul %113, %7, %cst_114 {dimension_numbers = #tpu.dot_dimension_numbers<[1], [0], [0], [1], [0, 0, 1, 1], [], []>} : vector<24x128xf32>, vector<128x32xf32>, vector<24x32xf32> -> vector<24x32xf32>
    %c15_115 = arith.constant 15 : index
    %c0_116 = arith.constant 0 : index
    %c0_117 = arith.constant 0 : index
    %115 = vector.load %arg4[%c15_115, %c0_116, %c0_117] : memref<16x32x64xf32, #tpu.memory_space<vmem>>, vector<1x32x64xf32>
    %116 = vector.shape_cast %115 : vector<1x32x64xf32> to vector<32x64xf32>
    %cst_118 = arith.constant dense<0.000000e+00> : vector<24x64xf32>
    %117 = tpu.matmul %114, %116, %cst_118 {dimension_numbers = #tpu.dot_dimension_numbers<[1], [0], [0], [1], [0, 0, 1, 1], [], []>} : vector<24x32xf32>, vector<32x64xf32>, vector<24x64xf32> -> vector<24x64xf32>
    %118 = arith.addf %111, %117 : vector<24x64xf32>
    %c0_119 = arith.constant 0 : index
    %c0_120 = arith.constant 0 : index
    %119 = vector.load %arg5[%c0_119, %c0_120] : memref<1x64xf32, #tpu.memory_space<vmem>>, vector<1x64xf32>
    %120 = vector.broadcast %119 : vector<1x64xf32> to vector<24x64xf32>
    %121 = arith.addf %118, %120 : vector<24x64xf32>
    %cst_121 = arith.constant 0.000000e+00 : f32
    %122 = vector.broadcast %cst_121 : f32 to vector<24x64xf32>
    %123 = arith.maximumf %121, %122 : vector<24x64xf32>
    %c0_122 = arith.constant 0 : index
    %c0_123 = arith.constant 0 : index
    %c0_124 = arith.constant 0 : index
    %124 = vector.load %arg6[%c0_122, %c0_123, %c0_124] : memref<9x8x24xf32, #tpu.memory_space<vmem>>, vector<1x8x24xf32>
    %125 = vector.shape_cast %124 : vector<1x8x24xf32> to vector<8x24xf32>
    %cst_125 = arith.constant dense<0.000000e+00> : vector<8x64xf32>
    %126 = tpu.matmul %125, %123, %cst_125 {dimension_numbers = #tpu.dot_dimension_numbers<[1], [0], [0], [1], [0, 0, 1, 1], [], []>} : vector<8x24xf32>, vector<24x64xf32>, vector<8x64xf32> -> vector<8x64xf32>
    %c0_126 = arith.constant 0 : index
    %c0_127 = arith.constant 0 : index
    %c0_128 = arith.constant 0 : index
    %127 = vector.load %arg7[%c0_126, %c0_127, %c0_128] : memref<9x64x64xf32, #tpu.memory_space<vmem>>, vector<1x64x64xf32>
    %128 = vector.shape_cast %127 : vector<1x64x64xf32> to vector<64x64xf32>
    %cst_129 = arith.constant dense<0.000000e+00> : vector<8x64xf32>
    %129 = tpu.matmul %126, %128, %cst_129 {dimension_numbers = #tpu.dot_dimension_numbers<[1], [0], [0], [1], [0, 0, 1, 1], [], []>} : vector<8x64xf32>, vector<64x64xf32>, vector<8x64xf32> -> vector<8x64xf32>
    %c1_130 = arith.constant 1 : index
    %c0_131 = arith.constant 0 : index
    %c0_132 = arith.constant 0 : index
    %130 = vector.load %arg6[%c1_130, %c0_131, %c0_132] : memref<9x8x24xf32, #tpu.memory_space<vmem>>, vector<1x8x24xf32>
    %131 = vector.shape_cast %130 : vector<1x8x24xf32> to vector<8x24xf32>
    %cst_133 = arith.constant dense<0.000000e+00> : vector<8x64xf32>
    %132 = tpu.matmul %131, %123, %cst_133 {dimension_numbers = #tpu.dot_dimension_numbers<[1], [0], [0], [1], [0, 0, 1, 1], [], []>} : vector<8x24xf32>, vector<24x64xf32>, vector<8x64xf32> -> vector<8x64xf32>
    %c1_134 = arith.constant 1 : index
    %c0_135 = arith.constant 0 : index
    %c0_136 = arith.constant 0 : index
    %133 = vector.load %arg7[%c1_134, %c0_135, %c0_136] : memref<9x64x64xf32, #tpu.memory_space<vmem>>, vector<1x64x64xf32>
    %134 = vector.shape_cast %133 : vector<1x64x64xf32> to vector<64x64xf32>
    %cst_137 = arith.constant dense<0.000000e+00> : vector<8x64xf32>
    %135 = tpu.matmul %132, %134, %cst_137 {dimension_numbers = #tpu.dot_dimension_numbers<[1], [0], [0], [1], [0, 0, 1, 1], [], []>} : vector<8x64xf32>, vector<64x64xf32>, vector<8x64xf32> -> vector<8x64xf32>
    %136 = arith.addf %129, %135 : vector<8x64xf32>
    %c2_138 = arith.constant 2 : index
    %c0_139 = arith.constant 0 : index
    %c0_140 = arith.constant 0 : index
    %137 = vector.load %arg6[%c2_138, %c0_139, %c0_140] : memref<9x8x24xf32, #tpu.memory_space<vmem>>, vector<1x8x24xf32>
    %138 = vector.shape_cast %137 : vector<1x8x24xf32> to vector<8x24xf32>
    %cst_141 = arith.constant dense<0.000000e+00> : vector<8x64xf32>
    %139 = tpu.matmul %138, %123, %cst_141 {dimension_numbers = #tpu.dot_dimension_numbers<[1], [0], [0], [1], [0, 0, 1, 1], [], []>} : vector<8x24xf32>, vector<24x64xf32>, vector<8x64xf32> -> vector<8x64xf32>
    %c2_142 = arith.constant 2 : index
    %c0_143 = arith.constant 0 : index
    %c0_144 = arith.constant 0 : index
    %140 = vector.load %arg7[%c2_142, %c0_143, %c0_144] : memref<9x64x64xf32, #tpu.memory_space<vmem>>, vector<1x64x64xf32>
    %141 = vector.shape_cast %140 : vector<1x64x64xf32> to vector<64x64xf32>
    %cst_145 = arith.constant dense<0.000000e+00> : vector<8x64xf32>
    %142 = tpu.matmul %139, %141, %cst_145 {dimension_numbers = #tpu.dot_dimension_numbers<[1], [0], [0], [1], [0, 0, 1, 1], [], []>} : vector<8x64xf32>, vector<64x64xf32>, vector<8x64xf32> -> vector<8x64xf32>
    %143 = arith.addf %136, %142 : vector<8x64xf32>
    %c3_146 = arith.constant 3 : index
    %c0_147 = arith.constant 0 : index
    %c0_148 = arith.constant 0 : index
    %144 = vector.load %arg6[%c3_146, %c0_147, %c0_148] : memref<9x8x24xf32, #tpu.memory_space<vmem>>, vector<1x8x24xf32>
    %145 = vector.shape_cast %144 : vector<1x8x24xf32> to vector<8x24xf32>
    %cst_149 = arith.constant dense<0.000000e+00> : vector<8x64xf32>
    %146 = tpu.matmul %145, %123, %cst_149 {dimension_numbers = #tpu.dot_dimension_numbers<[1], [0], [0], [1], [0, 0, 1, 1], [], []>} : vector<8x24xf32>, vector<24x64xf32>, vector<8x64xf32> -> vector<8x64xf32>
    %c3_150 = arith.constant 3 : index
    %c0_151 = arith.constant 0 : index
    %c0_152 = arith.constant 0 : index
    %147 = vector.load %arg7[%c3_150, %c0_151, %c0_152] : memref<9x64x64xf32, #tpu.memory_space<vmem>>, vector<1x64x64xf32>
    %148 = vector.shape_cast %147 : vector<1x64x64xf32> to vector<64x64xf32>
    %cst_153 = arith.constant dense<0.000000e+00> : vector<8x64xf32>
    %149 = tpu.matmul %146, %148, %cst_153 {dimension_numbers = #tpu.dot_dimension_numbers<[1], [0], [0], [1], [0, 0, 1, 1], [], []>} : vector<8x64xf32>, vector<64x64xf32>, vector<8x64xf32> -> vector<8x64xf32>
    %150 = arith.addf %143, %149 : vector<8x64xf32>
    %c4_154 = arith.constant 4 : index
    %c0_155 = arith.constant 0 : index
    %c0_156 = arith.constant 0 : index
    %151 = vector.load %arg6[%c4_154, %c0_155, %c0_156] : memref<9x8x24xf32, #tpu.memory_space<vmem>>, vector<1x8x24xf32>
    %152 = vector.shape_cast %151 : vector<1x8x24xf32> to vector<8x24xf32>
    %cst_157 = arith.constant dense<0.000000e+00> : vector<8x64xf32>
    %153 = tpu.matmul %152, %123, %cst_157 {dimension_numbers = #tpu.dot_dimension_numbers<[1], [0], [0], [1], [0, 0, 1, 1], [], []>} : vector<8x24xf32>, vector<24x64xf32>, vector<8x64xf32> -> vector<8x64xf32>
    %c4_158 = arith.constant 4 : index
    %c0_159 = arith.constant 0 : index
    %c0_160 = arith.constant 0 : index
    %154 = vector.load %arg7[%c4_158, %c0_159, %c0_160] : memref<9x64x64xf32, #tpu.memory_space<vmem>>, vector<1x64x64xf32>
    %155 = vector.shape_cast %154 : vector<1x64x64xf32> to vector<64x64xf32>
    %cst_161 = arith.constant dense<0.000000e+00> : vector<8x64xf32>
    %156 = tpu.matmul %153, %155, %cst_161 {dimension_numbers = #tpu.dot_dimension_numbers<[1], [0], [0], [1], [0, 0, 1, 1], [], []>} : vector<8x64xf32>, vector<64x64xf32>, vector<8x64xf32> -> vector<8x64xf32>
    %157 = arith.addf %150, %156 : vector<8x64xf32>
    %c5_162 = arith.constant 5 : index
    %c0_163 = arith.constant 0 : index
    %c0_164 = arith.constant 0 : index
    %158 = vector.load %arg6[%c5_162, %c0_163, %c0_164] : memref<9x8x24xf32, #tpu.memory_space<vmem>>, vector<1x8x24xf32>
    %159 = vector.shape_cast %158 : vector<1x8x24xf32> to vector<8x24xf32>
    %cst_165 = arith.constant dense<0.000000e+00> : vector<8x64xf32>
    %160 = tpu.matmul %159, %123, %cst_165 {dimension_numbers = #tpu.dot_dimension_numbers<[1], [0], [0], [1], [0, 0, 1, 1], [], []>} : vector<8x24xf32>, vector<24x64xf32>, vector<8x64xf32> -> vector<8x64xf32>
    %c5_166 = arith.constant 5 : index
    %c0_167 = arith.constant 0 : index
    %c0_168 = arith.constant 0 : index
    %161 = vector.load %arg7[%c5_166, %c0_167, %c0_168] : memref<9x64x64xf32, #tpu.memory_space<vmem>>, vector<1x64x64xf32>
    %162 = vector.shape_cast %161 : vector<1x64x64xf32> to vector<64x64xf32>
    %cst_169 = arith.constant dense<0.000000e+00> : vector<8x64xf32>
    %163 = tpu.matmul %160, %162, %cst_169 {dimension_numbers = #tpu.dot_dimension_numbers<[1], [0], [0], [1], [0, 0, 1, 1], [], []>} : vector<8x64xf32>, vector<64x64xf32>, vector<8x64xf32> -> vector<8x64xf32>
    %164 = arith.addf %157, %163 : vector<8x64xf32>
    %c6_170 = arith.constant 6 : index
    %c0_171 = arith.constant 0 : index
    %c0_172 = arith.constant 0 : index
    %165 = vector.load %arg6[%c6_170, %c0_171, %c0_172] : memref<9x8x24xf32, #tpu.memory_space<vmem>>, vector<1x8x24xf32>
    %166 = vector.shape_cast %165 : vector<1x8x24xf32> to vector<8x24xf32>
    %cst_173 = arith.constant dense<0.000000e+00> : vector<8x64xf32>
    %167 = tpu.matmul %166, %123, %cst_173 {dimension_numbers = #tpu.dot_dimension_numbers<[1], [0], [0], [1], [0, 0, 1, 1], [], []>} : vector<8x24xf32>, vector<24x64xf32>, vector<8x64xf32> -> vector<8x64xf32>
    %c6_174 = arith.constant 6 : index
    %c0_175 = arith.constant 0 : index
    %c0_176 = arith.constant 0 : index
    %168 = vector.load %arg7[%c6_174, %c0_175, %c0_176] : memref<9x64x64xf32, #tpu.memory_space<vmem>>, vector<1x64x64xf32>
    %169 = vector.shape_cast %168 : vector<1x64x64xf32> to vector<64x64xf32>
    %cst_177 = arith.constant dense<0.000000e+00> : vector<8x64xf32>
    %170 = tpu.matmul %167, %169, %cst_177 {dimension_numbers = #tpu.dot_dimension_numbers<[1], [0], [0], [1], [0, 0, 1, 1], [], []>} : vector<8x64xf32>, vector<64x64xf32>, vector<8x64xf32> -> vector<8x64xf32>
    %171 = arith.addf %164, %170 : vector<8x64xf32>
    %c7_178 = arith.constant 7 : index
    %c0_179 = arith.constant 0 : index
    %c0_180 = arith.constant 0 : index
    %172 = vector.load %arg6[%c7_178, %c0_179, %c0_180] : memref<9x8x24xf32, #tpu.memory_space<vmem>>, vector<1x8x24xf32>
    %173 = vector.shape_cast %172 : vector<1x8x24xf32> to vector<8x24xf32>
    %cst_181 = arith.constant dense<0.000000e+00> : vector<8x64xf32>
    %174 = tpu.matmul %173, %123, %cst_181 {dimension_numbers = #tpu.dot_dimension_numbers<[1], [0], [0], [1], [0, 0, 1, 1], [], []>} : vector<8x24xf32>, vector<24x64xf32>, vector<8x64xf32> -> vector<8x64xf32>
    %c7_182 = arith.constant 7 : index
    %c0_183 = arith.constant 0 : index
    %c0_184 = arith.constant 0 : index
    %175 = vector.load %arg7[%c7_182, %c0_183, %c0_184] : memref<9x64x64xf32, #tpu.memory_space<vmem>>, vector<1x64x64xf32>
    %176 = vector.shape_cast %175 : vector<1x64x64xf32> to vector<64x64xf32>
    %cst_185 = arith.constant dense<0.000000e+00> : vector<8x64xf32>
    %177 = tpu.matmul %174, %176, %cst_185 {dimension_numbers = #tpu.dot_dimension_numbers<[1], [0], [0], [1], [0, 0, 1, 1], [], []>} : vector<8x64xf32>, vector<64x64xf32>, vector<8x64xf32> -> vector<8x64xf32>
    %178 = arith.addf %171, %177 : vector<8x64xf32>
    %c8_186 = arith.constant 8 : index
    %c0_187 = arith.constant 0 : index
    %c0_188 = arith.constant 0 : index
    %179 = vector.load %arg6[%c8_186, %c0_187, %c0_188] : memref<9x8x24xf32, #tpu.memory_space<vmem>>, vector<1x8x24xf32>
    %180 = vector.shape_cast %179 : vector<1x8x24xf32> to vector<8x24xf32>
    %cst_189 = arith.constant dense<0.000000e+00> : vector<8x64xf32>
    %181 = tpu.matmul %180, %123, %cst_189 {dimension_numbers = #tpu.dot_dimension_numbers<[1], [0], [0], [1], [0, 0, 1, 1], [], []>} : vector<8x24xf32>, vector<24x64xf32>, vector<8x64xf32> -> vector<8x64xf32>
    %c8_190 = arith.constant 8 : index
    %c0_191 = arith.constant 0 : index
    %c0_192 = arith.constant 0 : index
    %182 = vector.load %arg7[%c8_190, %c0_191, %c0_192] : memref<9x64x64xf32, #tpu.memory_space<vmem>>, vector<1x64x64xf32>
    %183 = vector.shape_cast %182 : vector<1x64x64xf32> to vector<64x64xf32>
    %cst_193 = arith.constant dense<0.000000e+00> : vector<8x64xf32>
    %184 = tpu.matmul %181, %183, %cst_193 {dimension_numbers = #tpu.dot_dimension_numbers<[1], [0], [0], [1], [0, 0, 1, 1], [], []>} : vector<8x64xf32>, vector<64x64xf32>, vector<8x64xf32> -> vector<8x64xf32>
    %185 = arith.addf %178, %184 : vector<8x64xf32>
    %c0_194 = arith.constant 0 : index
    %c0_195 = arith.constant 0 : index
    %186 = vector.load %arg8[%c0_194, %c0_195] : memref<1x64xf32, #tpu.memory_space<vmem>>, vector<1x64xf32>
    %187 = vector.broadcast %186 : vector<1x64xf32> to vector<8x64xf32>
    %188 = arith.addf %185, %187 : vector<8x64xf32>
    %cst_196 = arith.constant 0.000000e+00 : f32
    %189 = vector.broadcast %cst_196 : f32 to vector<8x64xf32>
    %190 = arith.maximumf %188, %189 : vector<8x64xf32>
    %c0_197 = arith.constant 0 : index
    %c0_198 = arith.constant 0 : index
    %191 = vector.load %arg9[%c0_197, %c0_198] : memref<64x256xf32, #tpu.memory_space<vmem>>, vector<64x256xf32>
    %cst_199 = arith.constant dense<0.000000e+00> : vector<8x256xf32>
    %192 = tpu.matmul %190, %191, %cst_199 {dimension_numbers = #tpu.dot_dimension_numbers<[1], [0], [0], [1], [0, 0, 1, 1], [], []>} : vector<8x64xf32>, vector<64x256xf32>, vector<8x256xf32> -> vector<8x256xf32>
    %c0_200 = arith.constant 0 : index
    %c0_201 = arith.constant 0 : index
    %193 = vector.load %arg10[%c0_200, %c0_201] : memref<1x256xf32, #tpu.memory_space<vmem>>, vector<1x256xf32>
    %194 = vector.broadcast %193 : vector<1x256xf32> to vector<8x256xf32>
    %195 = arith.addf %192, %194 : vector<8x256xf32>
    %cst_202 = arith.constant 0.000000e+00 : f32
    %196 = vector.broadcast %cst_202 : f32 to vector<8x256xf32>
    %197 = arith.maximumf %195, %196 : vector<8x256xf32>
    %c0_203 = arith.constant 0 : index
    %c0_204 = arith.constant 0 : index
    %198 = vector.load %arg11[%c0_203, %c0_204] : memref<256x128xf32, #tpu.memory_space<vmem>>, vector<256x128xf32>
    %cst_205 = arith.constant dense<0.000000e+00> : vector<8x128xf32>
    %199 = tpu.matmul %197, %198, %cst_205 {dimension_numbers = #tpu.dot_dimension_numbers<[1], [0], [0], [1], [0, 0, 1, 1], [], []>} : vector<8x256xf32>, vector<256x128xf32>, vector<8x128xf32> -> vector<8x128xf32>
    %c0_206 = arith.constant 0 : index
    %c0_207 = arith.constant 0 : index
    %200 = vector.load %arg12[%c0_206, %c0_207] : memref<1x128xf32, #tpu.memory_space<vmem>>, vector<1x128xf32>
    %201 = vector.broadcast %200 : vector<1x128xf32> to vector<8x128xf32>
    %202 = arith.addf %199, %201 : vector<8x128xf32>
    %203 = tpu.iota {dimensions = array<i32: 1>} : vector<8x128xi32>
    %c5_i32 = arith.constant 5 : i32
    %204 = vector.broadcast %c5_i32 : i32 to vector<8x128xi32>
    %205 = arith.cmpi slt, %203, %204 : vector<8x128xi32>
    %cst_208 = arith.constant -1.000000e+30 : f32
    %206 = vector.broadcast %cst_208 : f32 to vector<8x128xf32>
    %207 = arith.select %205, %202, %206 : vector<8x128xi1>, vector<8x128xf32>
    %cst_209 = arith.constant dense<0xFF800000> : vector<8xf32>
    %208 = vector.multi_reduction <maximumf>, %207, %cst_209 [1] : vector<8x128xf32> to vector<8xf32>
    %209 = vector.shape_cast %208 : vector<8xf32> to vector<8x1xf32>
    %210 = vector.broadcast %209 : vector<8x1xf32> to vector<8x128xf32>
    %211 = arith.subf %207, %210 : vector<8x128xf32>
    %212 = math.exp %211 : vector<8x128xf32>
    %cst_210 = arith.constant dense<0.000000e+00> : vector<8xf32>
    %213 = vector.multi_reduction <add>, %212, %cst_210 [1] : vector<8x128xf32> to vector<8xf32>
    %214 = vector.shape_cast %213 : vector<8xf32> to vector<8x1xf32>
    %215 = vector.broadcast %214 : vector<8x1xf32> to vector<8x128xf32>
    %216 = arith.divf %212, %215 : vector<8x128xf32>
    %c0_211 = arith.constant 0 : index
    %c0_212 = arith.constant 0 : index
    %217 = vector.load %arg13[%c0_211, %c0_212] : memref<8x128xf32, #tpu.memory_space<vmem>>, vector<8x128xf32>
    tpu.vector_store %arg13[%c0_211, %c0_212], %216 {strides = array<i32>} : memref<8x128xf32, #tpu.memory_space<vmem>>, vector<8x128xf32>,
    return
  }
}

</mosaic_0001>

<llo_original>
// kernel: forward.1
$region0: #{forward.1}
  #allocation0 [shape = 'u32[]', space=smem, size = 0x4, offset = 0x4, fixed_abs, tag = 'smem constant byte address 0x4 - core index']
  #allocation1 [shape = 'u32[144,128]{1,0:T(1,128)}', space=vmem, size = 0x12000, scoped, tag = 'internal scratch']
  %s0 = inlined_call_operand.vmem [shape: f32[128,256], index: 0, kind: input, shape index: {}]
  %s1 = inlined_call_operand.vmem [shape: f32[256,32], index: 1, kind: input, shape index: {}]
  %s2 = inlined_call_operand.vmem [shape: f32[1,32], index: 2, kind: input, shape index: {}]
  %s3 = inlined_call_operand.vmem [shape: f32[16,24,128], index: 3, kind: input, shape index: {}]
  %s4 = inlined_call_operand.vmem [shape: f32[16,32,64], index: 4, kind: input, shape index: {}]
  %s5 = inlined_call_operand.vmem [shape: f32[1,64], index: 5, kind: input, shape index: {}]
  %s6 = inlined_call_operand.vmem [shape: f32[9,8,24], index: 6, kind: input, shape index: {}]
  %s7 = inlined_call_operand.vmem [shape: f32[9,64,64], index: 7, kind: input, shape index: {}]
  %s8 = inlined_call_operand.vmem [shape: f32[1,64], index: 8, kind: input, shape index: {}]
  %s9 = inlined_call_operand.vmem [shape: f32[64,256], index: 9, kind: input, shape index: {}]
  %s10 = inlined_call_operand.vmem [shape: f32[1,256], index: 10, kind: input, shape index: {}]
  %s11 = inlined_call_operand.vmem [shape: f32[256,128], index: 11, kind: input, shape index: {}]
  %s12 = inlined_call_operand.vmem [shape: f32[1,128], index: 12, kind: input, shape index: {}]
  %s13 = inlined_call_operand.vmem [shape: f32[8,128], index: 13, kind: output, shape index: {}]
  %s14 = sld [smem:[#allocation0]]
  $region62: #{forward.1} parent=0
    _
  %s16 = ssub.s32 1, %s14
  %s17 = scalar_select 0, %s16, %s14
  // Predicated region
  $region2: #{forward.1} parent=0 // pred_check
    _
  $region3: #{forward.1} parent=0 // pred_check_branch
    %19 = sbr.rel (0) target = $region5
  $region4: #{forward.1} parent=0 // pred_region
    _
  $region5: #{forward.1} parent=0 // pred_fallthru
    _
  // Predicated region
  $region6: #{forward.1} parent=0 // pred_check
    _
  $region7: #{forward.1} parent=0 // pred_check_branch
    %21 = sbr.rel (0) target = $region9
  $region8: #{forward.1} parent=0 // pred_region
    _
  $region9: #{forward.1} parent=0 // pred_fallthru
    _
  // Predicated region
  $region10: #{forward.1} parent=0 // pred_check
    _
  $region11: #{forward.1} parent=0 // pred_check_branch
    %23 = sbr.rel (0) target = $region13
  $region12: #{forward.1} parent=0 // pred_region
    _
  $region13: #{forward.1} parent=0 // pred_fallthru
    _
  // Predicated region
  $region14: #{forward.1} parent=0 // pred_check
    _
  $region15: #{forward.1} parent=0 // pred_check_branch
    %25 = sbr.rel (0) target = $region17
  $region16: #{forward.1} parent=0 // pred_region
    _
  $region17: #{forward.1} parent=0 // pred_fallthru
    _
  // Predicated region
  $region18: #{forward.1} parent=0 // pred_check
    _
  $region19: #{forward.1} parent=0 // pred_check_branch
    %27 = sbr.rel (0) target = $region21
  $region20: #{forward.1} parent=0 // pred_region
    _
  $region21: #{forward.1} parent=0 // pred_fallthru
    _
  // Predicated region
  $region22: #{forward.1} parent=0 // pred_check
    _
  $region23: #{forward.1} parent=0 // pred_check_branch
    %29 = sbr.rel (0) target = $region25
  $region24: #{forward.1} parent=0 // pred_region
    _
  $region25: #{forward.1} parent=0 // pred_fallthru
    _
  // Predicated region
  $region26: #{forward.1} parent=0 // pred_check
    _
  $region27: #{forward.1} parent=0 // pred_check_branch
    %31 = sbr.rel (0) target = $region29
  $region28: #{forward.1} parent=0 // pred_region
    _
  $region29: #{forward.1} parent=0 // pred_fallthru
    _
  // Predicated region
  $region30: #{forward.1} parent=0 // pred_check
    _
  $region31: #{forward.1} parent=0 // pred_check_branch
    %33 = sbr.rel (0) target = $region33
  $region32: #{forward.1} parent=0 // pred_region
    _
  $region33: #{forward.1} parent=0 // pred_fallthru
    _
  // Predicated region
  $region34: #{forward.1} parent=0 // pred_check
    _
  $region35: #{forward.1} parent=0 // pred_check_branch
    %35 = sbr.rel (0) target = $region37
  $region36: #{forward.1} parent=0 // pred_region
    _
  $region37: #{forward.1} parent=0 // pred_fallthru
    _
  // Predicated region
  $region38: #{forward.1} parent=0 // pred_check
    _
  $region39: #{forward.1} parent=0 // pred_check_branch
    %37 = sbr.rel (0) target = $region41
  $region40: #{forward.1} parent=0 // pred_region
    _
  $region41: #{forward.1} parent=0 // pred_fallthru
    _
  // Predicated region
  $region42: #{forward.1} parent=0 // pred_check
    _
  $region43: #{forward.1} parent=0 // pred_check_branch
    %39 = sbr.rel (0) target = $region45
  $region44: #{forward.1} parent=0 // pred_region
    _
  $region45: #{forward.1} parent=0 // pred_fallthru
    _
  // Predicated region
  $region46: #{forward.1} parent=0 // pred_check
    _
  $region47: #{forward.1} parent=0 // pred_check_branch
    %41 = sbr.rel (0) target = $region49
  $region48: #{forward.1} parent=0 // pred_region
    _
  $region49: #{forward.1} parent=0 // pred_fallthru
    _
  // Predicated region
  $region50: #{forward.1} parent=0 // pred_check
    _
  $region51: #{forward.1} parent=0 // pred_check_branch
    %43 = sbr.rel (0) target = $region53
  $region52: #{forward.1} parent=0 // pred_region
    _
  $region53: #{forward.1} parent=0 // pred_fallthru
    _
  %v44 = vld [vmem:[%s0] sm:$0xff]
  %v45 = vld [vmem:[%s0 + $0x8] sm:$0xff]
  %v46 = vld [vmem:[%s0 + $0x10] sm:$0xff]
  %v47 = vld [vmem:[%s0 + $0x18] sm:$0xff]
  %v48 = vld [vmem:[%s0 + $0x20] sm:$0xff]
  %v49 = vld [vmem:[%s0 + $0x28] sm:$0xff]
  %v50 = vld [vmem:[%s0 + $0x30] sm:$0xff]
  %v51 = vld [vmem:[%s0 + $0x38] sm:$0xff]
  %v52 = vld [vmem:[%s0 + $0x40] sm:$0xff]
  %v53 = vld [vmem:[%s0 + $0x48] sm:$0xff]
  %v54 = vld [vmem:[%s0 + $0x50] sm:$0xff]
  %v55 = vld [vmem:[%s0 + $0x58] sm:$0xff]
  %v56 = vld [vmem:[%s0 + $0x60] sm:$0xff]
  %v57 = vld [vmem:[%s0 + $0x68] sm:$0xff]
  %v58 = vld [vmem:[%s0 + $0x70] sm:$0xff]
  %v59 = vld [vmem:[%s0 + $0x78] sm:$0xff]
  %v60 = vld [vmem:[%s0 + $0x80] sm:$0xff]
  %v61 = vld [vmem:[%s0 + $0x88] sm:$0xff]
  %v62 = vld [vmem:[%s0 + $0x90] sm:$0xff]
  %v63 = vld [vmem:[%s0 + $0x98] sm:$0xff]
  %v64 = vld [vmem:[%s0 + $0xa0] sm:$0xff]
  %v65 = vld [vmem:[%s0 + $0xa8] sm:$0xff]
  %v66 = vld [vmem:[%s0 + $0xb0] sm:$0xff]
  %v67 = vld [vmem:[%s0 + $0xb8] sm:$0xff]
  %v68 = vld [vmem:[%s0 + $0xc0] sm:$0xff]
  %v69 = vld [vmem:[%s0 + $0xc8] sm:$0xff]
  %v70 = vld [vmem:[%s0 + $0xd0] sm:$0xff]
  %v71 = vld [vmem:[%s0 + $0xd8] sm:$0xff]
  %v72 = vld [vmem:[%s0 + $0xe0] sm:$0xff]
  %v73 = vld [vmem:[%s0 + $0xe8] sm:$0xff]
  %v74 = vld [vmem:[%s0 + $0xf0] sm:$0xff]
  %v75 = vld [vmem:[%s0 + $0xf8] sm:$0xff]
  %v76 = vld [vmem:[%s1] sm:$0xff]
  %v77 = vld [vmem:[%s1 + $0x8] sm:$0xff]
  %v78 = vld [vmem:[%s1 + $0x10] sm:$0xff]
  %v79 = vld [vmem:[%s1 + $0x18] sm:$0xff]
  %v80 = vld [vmem:[%s1 + $0x20] sm:$0xff]
  %v81 = vld [vmem:[%s1 + $0x28] sm:$0xff]
  %v82 = vld [vmem:[%s1 + $0x30] sm:$0xff]
  %v83 = vld [vmem:[%s1 + $0x38] sm:$0xff]
  %v84 = vld [vmem:[%s1 + $0x40] sm:$0xff]
  %v85 = vld [vmem:[%s1 + $0x48] sm:$0xff]
  %v86 = vld [vmem:[%s1 + $0x50] sm:$0xff]
  %v87 = vld [vmem:[%s1 + $0x58] sm:$0xff]
  %v88 = vld [vmem:[%s1 + $0x60] sm:$0xff]
  %v89 = vld [vmem:[%s1 + $0x68] sm:$0xff]
  %v90 = vld [vmem:[%s1 + $0x70] sm:$0xff]
  %v91 = vld [vmem:[%s1 + $0x78] sm:$0xff]
  %v92 = vld [vmem:[%s1 + $0x80] sm:$0xff]
  %v93 = vld [vmem:[%s1 + $0x88] sm:$0xff]
  %v94 = vld [vmem:[%s1 + $0x90] sm:$0xff]
  %v95 = vld [vmem:[%s1 + $0x98] sm:$0xff]
  %v96 = vld [vmem:[%s1 + $0xa0] sm:$0xff]
  %v97 = vld [vmem:[%s1 + $0xa8] sm:$0xff]
  %v98 = vld [vmem:[%s1 + $0xb0] sm:$0xff]
  %v99 = vld [vmem:[%s1 + $0xb8] sm:$0xff]
  %v100 = vld [vmem:[%s1 + $0xc0] sm:$0xff]
  %v101 = vld [vmem:[%s1 + $0xc8] sm:$0xff]
  %v102 = vld [vmem:[%s1 + $0xd0] sm:$0xff]
  %v103 = vld [vmem:[%s1 + $0xd8] sm:$0xff]
  %v104 = vld [vmem:[%s1 + $0xe0] sm:$0xff]
  %v105 = vld [vmem:[%s1 + $0xe8] sm:$0xff]
  %v106 = vld [vmem:[%s1 + $0xf0] sm:$0xff]
  %v107 = vld [vmem:[%s1 + $0xf8] sm:$0xff]
  %v108 = vld [vmem:[%s2] sm:$0x1]
  %v110 = vlaneseq
  %v111 = vshrl.u32 %v110, 7
  %v112 = vsub.s32 0, %v111
  %v113 = vrot.slane %v108, %v112
  %115 = vmatprep.subr.mxu0 0.0
  %116 = vmatpush1.msra.mxu0 %v91
  %117 = vmatprep.subr.mxu0 0.0
  %118 = vmatpush1.msra.mxu0 %v90
  %119 = vmatprep.subr.mxu0 0.0
  %120 = vmatpush1.msra.mxu0 %v89
  %121 = vmatprep.subr.mxu0 0.0
  %122 = vmatpush1.msra.mxu0 %v88
  %123 = vmatprep.subr.mxu0 0.0
  %124 = vmatpush1.msra.mxu0 %v87
  %125 = vmatprep.subr.mxu0 0.0
  %126 = vmatpush1.msra.mxu0 %v86
  %127 = vmatprep.subr.mxu0 0.0
  %128 = vmatpush1.msra.mxu0 %v85
  %129 = vmatprep.subr.mxu0 0.0
  %130 = vmatpush1.msra.mxu0 %v84
  %131 = vmatprep.subr.mxu0 0.0
  %132 = vmatpush1.msra.mxu0 %v83
  %133 = vmatprep.subr.mxu0 0.0
  %134 = vmatpush1.msra.mxu0 %v82
  %135 = vmatprep.subr.mxu0 0.0
  %136 = vmatpush1.msra.mxu0 %v81
  %137 = vmatprep.subr.mxu0 0.0
  %138 = vmatpush1.msra.mxu0 %v80
  %139 = vmatprep.subr.mxu0 0.0
  %140 = vmatpush1.msra.mxu0 %v79
  %141 = vmatprep.subr.mxu0 0.0
  %142 = vmatpush1.msra.mxu0 %v78
  %143 = vmatprep.subr.mxu0 0.0
  %144 = vmatpush1.msra.mxu0 %v77
  %145 = vmatprep.subr.mxu0 0.0
  %146 = vmatpush1.msra.mxu0 %v76
  %147 = vmatprep.subr.mxu0 0.0
  %148 = vmatpush2.msra.mxu0 %v107
  %149 = vmatprep.subr.mxu0 0.0
  %150 = vmatpush2.msra.mxu0 %v106
  %151 = vmatprep.subr.mxu0 0.0
  %152 = vmatpush2.msra.mxu0 %v105
  %153 = vmatprep.subr.mxu0 0.0
  %154 = vmatpush2.msra.mxu0 %v104
  %155 = vmatprep.subr.mxu0 0.0
  %156 = vmatpush2.msra.mxu0 %v103
  %157 = vmatprep.subr.mxu0 0.0
  %158 = vmatpush2.msra.mxu0 %v102
  %159 = vmatprep.subr.mxu0 0.0
  %160 = vmatpush2.msra.mxu0 %v101
  %161 = vmatprep.subr.mxu0 0.0
  %162 = vmatpush2.msra.mxu0 %v100
  %163 = vmatprep.subr.mxu0 0.0
  %164 = vmatpush2.msra.mxu0 %v99
  %165 = vmatprep.subr.mxu0 0.0
  %166 = vmatpush2.msra.mxu0 %v98
  %167 = vmatprep.subr.mxu0 0.0
  %168 = vmatpush2.msra.mxu0 %v97
  %169 = vmatprep.subr.mxu0 0.0
  %170 = vmatpush2.msra.mxu0 %v96
  %171 = vmatprep.subr.mxu0 0.0
  %172 = vmatpush2.msra.mxu0 %v95
  %173 = vmatprep.subr.mxu0 0.0
  %174 = vmatpush2.msra.mxu0 %v94
  %175 = vmatprep.subr.mxu0 0.0
  %176 = vmatpush2.msra.mxu0 %v93
  %177 = vmatprep.subr.mxu0 0.0
  %178 = vmatpush2.msra.mxu0 %v92
  %179 = vmatprep.mubr.f32.mxu0 %v45
  %180 = vmatmul.mubr.f32.gmra.mxu0 %v44
  %v181 = vpop.f32.mrf.mxu0
  %v182 = vadd.f32 %v113, %v181
  %v183 = vpop.f32.mrf.mxu0
  %184 = vmatprep.mubr.f32.mxu0 %v47
  %185 = vmatmul.mubr.f32.gmra.mxu0 %v46
  %v186 = vpop.f32.mrf.mxu0
  %v187 = vadd.f32 %v113, %v186
  %v188 = vpop.f32.mrf.mxu0
  %189 = vmatprep.mubr.f32.mxu0 %v49
  %190 = vmatmul.mubr.f32.gmra.mxu0 %v48
  %v191 = vpop.f32.mrf.mxu0
  %v192 = vadd.f32 %v113, %v191
  %v193 = vpop.f32.mrf.mxu0
  %194 = vmatprep.mubr.f32.mxu0 %v51
  %195 = vmatmul.mubr.f32.gmra.mxu0 %v50
  %v196 = vpop.f32.mrf.mxu0
  %v197 = vadd.f32 %v113, %v196
  %v198 = vpop.f32.mrf.mxu0
  %199 = vmatprep.mubr.f32.mxu0 %v53
  %200 = vmatmul.mubr.f32.gmra.mxu0 %v52
  %v201 = vpop.f32.mrf.mxu0
  %v202 = vadd.f32 %v113, %v201
  %v203 = vpop.f32.mrf.mxu0
  %204 = vmatprep.mubr.f32.mxu0 %v55
  %205 = vmatmul.mubr.f32.gmra.mxu0 %v54
  %v206 = vpop.f32.mrf.mxu0
  %v207 = vadd.f32 %v113, %v206
  %v208 = vpop.f32.mrf.mxu0
  %209 = vmatprep.mubr.f32.mxu0 %v57
  %210 = vmatmul.mubr.f32.gmra.mxu0 %v56
  %v211 = vpop.f32.mrf.mxu0
  %v212 = vadd.f32 %v113, %v211
  %v213 = vpop.f32.mrf.mxu0
  %214 = vmatprep.mubr.f32.mxu0 %v59
  %215 = vmatmul.mubr.f32.gmra.mxu0 %v58
  %v216 = vpop.f32.mrf.mxu0
  %v217 = vadd.f32 %v113, %v216
  %v218 = vpop.f32.mrf.mxu0
  %219 = vmatprep.mubr.f32.mxu0 %v61
  %220 = vmatmul.mubr.f32.gmra.mxu0 %v60
  %v221 = vpop.f32.mrf.mxu0
  %v222 = vadd.f32 %v113, %v221
  %v223 = vpop.f32.mrf.mxu0
  %224 = vmatprep.mubr.f32.mxu0 %v63
  %225 = vmatmul.mubr.f32.gmra.mxu0 %v62
  %v226 = vpop.f32.mrf.mxu0
  %v227 = vadd.f32 %v113, %v226
  %v228 = vpop.f32.mrf.mxu0
  %229 = vmatprep.mubr.f32.mxu0 %v65
  %230 = vmatmul.mubr.f32.gmra.mxu0 %v64
  %v231 = vpop.f32.mrf.mxu0
  %v232 = vadd.f32 %v113, %v231
  %v233 = vpop.f32.mrf.mxu0
  %234 = vmatprep.mubr.f32.mxu0 %v67
  %235 = vmatmul.mubr.f32.gmra.mxu0 %v66
  %v236 = vpop.f32.mrf.mxu0
  %v237 = vadd.f32 %v113, %v236
  %v238 = vpop.f32.mrf.mxu0
  %239 = vmatprep.mubr.f32.mxu0 %v69
  %240 = vmatmul.mubr.f32.gmra.mxu0 %v68
  %v241 = vpop.f32.mrf.mxu0
  %v242 = vadd.f32 %v113, %v241
  %v243 = vpop.f32.mrf.mxu0
  %244 = vmatprep.mubr.f32.mxu0 %v71
  %245 = vmatmul.mubr.f32.gmra.mxu0 %v70
  %v246 = vpop.f32.mrf.mxu0
  %v247 = vadd.f32 %v113, %v246
  %v248 = vpop.f32.mrf.mxu0
  %249 = vmatprep.mubr.f32.mxu0 %v73
  %250 = vmatmul.mubr.f32.gmra.mxu0 %v72
  %v251 = vpop.f32.mrf.mxu0
  %v252 = vadd.f32 %v113, %v251
  %v253 = vpop.f32.mrf.mxu0
  %254 = vmatprep.mubr.f32.mxu0 %v75
  %255 = vmatmul.mubr.f32.gmra.mxu0 %v74
  %v256 = vpop.f32.mrf.mxu0
  %v257 = vadd.f32 %v113, %v256
  %v258 = vpop.f32.mrf.mxu0
  %259 = vdwg.mxu0
  %v260 = vmax.f32 %v182, 0.0
  %v261 = vmax.f32 %v187, 0.0
  %v262 = vmax.f32 %v192, 0.0
  %v263 = vmax.f32 %v197, 0.0
  %v264 = vmax.f32 %v202, 0.0
  %v265 = vmax.f32 %v207, 0.0
  %v266 = vmax.f32 %v212, 0.0
  %v267 = vmax.f32 %v217, 0.0
  %v268 = vmax.f32 %v222, 0.0
  %v269 = vmax.f32 %v227, 0.0
  %v270 = vmax.f32 %v232, 0.0
  %v271 = vmax.f32 %v237, 0.0
  %v272 = vmax.f32 %v242, 0.0
  %v273 = vmax.f32 %v247, 0.0
  %v274 = vmax.f32 %v252, 0.0
  %v275 = vmax.f32 %v257, 0.0
  %v276 = vld [vmem:[%s3] sm:$0xff]
  %v277 = vld [vmem:[%s3 + $0x8] sm:$0xff]
  %v278 = vld [vmem:[%s3 + $0x10] sm:$0xff]
  %279 = vmatprep.subr.mxu0 0.0
  %280 = vmatpush1.msra.mxu0 %v275
  %281 = vmatprep.subr.mxu0 0.0
  %282 = vmatpush1.msra.mxu0 %v274
  %283 = vmatprep.subr.mxu0 0.0
  %284 = vmatpush1.msra.mxu0 %v273
  %285 = vmatprep.subr.mxu0 0.0
  %286 = vmatpush1.msra.mxu0 %v272
  %287 = vmatprep.subr.mxu0 0.0
  %288 = vmatpush1.msra.mxu0 %v271
  %289 = vmatprep.subr.mxu0 0.0
  %290 = vmatpush1.msra.mxu0 %v270
  %291 = vmatprep.subr.mxu0 0.0
  %292 = vmatpush1.msra.mxu0 %v269
  %293 = vmatprep.subr.mxu0 0.0
  %294 = vmatpush1.msra.mxu0 %v268
  %295 = vmatprep.subr.mxu0 0.0
  %296 = vmatpush1.msra.mxu0 %v267
  %297 = vmatprep.subr.mxu0 0.0
  %298 = vmatpush1.msra.mxu0 %v266
  %299 = vmatprep.subr.mxu0 0.0
  %300 = vmatpush1.msra.mxu0 %v265
  %301 = vmatprep.subr.mxu0 0.0
  %302 = vmatpush1.msra.mxu0 %v264
  %303 = vmatprep.subr.mxu0 0.0
  %304 = vmatpush1.msra.mxu0 %v263
  %305 = vmatprep.subr.mxu0 0.0
  %306 = vmatpush1.msra.mxu0 %v262
  %307 = vmatprep.subr.mxu0 0.0
  %308 = vmatpush1.msra.mxu0 %v261
  %309 = vmatprep.subr.mxu0 0.0
  %310 = vmatpush1.msra.mxu0 %v260
  %311 = vmatprep.subr.mxu0 0.0
  %312 = vmatpush2.msra.mxu0 0.0
  %313 = vmatprep.subr.mxu0 0.0
  %314 = vmatpush2.msra.mxu0 0.0
  %315 = vmatprep.subr.mxu0 0.0
  %316 = vmatpush2.msra.mxu0 0.0
  %317 = vmatprep.subr.mxu0 0.0
  %318 = vmatpush2.msra.mxu0 0.0
  %319 = vmatprep.subr.mxu0 0.0
  %320 = vmatpush2.msra.mxu0 0.0
  %321 = vmatprep.subr.mxu0 0.0
  %322 = vmatpush2.msra.mxu0 0.0
  %323 = vmatprep.subr.mxu0 0.0
  %324 = vmatpush2.msra.mxu0 0.0
  %325 = vmatprep.subr.mxu0 0.0
  %326 = vmatpush2.msra.mxu0 0.0
  %327 = vmatprep.subr.mxu0 0.0
  %328 = vmatpush2.msra.mxu0 0.0
  %329 = vmatprep.subr.mxu0 0.0
  %330 = vmatpush2.msra.mxu0 0.0
  %331 = vmatprep.subr.mxu0 0.0
  %332 = vmatpush2.msra.mxu0 0.0
  %333 = vmatprep.subr.mxu0 0.0
  %334 = vmatpush2.msra.mxu0 0.0
  %335 = vmatprep.subr.mxu0 0.0
  %336 = vmatpush2.msra.mxu0 0.0
  %337 = vmatprep.subr.mxu0 0.0
  %338 = vmatpush2.msra.mxu0 0.0
  %339 = vmatprep.subr.mxu0 0.0
  %340 = vmatpush2.msra.mxu0 0.0
  %341 = vmatprep.subr.mxu0 0.0
  %342 = vmatpush2.msra.mxu0 0.0
  %343 = vmatprep.mubr.f32.mxu0 0.0
  %344 = vmatmul.mubr.f32.gmra.mxu0 %v276
  %v345 = vpop.f32.mrf.mxu0
  %v346 = vadd.f32 0.0, %v345
  %v347 = vpop.f32.mrf.mxu0
  %348 = vmatprep.mubr.f32.mxu0 0.0
  %349 = vmatmul.mubr.f32.gmra.mxu0 %v277
  %v350 = vpop.f32.mrf.mxu0
  %v351 = vadd.f32 0.0, %v350
  %v352 = vpop.f32.mrf.mxu0
  %353 = vmatprep.mubr.f32.mxu0 0.0
  %354 = vmatmul.mubr.f32.gmra.mxu0 %v278
  %v355 = vpop.f32.mrf.mxu0
  %v356 = vadd.f32 0.0, %v355
  %v357 = vpop.f32.mrf.mxu0
  %358 = vdwg.mxu0
  %v359 = vld [vmem:[%s4] sm:$0xff]
  %v360 = vld [vmem:[%s4 + $0x8] sm:$0xff]
  %v361 = vld [vmem:[%s4 + $0x10] sm:$0xff]
  %v362 = vld [vmem:[%s4 + $0x18] sm:$0xff]
  %s363 = scalar_lea.vmem %s3, 24
  %v364 = vld [vmem:[%s363] sm:$0xff]
  %v365 = vld [vmem:[%s363 + $0x8] sm:$0xff]
  %v366 = vld [vmem:[%s363 + $0x10] sm:$0xff]
  %367 = vmatprep.subr.mxu0 0.0
  %368 = vmatpush1.msra.mxu0 %v275
  %369 = vmatprep.subr.mxu0 0.0
  %370 = vmatpush1.msra.mxu0 %v274
  %371 = vmatprep.subr.mxu0 0.0
  %372 = vmatpush1.msra.mxu0 %v273
  %373 = vmatprep.subr.mxu0 0.0
  %374 = vmatpush1.msra.mxu0 %v272
  %375 = vmatprep.subr.mxu0 0.0
  %376 = vmatpush1.msra.mxu0 %v271
  %377 = vmatprep.subr.mxu0 0.0
  %378 = vmatpush1.msra.mxu0 %v270
  %379 = vmatprep.subr.mxu0 0.0
  %380 = vmatpush1.msra.mxu0 %v269
  %381 = vmatprep.subr.mxu0 0.0
  %382 = vmatpush1.msra.mxu0 %v268
  %383 = vmatprep.subr.mxu0 0.0
  %384 = vmatpush1.msra.mxu0 %v267
  %385 = vmatprep.subr.mxu0 0.0
  %386 = vmatpush1.msra.mxu0 %v266
  %387 = vmatprep.subr.mxu0 0.0
  %388 = vmatpush1.msra.mxu0 %v265
  %389 = vmatprep.subr.mxu0 0.0
  %390 = vmatpush1.msra.mxu0 %v264
  %391 = vmatprep.subr.mxu0 0.0
  %392 = vmatpush1.msra.mxu0 %v263
  %393 = vmatprep.subr.mxu0 0.0
  %394 = vmatpush1.msra.mxu0 %v262
  %395 = vmatprep.subr.mxu0 0.0
  %396 = vmatpush1.msra.mxu0 %v261
  %397 = vmatprep.subr.mxu0 0.0
  %398 = vmatpush1.msra.mxu0 %v260
  %399 = vmatprep.subr.mxu0 0.0
  %400 = vmatpush2.msra.mxu0 0.0
  %401 = vmatprep.subr.mxu0 0.0
  %402 = vmatpush2.msra.mxu0 0.0
  %403 = vmatprep.subr.mxu0 0.0
  %404 = vmatpush2.msra.mxu0 0.0
  %405 = vmatprep.subr.mxu0 0.0
  %406 = vmatpush2.msra.mxu0 0.0
  %407 = vmatprep.subr.mxu0 0.0
  %408 = vmatpush2.msra.mxu0 0.0
  %409 = vmatprep.subr.mxu0 0.0
  %410 = vmatpush2.msra.mxu0 0.0
  %411 = vmatprep.subr.mxu0 0.0
  %412 = vmatpush2.msra.mxu0 0.0
  %413 = vmatprep.subr.mxu0 0.0
  %414 = vmatpush2.msra.mxu0 0.0
  %415 = vmatprep.subr.mxu0 0.0
  %416 = vmatpush2.msra.mxu0 0.0
  %417 = vmatprep.subr.mxu0 0.0
  %418 = vmatpush2.msra.mxu0 0.0
  %419 = vmatprep.subr.mxu0 0.0
  %420 = vmatpush2.msra.mxu0 0.0
  %421 = vmatprep.subr.mxu0 0.0
  %422 = vmatpush2.msra.mxu0 0.0
  %423 = vmatprep.subr.mxu0 0.0
  %424 = vmatpush2.msra.mxu0 0.0
  %425 = vmatprep.subr.mxu0 0.0
  %426 = vmatpush2.msra.mxu0 0.0
  %427 = vmatprep.subr.mxu0 0.0
  %428 = vmatpush2.msra.mxu0 0.0
  %429 = vmatprep.subr.mxu0 0.0
  %430 = vmatpush2.msra.mxu0 0.0
  %431 = vmatprep.mubr.f32.mxu0 0.0
  %432 = vmatmul.mubr.f32.gmra.mxu0 %v364
  %v433 = vpop.f32.mrf.mxu0
  %v434 = vadd.f32 0.0, %v433
  %v435 = vpop.f32.mrf.mxu0
  %436 = vmatprep.mubr.f32.mxu0 0.0
  %437 = vmatmul.mubr.f32.gmra.mxu0 %v365
  %v438 = vpop.f32.mrf.mxu0
  %v439 = vadd.f32 0.0, %v438
  %v440 = vpop.f32.mrf.mxu0
  %441 = vmatprep.mubr.f32.mxu0 0.0
  %442 = vmatmul.mubr.f32.gmra.mxu0 %v366
  %v443 = vpop.f32.mrf.mxu0
  %v444 = vadd.f32 0.0, %v443
  %v445 = vpop.f32.mrf.mxu0
  %446 = vdwg.mxu0
  %s447 = scalar_lea.vmem %s4, 32
  %v448 = vld [vmem:[%s447] sm:$0xff]
  %v449 = vld [vmem:[%s447 + $0x8] sm:$0xff]
  %v450 = vld [vmem:[%s447 + $0x10] sm:$0xff]
  %v451 = vld [vmem:[%s447 + $0x18] sm:$0xff]
  %vm452 = vcmask 261120
  %v454 = vsel %vm452, %v434, 0
  %v457 = vsel %vm452, %v439, 0
  %v460 = vsel %vm452, %v444, 0
  %462 = vmatprep.subr.mxu0 0.0
  %463 = vmatpush1.msra.mxu0 0.0
  %464 = vmatprep.subr.mxu0 0.0
  %465 = vmatpush1.msra.mxu0 0.0
  %466 = vmatprep.subr.mxu0 0.0
  %467 = vmatpush1.msra.mxu0 0.0
  %468 = vmatprep.subr.mxu0 0.0
  %469 = vmatpush1.msra.mxu0 0.0
  %470 = vmatprep.subr.mxu0 0.0
  %471 = vmatpush1.msra.mxu0 0.0
  %472 = vmatprep.subr.mxu0 0.0
  %473 = vmatpush1.msra.mxu0 0.0
  %474 = vmatprep.subr.mxu0 0.0
  %475 = vmatpush1.msra.mxu0 0.0
  %476 = vmatprep.subr.mxu0 0.0
  %477 = vmatpush1.msra.mxu0 0.0
  %478 = vmatprep.subr.mxu0 0.0
  %479 = vmatpush1.msra.mxu0 0.0
  %480 = vmatprep.subr.mxu0 0.0
  %481 = vmatpush1.msra.mxu0 0.0
  %482 = vmatprep.subr.mxu0 0.0
  %483 = vmatpush1.msra.mxu0 0.0
  %484 = vmatprep.subr.mxu0 0.0
  %485 = vmatpush1.msra.mxu0 0.0
  %486 = vmatprep.subr.mxu0 0.0
  %487 = vmatpush1.msra.mxu0 %v451
  %488 = vmatprep.subr.mxu0 0.0
  %489 = vmatpush1.msra.mxu0 %v450
  %490 = vmatprep.subr.mxu0 0.0
  %491 = vmatpush1.msra.mxu0 %v449
  %492 = vmatprep.subr.mxu0 0.0
  %493 = vmatpush1.msra.mxu0 %v448
  %494 = vmatprep.subr.mxu0 0.0
  %495 = vmatpush2.msra.mxu0 0.0
  %496 = vmatprep.subr.mxu0 0.0
  %497 = vmatpush2.msra.mxu0 0.0
  %498 = vmatprep.subr.mxu0 0.0
  %499 = vmatpush2.msra.mxu0 0.0
  %500 = vmatprep.subr.mxu0 0.0
  %501 = vmatpush2.msra.mxu0 0.0
  %502 = vmatprep.subr.mxu0 0.0
  %503 = vmatpush2.msra.mxu0 0.0
  %504 = vmatprep.subr.mxu0 0.0
  %505 = vmatpush2.msra.mxu0 0.0
  %506 = vmatprep.subr.mxu0 0.0
  %507 = vmatpush2.msra.mxu0 0.0
  %508 = vmatprep.subr.mxu0 0.0
  %509 = vmatpush2.msra.mxu0 0.0
  %510 = vmatprep.subr.mxu0 0.0
  %511 = vmatpush2.msra.mxu0 0.0
  %512 = vmatprep.subr.mxu0 0.0
  %513 = vmatpush2.msra.mxu0 0.0
  %514 = vmatprep.subr.mxu0 0.0
  %515 = vmatpush2.msra.mxu0 0.0
  %516 = vmatprep.subr.mxu0 0.0
  %517 = vmatpush2.msra.mxu0 0.0
  %518 = vmatprep.subr.mxu0 0.0
  %519 = vmatpush2.msra.mxu0 0.0
  %520 = vmatprep.subr.mxu0 0.0
  %521 = vmatpush2.msra.mxu0 0.0
  %522 = vmatprep.subr.mxu0 0.0
  %523 = vmatpush2.msra.mxu0 0.0
  %524 = vmatprep.subr.mxu0 0.0
  %525 = vmatpush2.msra.mxu0 0.0
  %526 = vmatprep.mubr.f32.mxu0 0.0
  %527 = vmatmul.mubr.f32.gmra.mxu0 %v454
  %v528 = vpop.f32.mrf.mxu0
  %v529 = vadd.f32 0.0, %v528
  %v530 = vpop.f32.mrf.mxu0
  %531 = vmatprep.mubr.f32.mxu0 0.0
  %532 = vmatmul.mubr.f32.gmra.mxu0 %v457
  %v533 = vpop.f32.mrf.mxu0
  %v534 = vadd.f32 0.0, %v533
  %v535 = vpop.f32.mrf.mxu0
  %536 = vmatprep.mubr.f32.mxu0 0.0
  %537 = vmatmul.mubr.f32.gmra.mxu0 %v460
  %v538 = vpop.f32.mrf.mxu0
  %v539 = vadd.f32 0.0, %v538
  %v540 = vpop.f32.mrf.mxu0
  %541 = vdwg.mxu0
  %v543 = vsel %vm452, %v346, 0
  %v546 = vsel %vm452, %v351, 0
  %v549 = vsel %vm452, %v356, 0
  %551 = vmatprep.subr.mxu0 0.0
  %552 = vmatpush1.msra.mxu0 0.0
  %553 = vmatprep.subr.mxu0 0.0
  %554 = vmatpush1.msra.mxu0 0.0
  %555 = vmatprep.subr.mxu0 0.0
  %556 = vmatpush1.msra.mxu0 0.0
  %557 = vmatprep.subr.mxu0 0.0
  %558 = vmatpush1.msra.mxu0 0.0
  %559 = vmatprep.subr.mxu0 0.0
  %560 = vmatpush1.msra.mxu0 0.0
  %561 = vmatprep.subr.mxu0 0.0
  %562 = vmatpush1.msra.mxu0 0.0
  %563 = vmatprep.subr.mxu0 0.0
  %564 = vmatpush1.msra.mxu0 0.0
  %565 = vmatprep.subr.mxu0 0.0
  %566 = vmatpush1.msra.mxu0 0.0
  %567 = vmatprep.subr.mxu0 0.0
  %568 = vmatpush1.msra.mxu0 0.0
  %569 = vmatprep.subr.mxu0 0.0
  %570 = vmatpush1.msra.mxu0 0.0
  %571 = vmatprep.subr.mxu0 0.0
  %572 = vmatpush1.msra.mxu0 0.0
  %573 = vmatprep.subr.mxu0 0.0
  %574 = vmatpush1.msra.mxu0 0.0
  %575 = vmatprep.subr.mxu0 0.0
  %576 = vmatpush1.msra.mxu0 %v362
  %577 = vmatprep.subr.mxu0 0.0
  %578 = vmatpush1.msra.mxu0 %v361
  %579 = vmatprep.subr.mxu0 0.0
  %580 = vmatpush1.msra.mxu0 %v360
  %581 = vmatprep.subr.mxu0 0.0
  %582 = vmatpush1.msra.mxu0 %v359
  %583 = vmatprep.subr.mxu0 0.0
  %584 = vmatpush2.msra.mxu0 0.0
  %585 = vmatprep.subr.mxu0 0.0
  %586 = vmatpush2.msra.mxu0 0.0
  %587 = vmatprep.subr.mxu0 0.0
  %588 = vmatpush2.msra.mxu0 0.0
  %589 = vmatprep.subr.mxu0 0.0
  %590 = vmatpush2.msra.mxu0 0.0
  %591 = vmatprep.subr.mxu0 0.0
  %592 = vmatpush2.msra.mxu0 0.0
  %593 = vmatprep.subr.mxu0 0.0
  %594 = vmatpush2.msra.mxu0 0.0
  %595 = vmatprep.subr.mxu0 0.0
  %596 = vmatpush2.msra.mxu0 0.0
  %597 = vmatprep.subr.mxu0 0.0
  %598 = vmatpush2.msra.mxu0 0.0
  %599 = vmatprep.subr.mxu0 0.0
  %600 = vmatpush2.msra.mxu0 0.0
  %601 = vmatprep.subr.mxu0 0.0
  %602 = vmatpush2.msra.mxu0 0.0
  %603 = vmatprep.subr.mxu0 0.0
  %604 = vmatpush2.msra.mxu0 0.0
  %605 = vmatprep.subr.mxu0 0.0
  %606 = vmatpush2.msra.mxu0 0.0
  %607 = vmatprep.subr.mxu0 0.0
  %608 = vmatpush2.msra.mxu0 0.0
  %609 = vmatprep.subr.mxu0 0.0
  %610 = vmatpush2.msra.mxu0 0.0
  %611 = vmatprep.subr.mxu0 0.0
  %612 = vmatpush2.msra.mxu0 0.0
  %613 = vmatprep.subr.mxu0 0.0
  %614 = vmatpush2.msra.mxu0 0.0
  %615 = vmatprep.mubr.f32.mxu0 0.0
  %616 = vmatmul.mubr.f32.gmra.mxu0 %v543
  %v617 = vpop.f32.mrf.mxu0
  %v618 = vadd.f32 %v529, %v617
  %v619 = vpop.f32.mrf.mxu0
  %620 = vmatprep.mubr.f32.mxu0 0.0
  %621 = vmatmul.mubr.f32.gmra.mxu0 %v546
  %v622 = vpop.f32.mrf.mxu0
  %v623 = vadd.f32 %v534, %v622
  %v624 = vpop.f32.mrf.mxu0
  %625 = vmatprep.mubr.f32.mxu0 0.0
  %626 = vmatmul.mubr.f32.gmra.mxu0 %v549
  %v627 = vpop.f32.mrf.mxu0
  %v628 = vadd.f32 %v539, %v627
  %v629 = vpop.f32.mrf.mxu0
  %630 = vdwg.mxu0
  %s631 = scalar_lea.vmem %s3, 48
  %v632 = vld [vmem:[%s631] sm:$0xff]
  %v633 = vld [vmem:[%s631 + $0x8] sm:$0xff]
  %v634 = vld [vmem:[%s631 + $0x10] sm:$0xff]
  %635 = vmatprep.subr.mxu0 0.0
  %636 = vmatpush1.msra.mxu0 %v275
  %637 = vmatprep.subr.mxu0 0.0
  %638 = vmatpush1.msra.mxu0 %v274
  %639 = vmatprep.subr.mxu0 0.0
  %640 = vmatpush1.msra.mxu0 %v273
  %641 = vmatprep.subr.mxu0 0.0
  %642 = vmatpush1.msra.mxu0 %v272
  %643 = vmatprep.subr.mxu0 0.0
  %644 = vmatpush1.msra.mxu0 %v271
  %645 = vmatprep.subr.mxu0 0.0
  %646 = vmatpush1.msra.mxu0 %v270
  %647 = vmatprep.subr.mxu0 0.0
  %648 = vmatpush1.msra.mxu0 %v269
  %649 = vmatprep.subr.mxu0 0.0
  %650 = vmatpush1.msra.mxu0 %v268
  %651 = vmatprep.subr.mxu0 0.0
  %652 = vmatpush1.msra.mxu0 %v267
  %653 = vmatprep.subr.mxu0 0.0
  %654 = vmatpush1.msra.mxu0 %v266
  %655 = vmatprep.subr.mxu0 0.0
  %656 = vmatpush1.msra.mxu0 %v265
  %657 = vmatprep.subr.mxu0 0.0
  %658 = vmatpush1.msra.mxu0 %v264
  %659 = vmatprep.subr.mxu0 0.0
  %660 = vmatpush1.msra.mxu0 %v263
  %661 = vmatprep.subr.mxu0 0.0
  %662 = vmatpush1.msra.mxu0 %v262
  %663 = vmatprep.subr.mxu0 0.0
  %664 = vmatpush1.msra.mxu0 %v261
  %665 = vmatprep.subr.mxu0 0.0
  %666 = vmatpush1.msra.mxu0 %v260
  %667 = vmatprep.subr.mxu0 0.0
  %668 = vmatpush2.msra.mxu0 0.0
  %669 = vmatprep.subr.mxu0 0.0
  %670 = vmatpush2.msra.mxu0 0.0
  %671 = vmatprep.subr.mxu0 0.0
  %672 = vmatpush2.msra.mxu0 0.0
  %673 = vmatprep.subr.mxu0 0.0
  %674 = vmatpush2.msra.mxu0 0.0
  %675 = vmatprep.subr.mxu0 0.0
  %676 = vmatpush2.msra.mxu0 0.0
  %677 = vmatprep.subr.mxu0 0.0
  %678 = vmatpush2.msra.mxu0 0.0
  %679 = vmatprep.subr.mxu0 0.0
  %680 = vmatpush2.msra.mxu0 0.0
  %681 = vmatprep.subr.mxu0 0.0
  %682 = vmatpush2.msra.mxu0 0.0
  %683 = vmatprep.subr.mxu0 0.0
  %684 = vmatpush2.msra.mxu0 0.0
  %685 = vmatprep.subr.mxu0 0.0
  %686 = vmatpush2.msra.mxu0 0.0
  %687 = vmatprep.subr.mxu0 0.0
  %688 = vmatpush2.msra.mxu0 0.0
  %689 = vmatprep.subr.mxu0 0.0
  %690 = vmatpush2.msra.mxu0 0.0
  %691 = vmatprep.subr.mxu0 0.0
  %692 = vmatpush2.msra.mxu0 0.0
  %693 = vmatprep.subr.mxu0 0.0
  %694 = vmatpush2.msra.mxu0 0.0
  %695 = vmatprep.subr.mxu0 0.0
  %696 = vmatpush2.msra.mxu0 0.0
  %697 = vmatprep.subr.mxu0 0.0
  %698 = vmatpush2.msra.mxu0 0.0
  %699 = vmatprep.mubr.f32.mxu0 0.0
  %700 = vmatmul.mubr.f32.gmra.mxu0 %v632
  %v701 = vpop.f32.mrf.mxu0
  %v702 = vadd.f32 0.0, %v701
  %v703 = vpop.f32.mrf.mxu0
  %704 = vmatprep.mubr.f32.mxu0 0.0
  %705 = vmatmul.mubr.f32.gmra.mxu0 %v633
  %v706 = vpop.f32.mrf.mxu0
  %v707 = vadd.f32 0.0, %v706
  %v708 = vpop.f32.mrf.mxu0
  %709 = vmatprep.mubr.f32.mxu0 0.0
  %710 = vmatmul.mubr.f32.gmra.mxu0 %v634
  %v711 = vpop.f32.mrf.mxu0
  %v712 = vadd.f32 0.0, %v711
  %v713 = vpop.f32.mrf.mxu0
  %714 = vdwg.mxu0
  %s715 = scalar_lea.vmem %s4, 64
  %v716 = vld [vmem:[%s715] sm:$0xff]
  %v717 = vld [vmem:[%s715 + $0x8] sm:$0xff]
  %v718 = vld [vmem:[%s715 + $0x10] sm:$0xff]
  %v719 = vld [vmem:[%s715 + $0x18] sm:$0xff]
  %v721 = vsel %vm452, %v702, 0
  %v724 = vsel %vm452, %v707, 0
  %v727 = vsel %vm452, %v712, 0
  %729 = vmatprep.subr.mxu0 0.0
  %730 = vmatpush1.msra.mxu0 0.0
  %731 = vmatprep.subr.mxu0 0.0
  %732 = vmatpush1.msra.mxu0 0.0
  %733 = vmatprep.subr.mxu0 0.0
  %734 = vmatpush1.msra.mxu0 0.0
  %735 = vmatprep.subr.mxu0 0.0
  %736 = vmatpush1.msra.mxu0 0.0
  %737 = vmatprep.subr.mxu0 0.0
  %738 = vmatpush1.msra.mxu0 0.0
  %739 = vmatprep.subr.mxu0 0.0
  %740 = vmatpush1.msra.mxu0 0.0
  %741 = vmatprep.subr.mxu0 0.0
  %742 = vmatpush1.msra.mxu0 0.0
  %743 = vmatprep.subr.mxu0 0.0
  %744 = vmatpush1.msra.mxu0 0.0
  %745 = vmatprep.subr.mxu0 0.0
  %746 = vmatpush1.msra.mxu0 0.0
  %747 = vmatprep.subr.mxu0 0.0
  %748 = vmatpush1.msra.mxu0 0.0
  %749 = vmatprep.subr.mxu0 0.0
  %750 = vmatpush1.msra.mxu0 0.0
  %751 = vmatprep.subr.mxu0 0.0
  %752 = vmatpush1.msra.mxu0 0.0
  %753 = vmatprep.subr.mxu0 0.0
  %754 = vmatpush1.msra.mxu0 %v719
  %755 = vmatprep.subr.mxu0 0.0
  %756 = vmatpush1.msra.mxu0 %v718
  %757 = vmatprep.subr.mxu0 0.0
  %758 = vmatpush1.msra.mxu0 %v717
  %759 = vmatprep.subr.mxu0 0.0
  %760 = vmatpush1.msra.mxu0 %v716
  %761 = vmatprep.subr.mxu0 0.0
  %762 = vmatpush2.msra.mxu0 0.0
  %763 = vmatprep.subr.mxu0 0.0
  %764 = vmatpush2.msra.mxu0 0.0
  %765 = vmatprep.subr.mxu0 0.0
  %766 = vmatpush2.msra.mxu0 0.0
  %767 = vmatprep.subr.mxu0 0.0
  %768 = vmatpush2.msra.mxu0 0.0
  %769 = vmatprep.subr.mxu0 0.0
  %770 = vmatpush2.msra.mxu0 0.0
  %771 = vmatprep.subr.mxu0 0.0
  %772 = vmatpush2.msra.mxu0 0.0
  %773 = vmatprep.subr.mxu0 0.0
  %774 = vmatpush2.msra.mxu0 0.0
  %775 = vmatprep.subr.mxu0 0.0
  %776 = vmatpush2.msra.mxu0 0.0
  %777 = vmatprep.subr.mxu0 0.0
  %778 = vmatpush2.msra.mxu0 0.0
  %779 = vmatprep.subr.mxu0 0.0
  %780 = vmatpush2.msra.mxu0 0.0
  %781 = vmatprep.subr.mxu0 0.0
  %782 = vmatpush2.msra.mxu0 0.0
  %783 = vmatprep.subr.mxu0 0.0
  %784 = vmatpush2.msra.mxu0 0.0
  %785 = vmatprep.subr.mxu0 0.0
  %786 = vmatpush2.msra.mxu0 0.0
  %787 = vmatprep.subr.mxu0 0.0
  %788 = vmatpush2.msra.mxu0 0.0
  %789 = vmatprep.subr.mxu0 0.0
  %790 = vmatpush2.msra.mxu0 0.0
  %791 = vmatprep.subr.mxu0 0.0
  %792 = vmatpush2.msra.mxu0 0.0
  %793 = vmatprep.mubr.f32.mxu0 0.0
  %794 = vmatmul.mubr.f32.gmra.mxu0 %v721
  %v795 = vpop.f32.mrf.mxu0
  %v796 = vadd.f32 0.0, %v795
  %v797 = vpop.f32.mrf.mxu0
  %798 = vmatprep.mubr.f32.mxu0 0.0
  %799 = vmatmul.mubr.f32.gmra.mxu0 %v724
  %v800 = vpop.f32.mrf.mxu0
  %v801 = vadd.f32 0.0, %v800
  %v802 = vpop.f32.mrf.mxu0
  %803 = vmatprep.mubr.f32.mxu0 0.0
  %804 = vmatmul.mubr.f32.gmra.mxu0 %v727
  %v805 = vpop.f32.mrf.mxu0
  %v806 = vadd.f32 0.0, %v805
  %v807 = vpop.f32.mrf.mxu0
  %808 = vdwg.mxu0
  %v809 = vadd.f32 %v618, %v796
  %v810 = vadd.f32 %v623, %v801
  %v811 = vadd.f32 %v628, %v806
  %s812 = scalar_lea.vmem %s3, 72
  %v813 = vld [vmem:[%s812] sm:$0xff]
  %v814 = vld [vmem:[%s812 + $0x8] sm:$0xff]
  %v815 = vld [vmem:[%s812 + $0x10] sm:$0xff]
  %816 = vmatprep.subr.mxu0 0.0
  %817 = vmatpush1.msra.mxu0 %v275
  %818 = vmatprep.subr.mxu0 0.0
  %819 = vmatpush1.msra.mxu0 %v274
  %820 = vmatprep.subr.mxu0 0.0
  %821 = vmatpush1.msra.mxu0 %v273
  %822 = vmatprep.subr.mxu0 0.0
  %823 = vmatpush1.msra.mxu0 %v272
  %824 = vmatprep.subr.mxu0 0.0
  %825 = vmatpush1.msra.mxu0 %v271
  %826 = vmatprep.subr.mxu0 0.0
  %827 = vmatpush1.msra.mxu0 %v270
  %828 = vmatprep.subr.mxu0 0.0
  %829 = vmatpush1.msra.mxu0 %v269
  %830 = vmatprep.subr.mxu0 0.0
  %831 = vmatpush1.msra.mxu0 %v268
  %832 = vmatprep.subr.mxu0 0.0
  %833 = vmatpush1.msra.mxu0 %v267
  %834 = vmatprep.subr.mxu0 0.0
  %835 = vmatpush1.msra.mxu0 %v266
  %836 = vmatprep.subr.mxu0 0.0
  %837 = vmatpush1.msra.mxu0 %v265
  %838 = vmatprep.subr.mxu0 0.0
  %839 = vmatpush1.msra.mxu0 %v264
  %840 = vmatprep.subr.mxu0 0.0
  %841 = vmatpush1.msra.mxu0 %v263
  %842 = vmatprep.subr.mxu0 0.0
  %843 = vmatpush1.msra.mxu0 %v262
  %844 = vmatprep.subr.mxu0 0.0
  %845 = vmatpush1.msra.mxu0 %v261
  %846 = vmatprep.subr.mxu0 0.0
  %847 = vmatpush1.msra.mxu0 %v260
  %848 = vmatprep.subr.mxu0 0.0
  %849 = vmatpush2.msra.mxu0 0.0
  %850 = vmatprep.subr.mxu0 0.0
  %851 = vmatpush2.msra.mxu0 0.0
  %852 = vmatprep.subr.mxu0 0.0
  %853 = vmatpush2.msra.mxu0 0.0
  %854 = vmatprep.subr.mxu0 0.0
  %855 = vmatpush2.msra.mxu0 0.0
  %856 = vmatprep.subr.mxu0 0.0
  %857 = vmatpush2.msra.mxu0 0.0
  %858 = vmatprep.subr.mxu0 0.0
  %859 = vmatpush2.msra.mxu0 0.0
  %860 = vmatprep.subr.mxu0 0.0
  %861 = vmatpush2.msra.mxu0 0.0
  %862 = vmatprep.subr.mxu0 0.0
  %863 = vmatpush2.msra.mxu0 0.0
  %864 = vmatprep.subr.mxu0 0.0
  %865 = vmatpush2.msra.mxu0 0.0
  %866 = vmatprep.subr.mxu0 0.0
  %867 = vmatpush2.msra.mxu0 0.0
  %868 = vmatprep.subr.mxu0 0.0
  %869 = vmatpush2.msra.mxu0 0.0
  %870 = vmatprep.subr.mxu0 0.0
  %871 = vmatpush2.msra.mxu0 0.0
  %872 = vmatprep.subr.mxu0 0.0
  %873 = vmatpush2.msra.mxu0 0.0
  %874 = vmatprep.subr.mxu0 0.0
  %875 = vmatpush2.msra.mxu0 0.0
  %876 = vmatprep.subr.mxu0 0.0
  %877 = vmatpush2.msra.mxu0 0.0
  %878 = vmatprep.subr.mxu0 0.0
  %879 = vmatpush2.msra.mxu0 0.0
  %880 = vmatprep.mubr.f32.mxu0 0.0
  %881 = vmatmul.mubr.f32.gmra.mxu0 %v813
  %v882 = vpop.f32.mrf.mxu0
  %v883 = vadd.f32 0.0, %v882
  %v884 = vpop.f32.mrf.mxu0
  %885 = vmatprep.mubr.f32.mxu0 0.0
  %886 = vmatmul.mubr.f32.gmra.mxu0 %v814
  %v887 = vpop.f32.mrf.mxu0
  %v888 = vadd.f32 0.0, %v887
  %v889 = vpop.f32.mrf.mxu0
  %890 = vmatprep.mubr.f32.mxu0 0.0
  %891 = vmatmul.mubr.f32.gmra.mxu0 %v815
  %v892 = vpop.f32.mrf.mxu0
  %v893 = vadd.f32 0.0, %v892
  %v894 = vpop.f32.mrf.mxu0
  %895 = vdwg.mxu0
  %s896 = scalar_lea.vmem %s4, 96
  %v897 = vld [vmem:[%s896] sm:$0xff]
  %v898 = vld [vmem:[%s896 + $0x8] sm:$0xff]
  %v899 = vld [vmem:[%s896 + $0x10] sm:$0xff]
  %v900 = vld [vmem:[%s896 + $0x18] sm:$0xff]
  %v902 = vsel %vm452, %v883, 0
  %v905 = vsel %vm452, %v888, 0
  %v908 = vsel %vm452, %v893, 0
  %910 = vmatprep.subr.mxu0 0.0
  %911 = vmatpush1.msra.mxu0 0.0
  %912 = vmatprep.subr.mxu0 0.0
  %913 = vmatpush1.msra.mxu0 0.0
  %914 = vmatprep.subr.mxu0 0.0
  %915 = vmatpush1.msra.mxu0 0.0
  %916 = vmatprep.subr.mxu0 0.0
  %917 = vmatpush1.msra.mxu0 0.0
  %918 = vmatprep.subr.mxu0 0.0
  %919 = vmatpush1.msra.mxu0 0.0
  %920 = vmatprep.subr.mxu0 0.0
  %921 = vmatpush1.msra.mxu0 0.0
  %922 = vmatprep.subr.mxu0 0.0
  %923 = vmatpush1.msra.mxu0 0.0
  %924 = vmatprep.subr.mxu0 0.0
  %925 = vmatpush1.msra.mxu0 0.0
  %926 = vmatprep.subr.mxu0 0.0
  %927 = vmatpush1.msra.mxu0 0.0
  %928 = vmatprep.subr.mxu0 0.0
  %929 = vmatpush1.msra.mxu0 0.0
  %930 = vmatprep.subr.mxu0 0.0
  %931 = vmatpush1.msra.mxu0 0.0
  %932 = vmatprep.subr.mxu0 0.0
  %933 = vmatpush1.msra.mxu0 0.0
  %934 = vmatprep.subr.mxu0 0.0
  %935 = vmatpush1.msra.mxu0 %v900
  %936 = vmatprep.subr.mxu0 0.0
  %937 = vmatpush1.msra.mxu0 %v899
  %938 = vmatprep.subr.mxu0 0.0
  %939 = vmatpush1.msra.mxu0 %v898
  %940 = vmatprep.subr.mxu0 0.0
  %941 = vmatpush1.msra.mxu0 %v897
  %942 = vmatprep.subr.mxu0 0.0
  %943 = vmatpush2.msra.mxu0 0.0
  %944 = vmatprep.subr.mxu0 0.0
  %945 = vmatpush2.msra.mxu0 0.0
  %946 = vmatprep.subr.mxu0 0.0
  %947 = vmatpush2.msra.mxu0 0.0
  %948 = vmatprep.subr.mxu0 0.0
  %949 = vmatpush2.msra.mxu0 0.0
  %950 = vmatprep.subr.mxu0 0.0
  %951 = vmatpush2.msra.mxu0 0.0
  %952 = vmatprep.subr.mxu0 0.0
  %953 = vmatpush2.msra.mxu0 0.0
  %954 = vmatprep.subr.mxu0 0.0
  %955 = vmatpush2.msra.mxu0 0.0
  %956 = vmatprep.subr.mxu0 0.0
  %957 = vmatpush2.msra.mxu0 0.0
  %958 = vmatprep.subr.mxu0 0.0
  %959 = vmatpush2.msra.mxu0 0.0
  %960 = vmatprep.subr.mxu0 0.0
  %961 = vmatpush2.msra.mxu0 0.0
  %962 = vmatprep.subr.mxu0 0.0
  %963 = vmatpush2.msra.mxu0 0.0
  %964 = vmatprep.subr.mxu0 0.0
  %965 = vmatpush2.msra.mxu0 0.0
  %966 = vmatprep.subr.mxu0 0.0
  %967 = vmatpush2.msra.mxu0 0.0
  %968 = vmatprep.subr.mxu0 0.0
  %969 = vmatpush2.msra.mxu0 0.0
  %970 = vmatprep.subr.mxu0 0.0
  %971 = vmatpush2.msra.mxu0 0.0
  %972 = vmatprep.subr.mxu0 0.0
  %973 = vmatpush2.msra.mxu0 0.0
  %974 = vmatprep.mubr.f32.mxu0 0.0
  %975 = vmatmul.mubr.f32.gmra.mxu0 %v902
  %v976 = vpop.f32.mrf.mxu0
  %v977 = vadd.f32 0.0, %v976
  %v978 = vpop.f32.mrf.mxu0
  %979 = vmatprep.mubr.f32.mxu0 0.0
  %980 = vmatmul.mubr.f32.gmra.mxu0 %v905
  %v981 = vpop.f32.mrf.mxu0
  %v982 = vadd.f32 0.0, %v981
  %v983 = vpop.f32.mrf.mxu0
  %984 = vmatprep.mubr.f32.mxu0 0.0
  %985 = vmatmul.mubr.f32.gmra.mxu0 %v908
  %v986 = vpop.f32.mrf.mxu0
  %v987 = vadd.f32 0.0, %v986
  %v988 = vpop.f32.mrf.mxu0
  %989 = vdwg.mxu0
  %v990 = vadd.f32 %v809, %v977
  %v991 = vadd.f32 %v810, %v982
  %v992 = vadd.f32 %v811, %v987
  %s993 = scalar_lea.vmem %s3, 96
  %v994 = vld [vmem:[%s993] sm:$0xff]
  %v995 = vld [vmem:[%s993 + $0x8] sm:$0xff]
  %v996 = vld [vmem:[%s993 + $0x10] sm:$0xff]
  %997 = vmatprep.subr.mxu0 0.0
  %998 = vmatpush1.msra.mxu0 %v275
  %999 = vmatprep.subr.mxu0 0.0
  %1000 = vmatpush1.msra.mxu0 %v274
  %1001 = vmatprep.subr.mxu0 0.0
  %1002 = vmatpush1.msra.mxu0 %v273
  %1003 = vmatprep.subr.mxu0 0.0
  %1004 = vmatpush1.msra.mxu0 %v272
  %1005 = vmatprep.subr.mxu0 0.0
  %1006 = vmatpush1.msra.mxu0 %v271
  %1007 = vmatprep.subr.mxu0 0.0
  %1008 = vmatpush1.msra.mxu0 %v270
  %1009 = vmatprep.subr.mxu0 0.0
  %1010 = vmatpush1.msra.mxu0 %v269
  %1011 = vmatprep.subr.mxu0 0.0
  %1012 = vmatpush1.msra.mxu0 %v268
  %1013 = vmatprep.subr.mxu0 0.0
  %1014 = vmatpush1.msra.mxu0 %v267
  %1015 = vmatprep.subr.mxu0 0.0
  %1016 = vmatpush1.msra.mxu0 %v266
  %1017 = vmatprep.subr.mxu0 0.0
  %1018 = vmatpush1.msra.mxu0 %v265
  %1019 = vmatprep.subr.mxu0 0.0
  %1020 = vmatpush1.msra.mxu0 %v264
  %1021 = vmatprep.subr.mxu0 0.0
  %1022 = vmatpush1.msra.mxu0 %v263
  %1023 = vmatprep.subr.mxu0 0.0
  %1024 = vmatpush1.msra.mxu0 %v262
  %1025 = vmatprep.subr.mxu0 0.0
  %1026 = vmatpush1.msra.mxu0 %v261
  %1027 = vmatprep.subr.mxu0 0.0
  %1028 = vmatpush1.msra.mxu0 %v260
  %1029 = vmatprep.subr.mxu0 0.0
  %1030 = vmatpush2.msra.mxu0 0.0
  %1031 = vmatprep.subr.mxu0 0.0
  %1032 = vmatpush2.msra.mxu0 0.0
  %1033 = vmatprep.subr.mxu0 0.0
  %1034 = vmatpush2.msra.mxu0 0.0
  %1035 = vmatprep.subr.mxu0 0.0
  %1036 = vmatpush2.msra.mxu0 0.0
  %1037 = vmatprep.subr.mxu0 0.0
  %1038 = vmatpush2.msra.mxu0 0.0
  %1039 = vmatprep.subr.mxu0 0.0
  %1040 = vmatpush2.msra.mxu0 0.0
  %1041 = vmatprep.subr.mxu0 0.0
  %1042 = vmatpush2.msra.mxu0 0.0
  %1043 = vmatprep.subr.mxu0 0.0
  %1044 = vmatpush2.msra.mxu0 0.0
  %1045 = vmatprep.subr.mxu0 0.0
  %1046 = vmatpush2.msra.mxu0 0.0
  %1047 = vmatprep.subr.mxu0 0.0
  %1048 = vmatpush2.msra.mxu0 0.0
  %1049 = vmatprep.subr.mxu0 0.0
  %1050 = vmatpush2.msra.mxu0 0.0
  %1051 = vmatprep.subr.mxu0 0.0
  %1052 = vmatpush2.msra.mxu0 0.0
  %1053 = vmatprep.subr.mxu0 0.0
  %1054 = vmatpush2.msra.mxu0 0.0
  %1055 = vmatprep.subr.mxu0 0.0
  %1056 = vmatpush2.msra.mxu0 0.0
  %1057 = vmatprep.subr.mxu0 0.0
  %1058 = vmatpush2.msra.mxu0 0.0
  %1059 = vmatprep.subr.mxu0 0.0
  %1060 = vmatpush2.msra.mxu0 0.0
  %1061 = vmatprep.mubr.f32.mxu0 0.0
  %1062 = vmatmul.mubr.f32.gmra.mxu0 %v994
  %v1063 = vpop.f32.mrf.mxu0
  %v1064 = vadd.f32 0.0, %v1063
  %v1065 = vpop.f32.mrf.mxu0
  %1066 = vmatprep.mubr.f32.mxu0 0.0
  %1067 = vmatmul.mubr.f32.gmra.mxu0 %v995
  %v1068 = vpop.f32.mrf.mxu0
  %v1069 = vadd.f32 0.0, %v1068
  %v1070 = vpop.f32.mrf.mxu0
  %1071 = vmatprep.mubr.f32.mxu0 0.0
  %1072 = vmatmul.mubr.f32.gmra.mxu0 %v996
  %v1073 = vpop.f32.mrf.mxu0
  %v1074 = vadd.f32 0.0, %v1073
  %v1075 = vpop.f32.mrf.mxu0
  %1076 = vdwg.mxu0
  %s1077 = scalar_lea.vmem %s4, 128
  %v1078 = vld [vmem:[%s1077] sm:$0xff]
  %v1079 = vld [vmem:[%s1077 + $0x8] sm:$0xff]
  %v1080 = vld [vmem:[%s1077 + $0x10] sm:$0xff]
  %v1081 = vld [vmem:[%s1077 + $0x18] sm:$0xff]
  %v1083 = vsel %vm452, %v1064, 0
  %v1086 = vsel %vm452, %v1069, 0
  %v1089 = vsel %vm452, %v1074, 0
  %1091 = vmatprep.subr.mxu0 0.0
  %1092 = vmatpush1.msra.mxu0 0.0
  %1093 = vmatprep.subr.mxu0 0.0
  %1094 = vmatpush1.msra.mxu0 0.0
  %1095 = vmatprep.subr.mxu0 0.0
  %1096 = vmatpush1.msra.mxu0 0.0
  %1097 = vmatprep.subr.mxu0 0.0
  %1098 = vmatpush1.msra.mxu0 0.0
  %1099 = vmatprep.subr.mxu0 0.0
  %1100 = vmatpush1.msra.mxu0 0.0
  %1101 = vmatprep.subr.mxu0 0.0
  %1102 = vmatpush1.msra.mxu0 0.0
  %1103 = vmatprep.subr.mxu0 0.0
  %1104 = vmatpush1.msra.mxu0 0.0
  %1105 = vmatprep.subr.mxu0 0.0
  %1106 = vmatpush1.msra.mxu0 0.0
  %1107 = vmatprep.subr.mxu0 0.0
  %1108 = vmatpush1.msra.mxu0 0.0
  %1109 = vmatprep.subr.mxu0 0.0
  %1110 = vmatpush1.msra.mxu0 0.0
  %1111 = vmatprep.subr.mxu0 0.0
  %1112 = vmatpush1.msra.mxu0 0.0
  %1113 = vmatprep.subr.mxu0 0.0
  %1114 = vmatpush1.msra.mxu0 0.0
  %1115 = vmatprep.subr.mxu0 0.0
  %1116 = vmatpush1.msra.mxu0 %v1081
  %1117 = vmatprep.subr.mxu0 0.0
  %1118 = vmatpush1.msra.mxu0 %v1080
  %1119 = vmatprep.subr.mxu0 0.0
  %1120 = vmatpush1.msra.mxu0 %v1079
  %1121 = vmatprep.subr.mxu0 0.0
  %1122 = vmatpush1.msra.mxu0 %v1078
  %1123 = vmatprep.subr.mxu0 0.0
  %1124 = vmatpush2.msra.mxu0 0.0
  %1125 = vmatprep.subr.mxu0 0.0
  %1126 = vmatpush2.msra.mxu0 0.0
  %1127 = vmatprep.subr.mxu0 0.0
  %1128 = vmatpush2.msra.mxu0 0.0
  %1129 = vmatprep.subr.mxu0 0.0
  %1130 = vmatpush2.msra.mxu0 0.0
  %1131 = vmatprep.subr.mxu0 0.0
  %1132 = vmatpush2.msra.mxu0 0.0
  %1133 = vmatprep.subr.mxu0 0.0
  %1134 = vmatpush2.msra.mxu0 0.0
  %1135 = vmatprep.subr.mxu0 0.0
  %1136 = vmatpush2.msra.mxu0 0.0
  %1137 = vmatprep.subr.mxu0 0.0
  %1138 = vmatpush2.msra.mxu0 0.0
  %1139 = vmatprep.subr.mxu0 0.0
  %1140 = vmatpush2.msra.mxu0 0.0
  %1141 = vmatprep.subr.mxu0 0.0
  %1142 = vmatpush2.msra.mxu0 0.0
  %1143 = vmatprep.subr.mxu0 0.0
  %1144 = vmatpush2.msra.mxu0 0.0
  %1145 = vmatprep.subr.mxu0 0.0
  %1146 = vmatpush2.msra.mxu0 0.0
  %1147 = vmatprep.subr.mxu0 0.0
  %1148 = vmatpush2.msra.mxu0 0.0
  %1149 = vmatprep.subr.mxu0 0.0
  %1150 = vmatpush2.msra.mxu0 0.0
  %1151 = vmatprep.subr.mxu0 0.0
  %1152 = vmatpush2.msra.mxu0 0.0
  %1153 = vmatprep.subr.mxu0 0.0
  %1154 = vmatpush2.msra.mxu0 0.0
  %1155 = vmatprep.mubr.f32.mxu0 0.0
  %1156 = vmatmul.mubr.f32.gmra.mxu0 %v1083
  %v1157 = vpop.f32.mrf.mxu0
  %v1158 = vadd.f32 0.0, %v1157
  %v1159 = vpop.f32.mrf.mxu0
  %1160 = vmatprep.mubr.f32.mxu0 0.0
  %1161 = vmatmul.mubr.f32.gmra.mxu0 %v1086
  %v1162 = vpop.f32.mrf.mxu0
  %v1163 = vadd.f32 0.0, %v1162
  %v1164 = vpop.f32.mrf.mxu0
  %1165 = vmatprep.mubr.f32.mxu0 0.0
  %1166 = vmatmul.mubr.f32.gmra.mxu0 %v1089
  %v1167 = vpop.f32.mrf.mxu0
  %v1168 = vadd.f32 0.0, %v1167
  %v1169 = vpop.f32.mrf.mxu0
  %1170 = vdwg.mxu0
  %v1171 = vadd.f32 %v990, %v1158
  %v1172 = vadd.f32 %v991, %v1163
  %v1173 = vadd.f32 %v992, %v1168
  %s1174 = scalar_lea.vmem %s3, 120
  %v1175 = vld [vmem:[%s1174] sm:$0xff]
  %v1176 = vld [vmem:[%s1174 + $0x8] sm:$0xff]
  %v1177 = vld [vmem:[%s1174 + $0x10] sm:$0xff]
  %1178 = vmatprep.subr.mxu0 0.0
  %1179 = vmatpush1.msra.mxu0 %v275
  %1180 = vmatprep.subr.mxu0 0.0
  %1181 = vmatpush1.msra.mxu0 %v274
  %1182 = vmatprep.subr.mxu0 0.0
  %1183 = vmatpush1.msra.mxu0 %v273
  %1184 = vmatprep.subr.mxu0 0.0
  %1185 = vmatpush1.msra.mxu0 %v272
  %1186 = vmatprep.subr.mxu0 0.0
  %1187 = vmatpush1.msra.mxu0 %v271
  %1188 = vmatprep.subr.mxu0 0.0
  %1189 = vmatpush1.msra.mxu0 %v270
  %1190 = vmatprep.subr.mxu0 0.0
  %1191 = vmatpush1.msra.mxu0 %v269
  %1192 = vmatprep.subr.mxu0 0.0
  %1193 = vmatpush1.msra.mxu0 %v268
  %1194 = vmatprep.subr.mxu0 0.0
  %1195 = vmatpush1.msra.mxu0 %v267
  %1196 = vmatprep.subr.mxu0 0.0
  %1197 = vmatpush1.msra.mxu0 %v266
  %1198 = vmatprep.subr.mxu0 0.0
  %1199 = vmatpush1.msra.mxu0 %v265
  %1200 = vmatprep.subr.mxu0 0.0
  %1201 = vmatpush1.msra.mxu0 %v264
  %1202 = vmatprep.subr.mxu0 0.0
  %1203 = vmatpush1.msra.mxu0 %v263
  %1204 = vmatprep.subr.mxu0 0.0
  %1205 = vmatpush1.msra.mxu0 %v262
  %1206 = vmatprep.subr.mxu0 0.0
  %1207 = vmatpush1.msra.mxu0 %v261
  %1208 = vmatprep.subr.mxu0 0.0
  %1209 = vmatpush1.msra.mxu0 %v260
  %1210 = vmatprep.subr.mxu0 0.0
  %1211 = vmatpush2.msra.mxu0 0.0
  %1212 = vmatprep.subr.mxu0 0.0
  %1213 = vmatpush2.msra.mxu0 0.0
  %1214 = vmatprep.subr.mxu0 0.0
  %1215 = vmatpush2.msra.mxu0 0.0
  %1216 = vmatprep.subr.mxu0 0.0
  %1217 = vmatpush2.msra.mxu0 0.0
  %1218 = vmatprep.subr.mxu0 0.0
  %1219 = vmatpush2.msra.mxu0 0.0
  %1220 = vmatprep.subr.mxu0 0.0
  %1221 = vmatpush2.msra.mxu0 0.0
  %1222 = vmatprep.subr.mxu0 0.0
  %1223 = vmatpush2.msra.mxu0 0.0
  %1224 = vmatprep.subr.mxu0 0.0
  %1225 = vmatpush2.msra.mxu0 0.0
  %1226 = vmatprep.subr.mxu0 0.0
  %1227 = vmatpush2.msra.mxu0 0.0
  %1228 = vmatprep.subr.mxu0 0.0
  %1229 = vmatpush2.msra.mxu0 0.0
  %1230 = vmatprep.subr.mxu0 0.0
  %1231 = vmatpush2.msra.mxu0 0.0
  %1232 = vmatprep.subr.mxu0 0.0
  %1233 = vmatpush2.msra.mxu0 0.0
  %1234 = vmatprep.subr.mxu0 0.0
  %1235 = vmatpush2.msra.mxu0 0.0
  %1236 = vmatprep.subr.mxu0 0.0
  %1237 = vmatpush2.msra.mxu0 0.0
  %1238 = vmatprep.subr.mxu0 0.0
  %1239 = vmatpush2.msra.mxu0 0.0
  %1240 = vmatprep.subr.mxu0 0.0
  %1241 = vmatpush2.msra.mxu0 0.0
  %1242 = vmatprep.mubr.f32.mxu0 0.0
  %1243 = vmatmul.mubr.f32.gmra.mxu0 %v1175
  %v1244 = vpop.f32.mrf.mxu0
  %v1245 = vadd.f32 0.0, %v1244
  %v1246 = vpop.f32.mrf.mxu0
  %1247 = vmatprep.mubr.f32.mxu0 0.0
  %1248 = vmatmul.mubr.f32.gmra.mxu0 %v1176
  %v1249 = vpop.f32.mrf.mxu0
  %v1250 = vadd.f32 0.0, %v1249
  %v1251 = vpop.f32.mrf.mxu0
  %1252 = vmatprep.mubr.f32.mxu0 0.0
  %1253 = vmatmul.mubr.f32.gmra.mxu0 %v1177
  %v1254 = vpop.f32.mrf.mxu0
  %v1255 = vadd.f32 0.0, %v1254
  %v1256 = vpop.f32.mrf.mxu0
  %1257 = vdwg.mxu0
  %s1258 = scalar_lea.vmem %s4, 160
  %v1259 = vld [vmem:[%s1258] sm:$0xff]
  %v1260 = vld [vmem:[%s1258 + $0x8] sm:$0xff]
  %v1261 = vld [vmem:[%s1258 + $0x10] sm:$0xff]
  %v1262 = vld [vmem:[%s1258 + $0x18] sm:$0xff]
  %v1264 = vsel %vm452, %v1245, 0
  %v1267 = vsel %vm452, %v1250, 0
  %v1270 = vsel %vm452, %v1255, 0
  %1272 = vmatprep.subr.mxu0 0.0
  %1273 = vmatpush1.msra.mxu0 0.0
  %1274 = vmatprep.subr.mxu0 0.0
  %1275 = vmatpush1.msra.mxu0 0.0
  %1276 = vmatprep.subr.mxu0 0.0
  %1277 = vmatpush1.msra.mxu0 0.0
  %1278 = vmatprep.subr.mxu0 0.0
  %1279 = vmatpush1.msra.mxu0 0.0
  %1280 = vmatprep.subr.mxu0 0.0
  %1281 = vmatpush1.msra.mxu0 0.0
  %1282 = vmatprep.subr.mxu0 0.0
  %1283 = vmatpush1.msra.mxu0 0.0
  %1284 = vmatprep.subr.mxu0 0.0
  %1285 = vmatpush1.msra.mxu0 0.0
  %1286 = vmatprep.subr.mxu0 0.0
  %1287 = vmatpush1.msra.mxu0 0.0
  %1288 = vmatprep.subr.mxu0 0.0
  %1289 = vmatpush1.msra.mxu0 0.0
  %1290 = vmatprep.subr.mxu0 0.0
  %1291 = vmatpush1.msra.mxu0 0.0
  %1292 = vmatprep.subr.mxu0 0.0
  %1293 = vmatpush1.msra.mxu0 0.0
  %1294 = vmatprep.subr.mxu0 0.0
  %1295 = vmatpush1.msra.mxu0 0.0
  %1296 = vmatprep.subr.mxu0 0.0
  %1297 = vmatpush1.msra.mxu0 %v1262
  %1298 = vmatprep.subr.mxu0 0.0
  %1299 = vmatpush1.msra.mxu0 %v1261
  %1300 = vmatprep.subr.mxu0 0.0
  %1301 = vmatpush1.msra.mxu0 %v1260
  %1302 = vmatprep.subr.mxu0 0.0
  %1303 = vmatpush1.msra.mxu0 %v1259
  %1304 = vmatprep.subr.mxu0 0.0
  %1305 = vmatpush2.msra.mxu0 0.0
  %1306 = vmatprep.subr.mxu0 0.0
  %1307 = vmatpush2.msra.mxu0 0.0
  %1308 = vmatprep.subr.mxu0 0.0
  %1309 = vmatpush2.msra.mxu0 0.0
  %1310 = vmatprep.subr.mxu0 0.0
  %1311 = vmatpush2.msra.mxu0 0.0
  %1312 = vmatprep.subr.mxu0 0.0
  %1313 = vmatpush2.msra.mxu0 0.0
  %1314 = vmatprep.subr.mxu0 0.0
  %1315 = vmatpush2.msra.mxu0 0.0
  %1316 = vmatprep.subr.mxu0 0.0
  %1317 = vmatpush2.msra.mxu0 0.0
  %1318 = vmatprep.subr.mxu0 0.0
  %1319 = vmatpush2.msra.mxu0 0.0
  %1320 = vmatprep.subr.mxu0 0.0
  %1321 = vmatpush2.msra.mxu0 0.0
  %1322 = vmatprep.subr.mxu0 0.0
  %1323 = vmatpush2.msra.mxu0 0.0
  %1324 = vmatprep.subr.mxu0 0.0
  %1325 = vmatpush2.msra.mxu0 0.0
  %1326 = vmatprep.subr.mxu0 0.0
  %1327 = vmatpush2.msra.mxu0 0.0
  %1328 = vmatprep.subr.mxu0 0.0
  %1329 = vmatpush2.msra.mxu0 0.0
  %1330 = vmatprep.subr.mxu0 0.0
  %1331 = vmatpush2.msra.mxu0 0.0
  %1332 = vmatprep.subr.mxu0 0.0
  %1333 = vmatpush2.msra.mxu0 0.0
  %1334 = vmatprep.subr.mxu0 0.0
  %1335 = vmatpush2.msra.mxu0 0.0
  %1336 = vmatprep.mubr.f32.mxu0 0.0
  %1337 = vmatmul.mubr.f32.gmra.mxu0 %v1264
  %v1338 = vpop.f32.mrf.mxu0
  %v1339 = vadd.f32 0.0, %v1338
  %v1340 = vpop.f32.mrf.mxu0
  %1341 = vmatprep.mubr.f32.mxu0 0.0
  %1342 = vmatmul.mubr.f32.gmra.mxu0 %v1267
  %v1343 = vpop.f32.mrf.mxu0
  %v1344 = vadd.f32 0.0, %v1343
  %v1345 = vpop.f32.mrf.mxu0
  %1346 = vmatprep.mubr.f32.mxu0 0.0
  %1347 = vmatmul.mubr.f32.gmra.mxu0 %v1270
  %v1348 = vpop.f32.mrf.mxu0
  %v1349 = vadd.f32 0.0, %v1348
  %v1350 = vpop.f32.mrf.mxu0
  %1351 = vdwg.mxu0
  %v1352 = vadd.f32 %v1171, %v1339
  %v1353 = vadd.f32 %v1172, %v1344
  %v1354 = vadd.f32 %v1173, %v1349
  %s1355 = scalar_lea.vmem %s3, 144
  %v1356 = vld [vmem:[%s1355] sm:$0xff]
  %v1357 = vld [vmem:[%s1355 + $0x8] sm:$0xff]
  %v1358 = vld [vmem:[%s1355 + $0x10] sm:$0xff]
  %1359 = vmatprep.subr.mxu0 0.0
  %1360 = vmatpush1.msra.mxu0 %v275
  %1361 = vmatprep.subr.mxu0 0.0
  %1362 = vmatpush1.msra.mxu0 %v274
  %1363 = vmatprep.subr.mxu0 0.0
  %1364 = vmatpush1.msra.mxu0 %v273
  %1365 = vmatprep.subr.mxu0 0.0
  %1366 = vmatpush1.msra.mxu0 %v272
  %1367 = vmatprep.subr.mxu0 0.0
  %1368 = vmatpush1.msra.mxu0 %v271
  %1369 = vmatprep.subr.mxu0 0.0
  %1370 = vmatpush1.msra.mxu0 %v270
  %1371 = vmatprep.subr.mxu0 0.0
  %1372 = vmatpush1.msra.mxu0 %v269
  %1373 = vmatprep.subr.mxu0 0.0
  %1374 = vmatpush1.msra.mxu0 %v268
  %1375 = vmatprep.subr.mxu0 0.0
  %1376 = vmatpush1.msra.mxu0 %v267
  %1377 = vmatprep.subr.mxu0 0.0
  %1378 = vmatpush1.msra.mxu0 %v266
  %1379 = vmatprep.subr.mxu0 0.0
  %1380 = vmatpush1.msra.mxu0 %v265
  %1381 = vmatprep.subr.mxu0 0.0
  %1382 = vmatpush1.msra.mxu0 %v264
  %1383 = vmatprep.subr.mxu0 0.0
  %1384 = vmatpush1.msra.mxu0 %v263
  %1385 = vmatprep.subr.mxu0 0.0
  %1386 = vmatpush1.msra.mxu0 %v262
  %1387 = vmatprep.subr.mxu0 0.0
  %1388 = vmatpush1.msra.mxu0 %v261
  %1389 = vmatprep.subr.mxu0 0.0
  %1390 = vmatpush1.msra.mxu0 %v260
  %1391 = vmatprep.subr.mxu0 0.0
  %1392 = vmatpush2.msra.mxu0 0.0
  %1393 = vmatprep.subr.mxu0 0.0
  %1394 = vmatpush2.msra.mxu0 0.0
  %1395 = vmatprep.subr.mxu0 0.0
  %1396 = vmatpush2.msra.mxu0 0.0
  %1397 = vmatprep.subr.mxu0 0.0
  %1398 = vmatpush2.msra.mxu0 0.0
  %1399 = vmatprep.subr.mxu0 0.0
  %1400 = vmatpush2.msra.mxu0 0.0
  %1401 = vmatprep.subr.mxu0 0.0
  %1402 = vmatpush2.msra.mxu0 0.0
  %1403 = vmatprep.subr.mxu0 0.0
  %1404 = vmatpush2.msra.mxu0 0.0
  %1405 = vmatprep.subr.mxu0 0.0
  %1406 = vmatpush2.msra.mxu0 0.0
  %1407 = vmatprep.subr.mxu0 0.0
  %1408 = vmatpush2.msra.mxu0 0.0
  %1409 = vmatprep.subr.mxu0 0.0
  %1410 = vmatpush2.msra.mxu0 0.0
  %1411 = vmatprep.subr.mxu0 0.0
  %1412 = vmatpush2.msra.mxu0 0.0
  %1413 = vmatprep.subr.mxu0 0.0
  %1414 = vmatpush2.msra.mxu0 0.0
  %1415 = vmatprep.subr.mxu0 0.0
  %1416 = vmatpush2.msra.mxu0 0.0
  %1417 = vmatprep.subr.mxu0 0.0
  %1418 = vmatpush2.msra.mxu0 0.0
  %1419 = vmatprep.subr.mxu0 0.0
  %1420 = vmatpush2.msra.mxu0 0.0
  %1421 = vmatprep.subr.mxu0 0.0
  %1422 = vmatpush2.msra.mxu0 0.0
  %1423 = vmatprep.mubr.f32.mxu0 0.0
  %1424 = vmatmul.mubr.f32.gmra.mxu0 %v1356
  %v1425 = vpop.f32.mrf.mxu0
  %v1426 = vadd.f32 0.0, %v1425
  %v1427 = vpop.f32.mrf.mxu0
  %1428 = vmatprep.mubr.f32.mxu0 0.0
  %1429 = vmatmul.mubr.f32.gmra.mxu0 %v1357
  %v1430 = vpop.f32.mrf.mxu0
  %v1431 = vadd.f32 0.0, %v1430
  %v1432 = vpop.f32.mrf.mxu0
  %1433 = vmatprep.mubr.f32.mxu0 0.0
  %1434 = vmatmul.mubr.f32.gmra.mxu0 %v1358
  %v1435 = vpop.f32.mrf.mxu0
  %v1436 = vadd.f32 0.0, %v1435
  %v1437 = vpop.f32.mrf.mxu0
  %1438 = vdwg.mxu0
  %s1439 = scalar_lea.vmem %s4, 192
  %v1440 = vld [vmem:[%s1439] sm:$0xff]
  %v1441 = vld [vmem:[%s1439 + $0x8] sm:$0xff]
  %v1442 = vld [vmem:[%s1439 + $0x10] sm:$0xff]
  %v1443 = vld [vmem:[%s1439 + $0x18] sm:$0xff]
  %v1445 = vsel %vm452, %v1426, 0
  %v1448 = vsel %vm452, %v1431, 0
  %v1451 = vsel %vm452, %v1436, 0
  %1453 = vmatprep.subr.mxu0 0.0
  %1454 = vmatpush1.msra.mxu0 0.0
  %1455 = vmatprep.subr.mxu0 0.0
  %1456 = vmatpush1.msra.mxu0 0.0
  %1457 = vmatprep.subr.mxu0 0.0
  %1458 = vmatpush1.msra.mxu0 0.0
  %1459 = vmatprep.subr.mxu0 0.0
  %1460 = vmatpush1.msra.mxu0 0.0
  %1461 = vmatprep.subr.mxu0 0.0
  %1462 = vmatpush1.msra.mxu0 0.0
  %1463 = vmatprep.subr.mxu0 0.0
  %1464 = vmatpush1.msra.mxu0 0.0
  %1465 = vmatprep.subr.mxu0 0.0
  %1466 = vmatpush1.msra.mxu0 0.0
  %1467 = vmatprep.subr.mxu0 0.0
  %1468 = vmatpush1.msra.mxu0 0.0
  %1469 = vmatprep.subr.mxu0 0.0
  %1470 = vmatpush1.msra.mxu0 0.0
  %1471 = vmatprep.subr.mxu0 0.0
  %1472 = vmatpush1.msra.mxu0 0.0
  %1473 = vmatprep.subr.mxu0 0.0
  %1474 = vmatpush1.msra.mxu0 0.0
  %1475 = vmatprep.subr.mxu0 0.0
  %1476 = vmatpush1.msra.mxu0 0.0
  %1477 = vmatprep.subr.mxu0 0.0
  %1478 = vmatpush1.msra.mxu0 %v1443
  %1479 = vmatprep.subr.mxu0 0.0
  %1480 = vmatpush1.msra.mxu0 %v1442
  %1481 = vmatprep.subr.mxu0 0.0
  %1482 = vmatpush1.msra.mxu0 %v1441
  %1483 = vmatprep.subr.mxu0 0.0
  %1484 = vmatpush1.msra.mxu0 %v1440
  %1485 = vmatprep.subr.mxu0 0.0
  %1486 = vmatpush2.msra.mxu0 0.0
  %1487 = vmatprep.subr.mxu0 0.0
  %1488 = vmatpush2.msra.mxu0 0.0
  %1489 = vmatprep.subr.mxu0 0.0
  %1490 = vmatpush2.msra.mxu0 0.0
  %1491 = vmatprep.subr.mxu0 0.0
  %1492 = vmatpush2.msra.mxu0 0.0
  %1493 = vmatprep.subr.mxu0 0.0
  %1494 = vmatpush2.msra.mxu0 0.0
  %1495 = vmatprep.subr.mxu0 0.0
  %1496 = vmatpush2.msra.mxu0 0.0
  %1497 = vmatprep.subr.mxu0 0.0
  %1498 = vmatpush2.msra.mxu0 0.0
  %1499 = vmatprep.subr.mxu0 0.0
  %1500 = vmatpush2.msra.mxu0 0.0
  %1501 = vmatprep.subr.mxu0 0.0
  %1502 = vmatpush2.msra.mxu0 0.0
  %1503 = vmatprep.subr.mxu0 0.0
  %1504 = vmatpush2.msra.mxu0 0.0
  %1505 = vmatprep.subr.mxu0 0.0
  %1506 = vmatpush2.msra.mxu0 0.0
  %1507 = vmatprep.subr.mxu0 0.0
  %1508 = vmatpush2.msra.mxu0 0.0
  %1509 = vmatprep.subr.mxu0 0.0
  %1510 = vmatpush2.msra.mxu0 0.0
  %1511 = vmatprep.subr.mxu0 0.0
  %1512 = vmatpush2.msra.mxu0 0.0
  %1513 = vmatprep.subr.mxu0 0.0
  %1514 = vmatpush2.msra.mxu0 0.0
  %1515 = vmatprep.subr.mxu0 0.0
  %1516 = vmatpush2.msra.mxu0 0.0
  %1517 = vmatprep.mubr.f32.mxu0 0.0
  %1518 = vmatmul.mubr.f32.gmra.mxu0 %v1445
  %v1519 = vpop.f32.mrf.mxu0
  %v1520 = vadd.f32 0.0, %v1519
  %v1521 = vpop.f32.mrf.mxu0
  %1522 = vmatprep.mubr.f32.mxu0 0.0
  %1523 = vmatmul.mubr.f32.gmra.mxu0 %v1448
  %v1524 = vpop.f32.mrf.mxu0
  %v1525 = vadd.f32 0.0, %v1524
  %v1526 = vpop.f32.mrf.mxu0
  %1527 = vmatprep.mubr.f32.mxu0 0.0
  %1528 = vmatmul.mubr.f32.gmra.mxu0 %v1451
  %v1529 = vpop.f32.mrf.mxu0
  %v1530 = vadd.f32 0.0, %v1529
  %v1531 = vpop.f32.mrf.mxu0
  %1532 = vdwg.mxu0
  %v1533 = vadd.f32 %v1352, %v1520
  %v1534 = vadd.f32 %v1353, %v1525
  %v1535 = vadd.f32 %v1354, %v1530
  %s1536 = scalar_lea.vmem %s3, 168
  %v1537 = vld [vmem:[%s1536] sm:$0xff]
  %v1538 = vld [vmem:[%s1536 + $0x8] sm:$0xff]
  %v1539 = vld [vmem:[%s1536 + $0x10] sm:$0xff]
  %1540 = vmatprep.subr.mxu0 0.0
  %1541 = vmatpush1.msra.mxu0 %v275
  %1542 = vmatprep.subr.mxu0 0.0
  %1543 = vmatpush1.msra.mxu0 %v274
  %1544 = vmatprep.subr.mxu0 0.0
  %1545 = vmatpush1.msra.mxu0 %v273
  %1546 = vmatprep.subr.mxu0 0.0
  %1547 = vmatpush1.msra.mxu0 %v272
  %1548 = vmatprep.subr.mxu0 0.0
  %1549 = vmatpush1.msra.mxu0 %v271
  %1550 = vmatprep.subr.mxu0 0.0
  %1551 = vmatpush1.msra.mxu0 %v270
  %1552 = vmatprep.subr.mxu0 0.0
  %1553 = vmatpush1.msra.mxu0 %v269
  %1554 = vmatprep.subr.mxu0 0.0
  %1555 = vmatpush1.msra.mxu0 %v268
  %1556 = vmatprep.subr.mxu0 0.0
  %1557 = vmatpush1.msra.mxu0 %v267
  %1558 = vmatprep.subr.mxu0 0.0
  %1559 = vmatpush1.msra.mxu0 %v266
  %1560 = vmatprep.subr.mxu0 0.0
  %1561 = vmatpush1.msra.mxu0 %v265
  %1562 = vmatprep.subr.mxu0 0.0
  %1563 = vmatpush1.msra.mxu0 %v264
  %1564 = vmatprep.subr.mxu0 0.0
  %1565 = vmatpush1.msra.mxu0 %v263
  %1566 = vmatprep.subr.mxu0 0.0
  %1567 = vmatpush1.msra.mxu0 %v262
  %1568 = vmatprep.subr.mxu0 0.0
  %1569 = vmatpush1.msra.mxu0 %v261
  %1570 = vmatprep.subr.mxu0 0.0
  %1571 = vmatpush1.msra.mxu0 %v260
  %1572 = vmatprep.subr.mxu0 0.0
  %1573 = vmatpush2.msra.mxu0 0.0
  %1574 = vmatprep.subr.mxu0 0.0
  %1575 = vmatpush2.msra.mxu0 0.0
  %1576 = vmatprep.subr.mxu0 0.0
  %1577 = vmatpush2.msra.mxu0 0.0
  %1578 = vmatprep.subr.mxu0 0.0
  %1579 = vmatpush2.msra.mxu0 0.0
  %1580 = vmatprep.subr.mxu0 0.0
  %1581 = vmatpush2.msra.mxu0 0.0
  %1582 = vmatprep.subr.mxu0 0.0
  %1583 = vmatpush2.msra.mxu0 0.0
  %1584 = vmatprep.subr.mxu0 0.0
  %1585 = vmatpush2.msra.mxu0 0.0
  %1586 = vmatprep.subr.mxu0 0.0
  %1587 = vmatpush2.msra.mxu0 0.0
  %1588 = vmatprep.subr.mxu0 0.0
  %1589 = vmatpush2.msra.mxu0 0.0
  %1590 = vmatprep.subr.mxu0 0.0
  %1591 = vmatpush2.msra.mxu0 0.0
  %1592 = vmatprep.subr.mxu0 0.0
  %1593 = vmatpush2.msra.mxu0 0.0
  %1594 = vmatprep.subr.mxu0 0.0
  %1595 = vmatpush2.msra.mxu0 0.0
  %1596 = vmatprep.subr.mxu0 0.0
  %1597 = vmatpush2.msra.mxu0 0.0
  %1598 = vmatprep.subr.mxu0 0.0
  %1599 = vmatpush2.msra.mxu0 0.0
  %1600 = vmatprep.subr.mxu0 0.0
  %1601 = vmatpush2.msra.mxu0 0.0
  %1602 = vmatprep.subr.mxu0 0.0
  %1603 = vmatpush2.msra.mxu0 0.0
  %1604 = vmatprep.mubr.f32.mxu0 0.0
  %1605 = vmatmul.mubr.f32.gmra.mxu0 %v1537
  %v1606 = vpop.f32.mrf.mxu0
  %v1607 = vadd.f32 0.0, %v1606
  %v1608 = vpop.f32.mrf.mxu0
  %1609 = vmatprep.mubr.f32.mxu0 0.0
  %1610 = vmatmul.mubr.f32.gmra.mxu0 %v1538
  %v1611 = vpop.f32.mrf.mxu0
  %v1612 = vadd.f32 0.0, %v1611
  %v1613 = vpop.f32.mrf.mxu0
  %1614 = vmatprep.mubr.f32.mxu0 0.0
  %1615 = vmatmul.mubr.f32.gmra.mxu0 %v1539
  %v1616 = vpop.f32.mrf.mxu0
  %v1617 = vadd.f32 0.0, %v1616
  %v1618 = vpop.f32.mrf.mxu0
  %1619 = vdwg.mxu0
  %s1620 = scalar_lea.vmem %s4, 224
  %v1621 = vld [vmem:[%s1620] sm:$0xff]
  %v1622 = vld [vmem:[%s1620 + $0x8] sm:$0xff]
  %v1623 = vld [vmem:[%s1620 + $0x10] sm:$0xff]
  %v1624 = vld [vmem:[%s1620 + $0x18] sm:$0xff]
  %v1626 = vsel %vm452, %v1607, 0
  %v1629 = vsel %vm452, %v1612, 0
  %v1632 = vsel %vm452, %v1617, 0
  %1634 = vmatprep.subr.mxu0 0.0
  %1635 = vmatpush1.msra.mxu0 0.0
  %1636 = vmatprep.subr.mxu0 0.0
  %1637 = vmatpush1.msra.mxu0 0.0
  %1638 = vmatprep.subr.mxu0 0.0
  %1639 = vmatpush1.msra.mxu0 0.0
  %1640 = vmatprep.subr.mxu0 0.0
  %1641 = vmatpush1.msra.mxu0 0.0
  %1642 = vmatprep.subr.mxu0 0.0
  %1643 = vmatpush1.msra.mxu0 0.0
  %1644 = vmatprep.subr.mxu0 0.0
  %1645 = vmatpush1.msra.mxu0 0.0
  %1646 = vmatprep.subr.mxu0 0.0
  %1647 = vmatpush1.msra.mxu0 0.0
  %1648 = vmatprep.subr.mxu0 0.0
  %1649 = vmatpush1.msra.mxu0 0.0
  %1650 = vmatprep.subr.mxu0 0.0
  %1651 = vmatpush1.msra.mxu0 0.0
  %1652 = vmatprep.subr.mxu0 0.0
  %1653 = vmatpush1.msra.mxu0 0.0
  %1654 = vmatprep.subr.mxu0 0.0
  %1655 = vmatpush1.msra.mxu0 0.0
  %1656 = vmatprep.subr.mxu0 0.0
  %1657 = vmatpush1.msra.mxu0 0.0
  %1658 = vmatprep.subr.mxu0 0.0
  %1659 = vmatpush1.msra.mxu0 %v1624
  %1660 = vmatprep.subr.mxu0 0.0
  %1661 = vmatpush1.msra.mxu0 %v1623
  %1662 = vmatprep.subr.mxu0 0.0
  %1663 = vmatpush1.msra.mxu0 %v1622
  %1664 = vmatprep.subr.mxu0 0.0
  %1665 = vmatpush1.msra.mxu0 %v1621
  %1666 = vmatprep.subr.mxu0 0.0
  %1667 = vmatpush2.msra.mxu0 0.0
  %1668 = vmatprep.subr.mxu0 0.0
  %1669 = vmatpush2.msra.mxu0 0.0
  %1670 = vmatprep.subr.mxu0 0.0
  %1671 = vmatpush2.msra.mxu0 0.0
  %1672 = vmatprep.subr.mxu0 0.0
  %1673 = vmatpush2.msra.mxu0 0.0
  %1674 = vmatprep.subr.mxu0 0.0
  %1675 = vmatpush2.msra.mxu0 0.0
  %1676 = vmatprep.subr.mxu0 0.0
  %1677 = vmatpush2.msra.mxu0 0.0
  %1678 = vmatprep.subr.mxu0 0.0
  %1679 = vmatpush2.msra.mxu0 0.0
  %1680 = vmatprep.subr.mxu0 0.0
  %1681 = vmatpush2.msra.mxu0 0.0
  %1682 = vmatprep.subr.mxu0 0.0
  %1683 = vmatpush2.msra.mxu0 0.0
  %1684 = vmatprep.subr.mxu0 0.0
  %1685 = vmatpush2.msra.mxu0 0.0
  %1686 = vmatprep.subr.mxu0 0.0
  %1687 = vmatpush2.msra.mxu0 0.0
  %1688 = vmatprep.subr.mxu0 0.0
  %1689 = vmatpush2.msra.mxu0 0.0
  %1690 = vmatprep.subr.mxu0 0.0
  %1691 = vmatpush2.msra.mxu0 0.0
  %1692 = vmatprep.subr.mxu0 0.0
  %1693 = vmatpush2.msra.mxu0 0.0
  %1694 = vmatprep.subr.mxu0 0.0
  %1695 = vmatpush2.msra.mxu0 0.0
  %1696 = vmatprep.subr.mxu0 0.0
  %1697 = vmatpush2.msra.mxu0 0.0
  %1698 = vmatprep.mubr.f32.mxu0 0.0
  %1699 = vmatmul.mubr.f32.gmra.mxu0 %v1626
  %v1700 = vpop.f32.mrf.mxu0
  %v1701 = vadd.f32 0.0, %v1700
  %v1702 = vpop.f32.mrf.mxu0
  %1703 = vmatprep.mubr.f32.mxu0 0.0
  %1704 = vmatmul.mubr.f32.gmra.mxu0 %v1629
  %v1705 = vpop.f32.mrf.mxu0
  %v1706 = vadd.f32 0.0, %v1705
  %v1707 = vpop.f32.mrf.mxu0
  %1708 = vmatprep.mubr.f32.mxu0 0.0
  %1709 = vmatmul.mubr.f32.gmra.mxu0 %v1632
  %v1710 = vpop.f32.mrf.mxu0
  %v1711 = vadd.f32 0.0, %v1710
  %v1712 = vpop.f32.mrf.mxu0
  %1713 = vdwg.mxu0
  %v1714 = vadd.f32 %v1533, %v1701
  %v1715 = vadd.f32 %v1534, %v1706
  %v1716 = vadd.f32 %v1535, %v1711
  %s1717 = scalar_lea.vmem %s3, 192
  %v1718 = vld [vmem:[%s1717] sm:$0xff]
  %v1719 = vld [vmem:[%s1717 + $0x8] sm:$0xff]
  %v1720 = vld [vmem:[%s1717 + $0x10] sm:$0xff]
  %1721 = vmatprep.subr.mxu0 0.0
  %1722 = vmatpush1.msra.mxu0 %v275
  %1723 = vmatprep.subr.mxu0 0.0
  %1724 = vmatpush1.msra.mxu0 %v274
  %1725 = vmatprep.subr.mxu0 0.0
  %1726 = vmatpush1.msra.mxu0 %v273
  %1727 = vmatprep.subr.mxu0 0.0
  %1728 = vmatpush1.msra.mxu0 %v272
  %1729 = vmatprep.subr.mxu0 0.0
  %1730 = vmatpush1.msra.mxu0 %v271
  %1731 = vmatprep.subr.mxu0 0.0
  %1732 = vmatpush1.msra.mxu0 %v270
  %1733 = vmatprep.subr.mxu0 0.0
  %1734 = vmatpush1.msra.mxu0 %v269
  %1735 = vmatprep.subr.mxu0 0.0
  %1736 = vmatpush1.msra.mxu0 %v268
  %1737 = vmatprep.subr.mxu0 0.0
  %1738 = vmatpush1.msra.mxu0 %v267
  %1739 = vmatprep.subr.mxu0 0.0
  %1740 = vmatpush1.msra.mxu0 %v266
  %1741 = vmatprep.subr.mxu0 0.0
  %1742 = vmatpush1.msra.mxu0 %v265
  %1743 = vmatprep.subr.mxu0 0.0
  %1744 = vmatpush1.msra.mxu0 %v264
  %1745 = vmatprep.subr.mxu0 0.0
  %1746 = vmatpush1.msra.mxu0 %v263
  %1747 = vmatprep.subr.mxu0 0.0
  %1748 = vmatpush1.msra.mxu0 %v262
  %1749 = vmatprep.subr.mxu0 0.0
  %1750 = vmatpush1.msra.mxu0 %v261
  %1751 = vmatprep.subr.mxu0 0.0
  %1752 = vmatpush1.msra.mxu0 %v260
  %1753 = vmatprep.subr.mxu0 0.0
  %1754 = vmatpush2.msra.mxu0 0.0
  %1755 = vmatprep.subr.mxu0 0.0
  %1756 = vmatpush2.msra.mxu0 0.0
  %1757 = vmatprep.subr.mxu0 0.0
  %1758 = vmatpush2.msra.mxu0 0.0
  %1759 = vmatprep.subr.mxu0 0.0
  %1760 = vmatpush2.msra.mxu0 0.0
  %1761 = vmatprep.subr.mxu0 0.0
  %1762 = vmatpush2.msra.mxu0 0.0
  %1763 = vmatprep.subr.mxu0 0.0
  %1764 = vmatpush2.msra.mxu0 0.0
  %1765 = vmatprep.subr.mxu0 0.0
  %1766 = vmatpush2.msra.mxu0 0.0
  %1767 = vmatprep.subr.mxu0 0.0
  %1768 = vmatpush2.msra.mxu0 0.0
  %1769 = vmatprep.subr.mxu0 0.0
  %1770 = vmatpush2.msra.mxu0 0.0
  %1771 = vmatprep.subr.mxu0 0.0
  %1772 = vmatpush2.msra.mxu0 0.0
  %1773 = vmatprep.subr.mxu0 0.0
  %1774 = vmatpush2.msra.mxu0 0.0
  %1775 = vmatprep.subr.mxu0 0.0
  %1776 = vmatpush2.msra.mxu0 0.0
  %1777 = vmatprep.subr.mxu0 0.0
  %1778 = vmatpush2.msra.mxu0 0.0
  %1779 = vmatprep.subr.mxu0 0.0
  %1780 = vmatpush2.msra.mxu0 0.0
  %1781 = vmatprep.subr.mxu0 0.0
  %1782 = vmatpush2.msra.mxu0 0.0
  %1783 = vmatprep.subr.mxu0 0.0
  %1784 = vmatpush2.msra.mxu0 0.0
  %1785 = vmatprep.mubr.f32.mxu0 0.0
  %1786 = vmatmul.mubr.f32.gmra.mxu0 %v1718
  %v1787 = vpop.f32.mrf.mxu0
  %v1788 = vadd.f32 0.0, %v1787
  %v1789 = vpop.f32.mrf.mxu0
  %1790 = vmatprep.mubr.f32.mxu0 0.0
  %1791 = vmatmul.mubr.f32.gmra.mxu0 %v1719
  %v1792 = vpop.f32.mrf.mxu0
  %v1793 = vadd.f32 0.0, %v1792
  %v1794 = vpop.f32.mrf.mxu0
  %1795 = vmatprep.mubr.f32.mxu0 0.0
  %1796 = vmatmul.mubr.f32.gmra.mxu0 %v1720
  %v1797 = vpop.f32.mrf.mxu0
  %v1798 = vadd.f32 0.0, %v1797
  %v1799 = vpop.f32.mrf.mxu0
  %1800 = vdwg.mxu0
  %s1801 = scalar_lea.vmem %s4, 256
  %v1802 = vld [vmem:[%s1801] sm:$0xff]
  %v1803 = vld [vmem:[%s1801 + $0x8] sm:$0xff]
  %v1804 = vld [vmem:[%s1801 + $0x10] sm:$0xff]
  %v1805 = vld [vmem:[%s1801 + $0x18] sm:$0xff]
  %v1807 = vsel %vm452, %v1788, 0
  %v1810 = vsel %vm452, %v1793, 0
  %v1813 = vsel %vm452, %v1798, 0
  %1815 = vmatprep.subr.mxu0 0.0
  %1816 = vmatpush1.msra.mxu0 0.0
  %1817 = vmatprep.subr.mxu0 0.0
  %1818 = vmatpush1.msra.mxu0 0.0
  %1819 = vmatprep.subr.mxu0 0.0
  %1820 = vmatpush1.msra.mxu0 0.0
  %1821 = vmatprep.subr.mxu0 0.0
  %1822 = vmatpush1.msra.mxu0 0.0
  %1823 = vmatprep.subr.mxu0 0.0
  %1824 = vmatpush1.msra.mxu0 0.0
  %1825 = vmatprep.subr.mxu0 0.0
  %1826 = vmatpush1.msra.mxu0 0.0
  %1827 = vmatprep.subr.mxu0 0.0
  %1828 = vmatpush1.msra.mxu0 0.0
  %1829 = vmatprep.subr.mxu0 0.0
  %1830 = vmatpush1.msra.mxu0 0.0
  %1831 = vmatprep.subr.mxu0 0.0
  %1832 = vmatpush1.msra.mxu0 0.0
  %1833 = vmatprep.subr.mxu0 0.0
  %1834 = vmatpush1.msra.mxu0 0.0
  %1835 = vmatprep.subr.mxu0 0.0
  %1836 = vmatpush1.msra.mxu0 0.0
  %1837 = vmatprep.subr.mxu0 0.0
  %1838 = vmatpush1.msra.mxu0 0.0
  %1839 = vmatprep.subr.mxu0 0.0
  %1840 = vmatpush1.msra.mxu0 %v1805
  %1841 = vmatprep.subr.mxu0 0.0
  %1842 = vmatpush1.msra.mxu0 %v1804
  %1843 = vmatprep.subr.mxu0 0.0
  %1844 = vmatpush1.msra.mxu0 %v1803
  %1845 = vmatprep.subr.mxu0 0.0
  %1846 = vmatpush1.msra.mxu0 %v1802
  %1847 = vmatprep.subr.mxu0 0.0
  %1848 = vmatpush2.msra.mxu0 0.0
  %1849 = vmatprep.subr.mxu0 0.0
  %1850 = vmatpush2.msra.mxu0 0.0
  %1851 = vmatprep.subr.mxu0 0.0
  %1852 = vmatpush2.msra.mxu0 0.0
  %1853 = vmatprep.subr.mxu0 0.0
  %1854 = vmatpush2.msra.mxu0 0.0
  %1855 = vmatprep.subr.mxu0 0.0
  %1856 = vmatpush2.msra.mxu0 0.0
  %1857 = vmatprep.subr.mxu0 0.0
  %1858 = vmatpush2.msra.mxu0 0.0
  %1859 = vmatprep.subr.mxu0 0.0
  %1860 = vmatpush2.msra.mxu0 0.0
  %1861 = vmatprep.subr.mxu0 0.0
  %1862 = vmatpush2.msra.mxu0 0.0
  %1863 = vmatprep.subr.mxu0 0.0
  %1864 = vmatpush2.msra.mxu0 0.0
  %1865 = vmatprep.subr.mxu0 0.0
  %1866 = vmatpush2.msra.mxu0 0.0
  %1867 = vmatprep.subr.mxu0 0.0
  %1868 = vmatpush2.msra.mxu0 0.0
  %1869 = vmatprep.subr.mxu0 0.0
  %1870 = vmatpush2.msra.mxu0 0.0
  %1871 = vmatprep.subr.mxu0 0.0
  %1872 = vmatpush2.msra.mxu0 0.0
  %1873 = vmatprep.subr.mxu0 0.0
  %1874 = vmatpush2.msra.mxu0 0.0
  %1875 = vmatprep.subr.mxu0 0.0
  %1876 = vmatpush2.msra.mxu0 0.0
  %1877 = vmatprep.subr.mxu0 0.0
  %1878 = vmatpush2.msra.mxu0 0.0
  %1879 = vmatprep.mubr.f32.mxu0 0.0
  %1880 = vmatmul.mubr.f32.gmra.mxu0 %v1807
  %v1881 = vpop.f32.mrf.mxu0
  %v1882 = vadd.f32 0.0, %v1881
  %v1883 = vpop.f32.mrf.mxu0
  %1884 = vmatprep.mubr.f32.mxu0 0.0
  %1885 = vmatmul.mubr.f32.gmra.mxu0 %v1810
  %v1886 = vpop.f32.mrf.mxu0
  %v1887 = vadd.f32 0.0, %v1886
  %v1888 = vpop.f32.mrf.mxu0
  %1889 = vmatprep.mubr.f32.mxu0 0.0
  %1890 = vmatmul.mubr.f32.gmra.mxu0 %v1813
  %v1891 = vpop.f32.mrf.mxu0
  %v1892 = vadd.f32 0.0, %v1891
  %v1893 = vpop.f32.mrf.mxu0
  %1894 = vdwg.mxu0
  %v1895 = vadd.f32 %v1714, %v1882
  %v1896 = vadd.f32 %v1715, %v1887
  %v1897 = vadd.f32 %v1716, %v1892
  %s1898 = scalar_lea.vmem %s3, 216
  %v1899 = vld [vmem:[%s1898] sm:$0xff]
  %v1900 = vld [vmem:[%s1898 + $0x8] sm:$0xff]
  %v1901 = vld [vmem:[%s1898 + $0x10] sm:$0xff]
  %1902 = vmatprep.subr.mxu0 0.0
  %1903 = vmatpush1.msra.mxu0 %v275
  %1904 = vmatprep.subr.mxu0 0.0
  %1905 = vmatpush1.msra.mxu0 %v274
  %1906 = vmatprep.subr.mxu0 0.0
  %1907 = vmatpush1.msra.mxu0 %v273
  %1908 = vmatprep.subr.mxu0 0.0
  %1909 = vmatpush1.msra.mxu0 %v272
  %1910 = vmatprep.subr.mxu0 0.0
  %1911 = vmatpush1.msra.mxu0 %v271
  %1912 = vmatprep.subr.mxu0 0.0
  %1913 = vmatpush1.msra.mxu0 %v270
  %1914 = vmatprep.subr.mxu0 0.0
  %1915 = vmatpush1.msra.mxu0 %v269
  %1916 = vmatprep.subr.mxu0 0.0
  %1917 = vmatpush1.msra.mxu0 %v268
  %1918 = vmatprep.subr.mxu0 0.0
  %1919 = vmatpush1.msra.mxu0 %v267
  %1920 = vmatprep.subr.mxu0 0.0
  %1921 = vmatpush1.msra.mxu0 %v266
  %1922 = vmatprep.subr.mxu0 0.0
  %1923 = vmatpush1.msra.mxu0 %v265
  %1924 = vmatprep.subr.mxu0 0.0
  %1925 = vmatpush1.msra.mxu0 %v264
  %1926 = vmatprep.subr.mxu0 0.0
  %1927 = vmatpush1.msra.mxu0 %v263
  %1928 = vmatprep.subr.mxu0 0.0
  %1929 = vmatpush1.msra.mxu0 %v262
  %1930 = vmatprep.subr.mxu0 0.0
  %1931 = vmatpush1.msra.mxu0 %v261
  %1932 = vmatprep.subr.mxu0 0.0
  %1933 = vmatpush1.msra.mxu0 %v260
  %1934 = vmatprep.subr.mxu0 0.0
  %1935 = vmatpush2.msra.mxu0 0.0
  %1936 = vmatprep.subr.mxu0 0.0
  %1937 = vmatpush2.msra.mxu0 0.0
  %1938 = vmatprep.subr.mxu0 0.0
  %1939 = vmatpush2.msra.mxu0 0.0
  %1940 = vmatprep.subr.mxu0 0.0
  %1941 = vmatpush2.msra.mxu0 0.0
  %1942 = vmatprep.subr.mxu0 0.0
  %1943 = vmatpush2.msra.mxu0 0.0
  %1944 = vmatprep.subr.mxu0 0.0
  %1945 = vmatpush2.msra.mxu0 0.0
  %1946 = vmatprep.subr.mxu0 0.0
  %1947 = vmatpush2.msra.mxu0 0.0
  %1948 = vmatprep.subr.mxu0 0.0
  %1949 = vmatpush2.msra.mxu0 0.0
  %1950 = vmatprep.subr.mxu0 0.0
  %1951 = vmatpush2.msra.mxu0 0.0
  %1952 = vmatprep.subr.mxu0 0.0
  %1953 = vmatpush2.msra.mxu0 0.0
  %1954 = vmatprep.subr.mxu0 0.0
  %1955 = vmatpush2.msra.mxu0 0.0
  %1956 = vmatprep.subr.mxu0 0.0
  %1957 = vmatpush2.msra.mxu0 0.0
  %1958 = vmatprep.subr.mxu0 0.0
  %1959 = vmatpush2.msra.mxu0 0.0
  %1960 = vmatprep.subr.mxu0 0.0
  %1961 = vmatpush2.msra.mxu0 0.0
  %1962 = vmatprep.subr.mxu0 0.0
  %1963 = vmatpush2.msra.mxu0 0.0
  %1964 = vmatprep.subr.mxu0 0.0
  %1965 = vmatpush2.msra.mxu0 0.0
  %1966 = vmatprep.mubr.f32.mxu0 0.0
  %1967 = vmatmul.mubr.f32.gmra.mxu0 %v1899
  %v1968 = vpop.f32.mrf.mxu0
  %v1969 = vadd.f32 0.0, %v1968
  %v1970 = vpop.f32.mrf.mxu0
  %1971 = vmatprep.mubr.f32.mxu0 0.0
  %1972 = vmatmul.mubr.f32.gmra.mxu0 %v1900
  %v1973 = vpop.f32.mrf.mxu0
  %v1974 = vadd.f32 0.0, %v1973
  %v1975 = vpop.f32.mrf.mxu0
  %1976 = vmatprep.mubr.f32.mxu0 0.0
  %1977 = vmatmul.mubr.f32.gmra.mxu0 %v1901
  %v1978 = vpop.f32.mrf.mxu0
  %v1979 = vadd.f32 0.0, %v1978
  %v1980 = vpop.f32.mrf.mxu0
  %1981 = vdwg.mxu0
  %s1982 = scalar_lea.vmem %s4, 288
  %v1983 = vld [vmem:[%s1982] sm:$0xff]
  %v1984 = vld [vmem:[%s1982 + $0x8] sm:$0xff]
  %v1985 = vld [vmem:[%s1982 + $0x10] sm:$0xff]
  %v1986 = vld [vmem:[%s1982 + $0x18] sm:$0xff]
  %v1988 = vsel %vm452, %v1969, 0
  %v1991 = vsel %vm452, %v1974, 0
  %v1994 = vsel %vm452, %v1979, 0
  %1996 = vmatprep.subr.mxu0 0.0
  %1997 = vmatpush1.msra.mxu0 0.0
  %1998 = vmatprep.subr.mxu0 0.0
  %1999 = vmatpush1.msra.mxu0 0.0
  %2000 = vmatprep.subr.mxu0 0.0
  %2001 = vmatpush1.msra.mxu0 0.0
  %2002 = vmatprep.subr.mxu0 0.0
  %2003 = vmatpush1.msra.mxu0 0.0
  %2004 = vmatprep.subr.mxu0 0.0
  %2005 = vmatpush1.msra.mxu0 0.0
  %2006 = vmatprep.subr.mxu0 0.0
  %2007 = vmatpush1.msra.mxu0 0.0
  %2008 = vmatprep.subr.mxu0 0.0
  %2009 = vmatpush1.msra.mxu0 0.0
  %2010 = vmatprep.subr.mxu0 0.0
  %2011 = vmatpush1.msra.mxu0 0.0
  %2012 = vmatprep.subr.mxu0 0.0
  %2013 = vmatpush1.msra.mxu0 0.0
  %2014 = vmatprep.subr.mxu0 0.0
  %2015 = vmatpush1.msra.mxu0 0.0
  %2016 = vmatprep.subr.mxu0 0.0
  %2017 = vmatpush1.msra.mxu0 0.0
  %2018 = vmatprep.subr.mxu0 0.0
  %2019 = vmatpush1.msra.mxu0 0.0
  %2020 = vmatprep.subr.mxu0 0.0
  %2021 = vmatpush1.msra.mxu0 %v1986
  %2022 = vmatprep.subr.mxu0 0.0
  %2023 = vmatpush1.msra.mxu0 %v1985
  %2024 = vmatprep.subr.mxu0 0.0
  %2025 = vmatpush1.msra.mxu0 %v1984
  %2026 = vmatprep.subr.mxu0 0.0
  %2027 = vmatpush1.msra.mxu0 %v1983
  %2028 = vmatprep.subr.mxu0 0.0
  %2029 = vmatpush2.msra.mxu0 0.0
  %2030 = vmatprep.subr.mxu0 0.0
  %2031 = vmatpush2.msra.mxu0 0.0
  %2032 = vmatprep.subr.mxu0 0.0
  %2033 = vmatpush2.msra.mxu0 0.0
  %2034 = vmatprep.subr.mxu0 0.0
  %2035 = vmatpush2.msra.mxu0 0.0
  %2036 = vmatprep.subr.mxu0 0.0
  %2037 = vmatpush2.msra.mxu0 0.0
  %2038 = vmatprep.subr.mxu0 0.0
  %2039 = vmatpush2.msra.mxu0 0.0
  %2040 = vmatprep.subr.mxu0 0.0
  %2041 = vmatpush2.msra.mxu0 0.0
  %2042 = vmatprep.subr.mxu0 0.0
  %2043 = vmatpush2.msra.mxu0 0.0
  %2044 = vmatprep.subr.mxu0 0.0
  %2045 = vmatpush2.msra.mxu0 0.0
  %2046 = vmatprep.subr.mxu0 0.0
  %2047 = vmatpush2.msra.mxu0 0.0
  %2048 = vmatprep.subr.mxu0 0.0
  %2049 = vmatpush2.msra.mxu0 0.0
  %2050 = vmatprep.subr.mxu0 0.0
  %2051 = vmatpush2.msra.mxu0 0.0
  %2052 = vmatprep.subr.mxu0 0.0
  %2053 = vmatpush2.msra.mxu0 0.0
  %2054 = vmatprep.subr.mxu0 0.0
  %2055 = vmatpush2.msra.mxu0 0.0
  %2056 = vmatprep.subr.mxu0 0.0
  %2057 = vmatpush2.msra.mxu0 0.0
  %2058 = vmatprep.subr.mxu0 0.0
  %2059 = vmatpush2.msra.mxu0 0.0
  %2060 = vmatprep.mubr.f32.mxu0 0.0
  %2061 = vmatmul.mubr.f32.gmra.mxu0 %v1988
  %v2062 = vpop.f32.mrf.mxu0
  %v2063 = vadd.f32 0.0, %v2062
  %v2064 = vpop.f32.mrf.mxu0
  %2065 = vmatprep.mubr.f32.mxu0 0.0
  %2066 = vmatmul.mubr.f32.gmra.mxu0 %v1991
  %v2067 = vpop.f32.mrf.mxu0
  %v2068 = vadd.f32 0.0, %v2067
  %v2069 = vpop.f32.mrf.mxu0
  %2070 = vmatprep.mubr.f32.mxu0 0.0
  %2071 = vmatmul.mubr.f32.gmra.mxu0 %v1994
  %v2072 = vpop.f32.mrf.mxu0
  %v2073 = vadd.f32 0.0, %v2072
  %v2074 = vpop.f32.mrf.mxu0
  %2075 = vdwg.mxu0
  %v2076 = vadd.f32 %v1895, %v2063
  %v2077 = vadd.f32 %v1896, %v2068
  %v2078 = vadd.f32 %v1897, %v2073
  %s2079 = scalar_lea.vmem %s3, 240
  %v2080 = vld [vmem:[%s2079] sm:$0xff]
  %v2081 = vld [vmem:[%s2079 + $0x8] sm:$0xff]
  %v2082 = vld [vmem:[%s2079 + $0x10] sm:$0xff]
  %2083 = vmatprep.subr.mxu0 0.0
  %2084 = vmatpush1.msra.mxu0 %v275
  %2085 = vmatprep.subr.mxu0 0.0
  %2086 = vmatpush1.msra.mxu0 %v274
  %2087 = vmatprep.subr.mxu0 0.0
  %2088 = vmatpush1.msra.mxu0 %v273
  %2089 = vmatprep.subr.mxu0 0.0
  %2090 = vmatpush1.msra.mxu0 %v272
  %2091 = vmatprep.subr.mxu0 0.0
  %2092 = vmatpush1.msra.mxu0 %v271
  %2093 = vmatprep.subr.mxu0 0.0
  %2094 = vmatpush1.msra.mxu0 %v270
  %2095 = vmatprep.subr.mxu0 0.0
  %2096 = vmatpush1.msra.mxu0 %v269
  %2097 = vmatprep.subr.mxu0 0.0
  %2098 = vmatpush1.msra.mxu0 %v268
  %2099 = vmatprep.subr.mxu0 0.0
  %2100 = vmatpush1.msra.mxu0 %v267
  %2101 = vmatprep.subr.mxu0 0.0
  %2102 = vmatpush1.msra.mxu0 %v266
  %2103 = vmatprep.subr.mxu0 0.0
  %2104 = vmatpush1.msra.mxu0 %v265
  %2105 = vmatprep.subr.mxu0 0.0
  %2106 = vmatpush1.msra.mxu0 %v264
  %2107 = vmatprep.subr.mxu0 0.0
  %2108 = vmatpush1.msra.mxu0 %v263
  %2109 = vmatprep.subr.mxu0 0.0
  %2110 = vmatpush1.msra.mxu0 %v262
  %2111 = vmatprep.subr.mxu0 0.0
  %2112 = vmatpush1.msra.mxu0 %v261
  %2113 = vmatprep.subr.mxu0 0.0
  %2114 = vmatpush1.msra.mxu0 %v260
  %2115 = vmatprep.subr.mxu0 0.0
  %2116 = vmatpush2.msra.mxu0 0.0
  %2117 = vmatprep.subr.mxu0 0.0
  %2118 = vmatpush2.msra.mxu0 0.0
  %2119 = vmatprep.subr.mxu0 0.0
  %2120 = vmatpush2.msra.mxu0 0.0
  %2121 = vmatprep.subr.mxu0 0.0
  %2122 = vmatpush2.msra.mxu0 0.0
  %2123 = vmatprep.subr.mxu0 0.0
  %2124 = vmatpush2.msra.mxu0 0.0
  %2125 = vmatprep.subr.mxu0 0.0
  %2126 = vmatpush2.msra.mxu0 0.0
  %2127 = vmatprep.subr.mxu0 0.0
  %2128 = vmatpush2.msra.mxu0 0.0
  %2129 = vmatprep.subr.mxu0 0.0
  %2130 = vmatpush2.msra.mxu0 0.0
  %2131 = vmatprep.subr.mxu0 0.0
  %2132 = vmatpush2.msra.mxu0 0.0
  %2133 = vmatprep.subr.mxu0 0.0
  %2134 = vmatpush2.msra.mxu0 0.0
  %2135 = vmatprep.subr.mxu0 0.0
  %2136 = vmatpush2.msra.mxu0 0.0
  %2137 = vmatprep.subr.mxu0 0.0
  %2138 = vmatpush2.msra.mxu0 0.0
  %2139 = vmatprep.subr.mxu0 0.0
  %2140 = vmatpush2.msra.mxu0 0.0
  %2141 = vmatprep.subr.mxu0 0.0
  %2142 = vmatpush2.msra.mxu0 0.0
  %2143 = vmatprep.subr.mxu0 0.0
  %2144 = vmatpush2.msra.mxu0 0.0
  %2145 = vmatprep.subr.mxu0 0.0
  %2146 = vmatpush2.msra.mxu0 0.0
  %2147 = vmatprep.mubr.f32.mxu0 0.0
  %2148 = vmatmul.mubr.f32.gmra.mxu0 %v2080
  %v2149 = vpop.f32.mrf.mxu0
  %v2150 = vadd.f32 0.0, %v2149
  %v2151 = vpop.f32.mrf.mxu0
  %2152 = vmatprep.mubr.f32.mxu0 0.0
  %2153 = vmatmul.mubr.f32.gmra.mxu0 %v2081
  %v2154 = vpop.f32.mrf.mxu0
  %v2155 = vadd.f32 0.0, %v2154
  %v2156 = vpop.f32.mrf.mxu0
  %2157 = vmatprep.mubr.f32.mxu0 0.0
  %2158 = vmatmul.mubr.f32.gmra.mxu0 %v2082
  %v2159 = vpop.f32.mrf.mxu0
  %v2160 = vadd.f32 0.0, %v2159
  %v2161 = vpop.f32.mrf.mxu0
  %2162 = vdwg.mxu0
  %s2163 = scalar_lea.vmem %s4, 320
  %v2164 = vld [vmem:[%s2163] sm:$0xff]
  %v2165 = vld [vmem:[%s2163 + $0x8] sm:$0xff]
  %v2166 = vld [vmem:[%s2163 + $0x10] sm:$0xff]
  %v2167 = vld [vmem:[%s2163 + $0x18] sm:$0xff]
  %v2169 = vsel %vm452, %v2150, 0
  %v2172 = vsel %vm452, %v2155, 0
  %v2175 = vsel %vm452, %v2160, 0
  %2177 = vmatprep.subr.mxu0 0.0
  %2178 = vmatpush1.msra.mxu0 0.0
  %2179 = vmatprep.subr.mxu0 0.0
  %2180 = vmatpush1.msra.mxu0 0.0
  %2181 = vmatprep.subr.mxu0 0.0
  %2182 = vmatpush1.msra.mxu0 0.0
  %2183 = vmatprep.subr.mxu0 0.0
  %2184 = vmatpush1.msra.mxu0 0.0
  %2185 = vmatprep.subr.mxu0 0.0
  %2186 = vmatpush1.msra.mxu0 0.0
  %2187 = vmatprep.subr.mxu0 0.0
  %2188 = vmatpush1.msra.mxu0 0.0
  %2189 = vmatprep.subr.mxu0 0.0
  %2190 = vmatpush1.msra.mxu0 0.0
  %2191 = vmatprep.subr.mxu0 0.0
  %2192 = vmatpush1.msra.mxu0 0.0
  %2193 = vmatprep.subr.mxu0 0.0
  %2194 = vmatpush1.msra.mxu0 0.0
  %2195 = vmatprep.subr.mxu0 0.0
  %2196 = vmatpush1.msra.mxu0 0.0
  %2197 = vmatprep.subr.mxu0 0.0
  %2198 = vmatpush1.msra.mxu0 0.0
  %2199 = vmatprep.subr.mxu0 0.0
  %2200 = vmatpush1.msra.mxu0 0.0
  %2201 = vmatprep.subr.mxu0 0.0
  %2202 = vmatpush1.msra.mxu0 %v2167
  %2203 = vmatprep.subr.mxu0 0.0
  %2204 = vmatpush1.msra.mxu0 %v2166
  %2205 = vmatprep.subr.mxu0 0.0
  %2206 = vmatpush1.msra.mxu0 %v2165
  %2207 = vmatprep.subr.mxu0 0.0
  %2208 = vmatpush1.msra.mxu0 %v2164
  %2209 = vmatprep.subr.mxu0 0.0
  %2210 = vmatpush2.msra.mxu0 0.0
  %2211 = vmatprep.subr.mxu0 0.0
  %2212 = vmatpush2.msra.mxu0 0.0
  %2213 = vmatprep.subr.mxu0 0.0
  %2214 = vmatpush2.msra.mxu0 0.0
  %2215 = vmatprep.subr.mxu0 0.0
  %2216 = vmatpush2.msra.mxu0 0.0
  %2217 = vmatprep.subr.mxu0 0.0
  %2218 = vmatpush2.msra.mxu0 0.0
  %2219 = vmatprep.subr.mxu0 0.0
  %2220 = vmatpush2.msra.mxu0 0.0
  %2221 = vmatprep.subr.mxu0 0.0
  %2222 = vmatpush2.msra.mxu0 0.0
  %2223 = vmatprep.subr.mxu0 0.0
  %2224 = vmatpush2.msra.mxu0 0.0
  %2225 = vmatprep.subr.mxu0 0.0
  %2226 = vmatpush2.msra.mxu0 0.0
  %2227 = vmatprep.subr.mxu0 0.0
  %2228 = vmatpush2.msra.mxu0 0.0
  %2229 = vmatprep.subr.mxu0 0.0
  %2230 = vmatpush2.msra.mxu0 0.0
  %2231 = vmatprep.subr.mxu0 0.0
  %2232 = vmatpush2.msra.mxu0 0.0
  %2233 = vmatprep.subr.mxu0 0.0
  %2234 = vmatpush2.msra.mxu0 0.0
  %2235 = vmatprep.subr.mxu0 0.0
  %2236 = vmatpush2.msra.mxu0 0.0
  %2237 = vmatprep.subr.mxu0 0.0
  %2238 = vmatpush2.msra.mxu0 0.0
  %2239 = vmatprep.subr.mxu0 0.0
  %2240 = vmatpush2.msra.mxu0 0.0
  %2241 = vmatprep.mubr.f32.mxu0 0.0
  %2242 = vmatmul.mubr.f32.gmra.mxu0 %v2169
  %v2243 = vpop.f32.mrf.mxu0
  %v2244 = vadd.f32 0.0, %v2243
  %v2245 = vpop.f32.mrf.mxu0
  %2246 = vmatprep.mubr.f32.mxu0 0.0
  %2247 = vmatmul.mubr.f32.gmra.mxu0 %v2172
  %v2248 = vpop.f32.mrf.mxu0
  %v2249 = vadd.f32 0.0, %v2248
  %v2250 = vpop.f32.mrf.mxu0
  %2251 = vmatprep.mubr.f32.mxu0 0.0
  %2252 = vmatmul.mubr.f32.gmra.mxu0 %v2175
  %v2253 = vpop.f32.mrf.mxu0
  %v2254 = vadd.f32 0.0, %v2253
  %v2255 = vpop.f32.mrf.mxu0
  %2256 = vdwg.mxu0
  %v2257 = vadd.f32 %v2076, %v2244
  %v2258 = vadd.f32 %v2077, %v2249
  %v2259 = vadd.f32 %v2078, %v2254
  %s2260 = scalar_lea.vmem %s3, 264
  %v2261 = vld [vmem:[%s2260] sm:$0xff]
  %v2262 = vld [vmem:[%s2260 + $0x8] sm:$0xff]
  %v2263 = vld [vmem:[%s2260 + $0x10] sm:$0xff]
  %2264 = vmatprep.subr.mxu0 0.0
  %2265 = vmatpush1.msra.mxu0 %v275
  %2266 = vmatprep.subr.mxu0 0.0
  %2267 = vmatpush1.msra.mxu0 %v274
  %2268 = vmatprep.subr.mxu0 0.0
  %2269 = vmatpush1.msra.mxu0 %v273
  %2270 = vmatprep.subr.mxu0 0.0
  %2271 = vmatpush1.msra.mxu0 %v272
  %2272 = vmatprep.subr.mxu0 0.0
  %2273 = vmatpush1.msra.mxu0 %v271
  %2274 = vmatprep.subr.mxu0 0.0
  %2275 = vmatpush1.msra.mxu0 %v270
  %2276 = vmatprep.subr.mxu0 0.0
  %2277 = vmatpush1.msra.mxu0 %v269
  %2278 = vmatprep.subr.mxu0 0.0
  %2279 = vmatpush1.msra.mxu0 %v268
  %2280 = vmatprep.subr.mxu0 0.0
  %2281 = vmatpush1.msra.mxu0 %v267
  %2282 = vmatprep.subr.mxu0 0.0
  %2283 = vmatpush1.msra.mxu0 %v266
  %2284 = vmatprep.subr.mxu0 0.0
  %2285 = vmatpush1.msra.mxu0 %v265
  %2286 = vmatprep.subr.mxu0 0.0
  %2287 = vmatpush1.msra.mxu0 %v264
  %2288 = vmatprep.subr.mxu0 0.0
  %2289 = vmatpush1.msra.mxu0 %v263
  %2290 = vmatprep.subr.mxu0 0.0
  %2291 = vmatpush1.msra.mxu0 %v262
  %2292 = vmatprep.subr.mxu0 0.0
  %2293 = vmatpush1.msra.mxu0 %v261
  %2294 = vmatprep.subr.mxu0 0.0
  %2295 = vmatpush1.msra.mxu0 %v260
  %2296 = vmatprep.subr.mxu0 0.0
  %2297 = vmatpush2.msra.mxu0 0.0
  %2298 = vmatprep.subr.mxu0 0.0
  %2299 = vmatpush2.msra.mxu0 0.0
  %2300 = vmatprep.subr.mxu0 0.0
  %2301 = vmatpush2.msra.mxu0 0.0
  %2302 = vmatprep.subr.mxu0 0.0
  %2303 = vmatpush2.msra.mxu0 0.0
  %2304 = vmatprep.subr.mxu0 0.0
  %2305 = vmatpush2.msra.mxu0 0.0
  %2306 = vmatprep.subr.mxu0 0.0
  %2307 = vmatpush2.msra.mxu0 0.0
  %2308 = vmatprep.subr.mxu0 0.0
  %2309 = vmatpush2.msra.mxu0 0.0
  %2310 = vmatprep.subr.mxu0 0.0
  %2311 = vmatpush2.msra.mxu0 0.0
  %2312 = vmatprep.subr.mxu0 0.0
  %2313 = vmatpush2.msra.mxu0 0.0
  %2314 = vmatprep.subr.mxu0 0.0
  %2315 = vmatpush2.msra.mxu0 0.0
  %2316 = vmatprep.subr.mxu0 0.0
  %2317 = vmatpush2.msra.mxu0 0.0
  %2318 = vmatprep.subr.mxu0 0.0
  %2319 = vmatpush2.msra.mxu0 0.0
  %2320 = vmatprep.subr.mxu0 0.0
  %2321 = vmatpush2.msra.mxu0 0.0
  %2322 = vmatprep.subr.mxu0 0.0
  %2323 = vmatpush2.msra.mxu0 0.0
  %2324 = vmatprep.subr.mxu0 0.0
  %2325 = vmatpush2.msra.mxu0 0.0
  %2326 = vmatprep.subr.mxu0 0.0
  %2327 = vmatpush2.msra.mxu0 0.0
  %2328 = vmatprep.mubr.f32.mxu0 0.0
  %2329 = vmatmul.mubr.f32.gmra.mxu0 %v2261
  %v2330 = vpop.f32.mrf.mxu0
  %v2331 = vadd.f32 0.0, %v2330
  %v2332 = vpop.f32.mrf.mxu0
  %2333 = vmatprep.mubr.f32.mxu0 0.0
  %2334 = vmatmul.mubr.f32.gmra.mxu0 %v2262
  %v2335 = vpop.f32.mrf.mxu0
  %v2336 = vadd.f32 0.0, %v2335
  %v2337 = vpop.f32.mrf.mxu0
  %2338 = vmatprep.mubr.f32.mxu0 0.0
  %2339 = vmatmul.mubr.f32.gmra.mxu0 %v2263
  %v2340 = vpop.f32.mrf.mxu0
  %v2341 = vadd.f32 0.0, %v2340
  %v2342 = vpop.f32.mrf.mxu0
  %2343 = vdwg.mxu0
  %s2344 = scalar_lea.vmem %s4, 352
  %v2345 = vld [vmem:[%s2344] sm:$0xff]
  %v2346 = vld [vmem:[%s2344 + $0x8] sm:$0xff]
  %v2347 = vld [vmem:[%s2344 + $0x10] sm:$0xff]
  %v2348 = vld [vmem:[%s2344 + $0x18] sm:$0xff]
  %v2350 = vsel %vm452, %v2331, 0
  %v2353 = vsel %vm452, %v2336, 0
  %v2356 = vsel %vm452, %v2341, 0
  %2358 = vmatprep.subr.mxu0 0.0
  %2359 = vmatpush1.msra.mxu0 0.0
  %2360 = vmatprep.subr.mxu0 0.0
  %2361 = vmatpush1.msra.mxu0 0.0
  %2362 = vmatprep.subr.mxu0 0.0
  %2363 = vmatpush1.msra.mxu0 0.0
  %2364 = vmatprep.subr.mxu0 0.0
  %2365 = vmatpush1.msra.mxu0 0.0
  %2366 = vmatprep.subr.mxu0 0.0
  %2367 = vmatpush1.msra.mxu0 0.0
  %2368 = vmatprep.subr.mxu0 0.0
  %2369 = vmatpush1.msra.mxu0 0.0
  %2370 = vmatprep.subr.mxu0 0.0
  %2371 = vmatpush1.msra.mxu0 0.0
  %2372 = vmatprep.subr.mxu0 0.0
  %2373 = vmatpush1.msra.mxu0 0.0
  %2374 = vmatprep.subr.mxu0 0.0
  %2375 = vmatpush1.msra.mxu0 0.0
  %2376 = vmatprep.subr.mxu0 0.0
  %2377 = vmatpush1.msra.mxu0 0.0
  %2378 = vmatprep.subr.mxu0 0.0
  %2379 = vmatpush1.msra.mxu0 0.0
  %2380 = vmatprep.subr.mxu0 0.0
  %2381 = vmatpush1.msra.mxu0 0.0
  %2382 = vmatprep.subr.mxu0 0.0
  %2383 = vmatpush1.msra.mxu0 %v2348
  %2384 = vmatprep.subr.mxu0 0.0
  %2385 = vmatpush1.msra.mxu0 %v2347
  %2386 = vmatprep.subr.mxu0 0.0
  %2387 = vmatpush1.msra.mxu0 %v2346
  %2388 = vmatprep.subr.mxu0 0.0
  %2389 = vmatpush1.msra.mxu0 %v2345
  %2390 = vmatprep.subr.mxu0 0.0
  %2391 = vmatpush2.msra.mxu0 0.0
  %2392 = vmatprep.subr.mxu0 0.0
  %2393 = vmatpush2.msra.mxu0 0.0
  %2394 = vmatprep.subr.mxu0 0.0
  %2395 = vmatpush2.msra.mxu0 0.0
  %2396 = vmatprep.subr.mxu0 0.0
  %2397 = vmatpush2.msra.mxu0 0.0
  %2398 = vmatprep.subr.mxu0 0.0
  %2399 = vmatpush2.msra.mxu0 0.0
  %2400 = vmatprep.subr.mxu0 0.0
  %2401 = vmatpush2.msra.mxu0 0.0
  %2402 = vmatprep.subr.mxu0 0.0
  %2403 = vmatpush2.msra.mxu0 0.0
  %2404 = vmatprep.subr.mxu0 0.0
  %2405 = vmatpush2.msra.mxu0 0.0
  %2406 = vmatprep.subr.mxu0 0.0
  %2407 = vmatpush2.msra.mxu0 0.0
  %2408 = vmatprep.subr.mxu0 0.0
  %2409 = vmatpush2.msra.mxu0 0.0
  %2410 = vmatprep.subr.mxu0 0.0
  %2411 = vmatpush2.msra.mxu0 0.0
  %2412 = vmatprep.subr.mxu0 0.0
  %2413 = vmatpush2.msra.mxu0 0.0
  %2414 = vmatprep.subr.mxu0 0.0
  %2415 = vmatpush2.msra.mxu0 0.0
  %2416 = vmatprep.subr.mxu0 0.0
  %2417 = vmatpush2.msra.mxu0 0.0
  %2418 = vmatprep.subr.mxu0 0.0
  %2419 = vmatpush2.msra.mxu0 0.0
  %2420 = vmatprep.subr.mxu0 0.0
  %2421 = vmatpush2.msra.mxu0 0.0
  %2422 = vmatprep.mubr.f32.mxu0 0.0
  %2423 = vmatmul.mubr.f32.gmra.mxu0 %v2350
  %v2424 = vpop.f32.mrf.mxu0
  %v2425 = vadd.f32 0.0, %v2424
  %v2426 = vpop.f32.mrf.mxu0
  %2427 = vmatprep.mubr.f32.mxu0 0.0
  %2428 = vmatmul.mubr.f32.gmra.mxu0 %v2353
  %v2429 = vpop.f32.mrf.mxu0
  %v2430 = vadd.f32 0.0, %v2429
  %v2431 = vpop.f32.mrf.mxu0
  %2432 = vmatprep.mubr.f32.mxu0 0.0
  %2433 = vmatmul.mubr.f32.gmra.mxu0 %v2356
  %v2434 = vpop.f32.mrf.mxu0
  %v2435 = vadd.f32 0.0, %v2434
  %v2436 = vpop.f32.mrf.mxu0
  %2437 = vdwg.mxu0
  %v2438 = vadd.f32 %v2257, %v2425
  %v2439 = vadd.f32 %v2258, %v2430
  %v2440 = vadd.f32 %v2259, %v2435
  %s2441 = scalar_lea.vmem %s3, 288
  %v2442 = vld [vmem:[%s2441] sm:$0xff]
  %v2443 = vld [vmem:[%s2441 + $0x8] sm:$0xff]
  %v2444 = vld [vmem:[%s2441 + $0x10] sm:$0xff]
  %2445 = vmatprep.subr.mxu0 0.0
  %2446 = vmatpush1.msra.mxu0 %v275
  %2447 = vmatprep.subr.mxu0 0.0
  %2448 = vmatpush1.msra.mxu0 %v274
  %2449 = vmatprep.subr.mxu0 0.0
  %2450 = vmatpush1.msra.mxu0 %v273
  %2451 = vmatprep.subr.mxu0 0.0
  %2452 = vmatpush1.msra.mxu0 %v272
  %2453 = vmatprep.subr.mxu0 0.0
  %2454 = vmatpush1.msra.mxu0 %v271
  %2455 = vmatprep.subr.mxu0 0.0
  %2456 = vmatpush1.msra.mxu0 %v270
  %2457 = vmatprep.subr.mxu0 0.0
  %2458 = vmatpush1.msra.mxu0 %v269
  %2459 = vmatprep.subr.mxu0 0.0
  %2460 = vmatpush1.msra.mxu0 %v268
  %2461 = vmatprep.subr.mxu0 0.0
  %2462 = vmatpush1.msra.mxu0 %v267
  %2463 = vmatprep.subr.mxu0 0.0
  %2464 = vmatpush1.msra.mxu0 %v266
  %2465 = vmatprep.subr.mxu0 0.0
  %2466 = vmatpush1.msra.mxu0 %v265
  %2467 = vmatprep.subr.mxu0 0.0
  %2468 = vmatpush1.msra.mxu0 %v264
  %2469 = vmatprep.subr.mxu0 0.0
  %2470 = vmatpush1.msra.mxu0 %v263
  %2471 = vmatprep.subr.mxu0 0.0
  %2472 = vmatpush1.msra.mxu0 %v262
  %2473 = vmatprep.subr.mxu0 0.0
  %2474 = vmatpush1.msra.mxu0 %v261
  %2475 = vmatprep.subr.mxu0 0.0
  %2476 = vmatpush1.msra.mxu0 %v260
  %2477 = vmatprep.subr.mxu0 0.0
  %2478 = vmatpush2.msra.mxu0 0.0
  %2479 = vmatprep.subr.mxu0 0.0
  %2480 = vmatpush2.msra.mxu0 0.0
  %2481 = vmatprep.subr.mxu0 0.0
  %2482 = vmatpush2.msra.mxu0 0.0
  %2483 = vmatprep.subr.mxu0 0.0
  %2484 = vmatpush2.msra.mxu0 0.0
  %2485 = vmatprep.subr.mxu0 0.0
  %2486 = vmatpush2.msra.mxu0 0.0
  %2487 = vmatprep.subr.mxu0 0.0
  %2488 = vmatpush2.msra.mxu0 0.0
  %2489 = vmatprep.subr.mxu0 0.0
  %2490 = vmatpush2.msra.mxu0 0.0
  %2491 = vmatprep.subr.mxu0 0.0
  %2492 = vmatpush2.msra.mxu0 0.0
  %2493 = vmatprep.subr.mxu0 0.0
  %2494 = vmatpush2.msra.mxu0 0.0
  %2495 = vmatprep.subr.mxu0 0.0
  %2496 = vmatpush2.msra.mxu0 0.0
  %2497 = vmatprep.subr.mxu0 0.0
  %2498 = vmatpush2.msra.mxu0 0.0
  %2499 = vmatprep.subr.mxu0 0.0
  %2500 = vmatpush2.msra.mxu0 0.0
  %2501 = vmatprep.subr.mxu0 0.0
  %2502 = vmatpush2.msra.mxu0 0.0
  %2503 = vmatprep.subr.mxu0 0.0
  %2504 = vmatpush2.msra.mxu0 0.0
  %2505 = vmatprep.subr.mxu0 0.0
  %2506 = vmatpush2.msra.mxu0 0.0
  %2507 = vmatprep.subr.mxu0 0.0
  %2508 = vmatpush2.msra.mxu0 0.0
  %2509 = vmatprep.mubr.f32.mxu0 0.0
  %2510 = vmatmul.mubr.f32.gmra.mxu0 %v2442
  %v2511 = vpop.f32.mrf.mxu0
  %v2512 = vadd.f32 0.0, %v2511
  %v2513 = vpop.f32.mrf.mxu0
  %2514 = vmatprep.mubr.f32.mxu0 0.0
  %2515 = vmatmul.mubr.f32.gmra.mxu0 %v2443
  %v2516 = vpop.f32.mrf.mxu0
  %v2517 = vadd.f32 0.0, %v2516
  %v2518 = vpop.f32.mrf.mxu0
  %2519 = vmatprep.mubr.f32.mxu0 0.0
  %2520 = vmatmul.mubr.f32.gmra.mxu0 %v2444
  %v2521 = vpop.f32.mrf.mxu0
  %v2522 = vadd.f32 0.0, %v2521
  %v2523 = vpop.f32.mrf.mxu0
  %2524 = vdwg.mxu0
  %s2525 = scalar_lea.vmem %s4, 384
  %v2526 = vld [vmem:[%s2525] sm:$0xff]
  %v2527 = vld [vmem:[%s2525 + $0x8] sm:$0xff]
  %v2528 = vld [vmem:[%s2525 + $0x10] sm:$0xff]
  %v2529 = vld [vmem:[%s2525 + $0x18] sm:$0xff]
  %v2531 = vsel %vm452, %v2512, 0
  %v2534 = vsel %vm452, %v2517, 0
  %v2537 = vsel %vm452, %v2522, 0
  %2539 = vmatprep.subr.mxu0 0.0
  %2540 = vmatpush1.msra.mxu0 0.0
  %2541 = vmatprep.subr.mxu0 0.0
  %2542 = vmatpush1.msra.mxu0 0.0
  %2543 = vmatprep.subr.mxu0 0.0
  %2544 = vmatpush1.msra.mxu0 0.0
  %2545 = vmatprep.subr.mxu0 0.0
  %2546 = vmatpush1.msra.mxu0 0.0
  %2547 = vmatprep.subr.mxu0 0.0
  %2548 = vmatpush1.msra.mxu0 0.0
  %2549 = vmatprep.subr.mxu0 0.0
  %2550 = vmatpush1.msra.mxu0 0.0
  %2551 = vmatprep.subr.mxu0 0.0
  %2552 = vmatpush1.msra.mxu0 0.0
  %2553 = vmatprep.subr.mxu0 0.0
  %2554 = vmatpush1.msra.mxu0 0.0
  %2555 = vmatprep.subr.mxu0 0.0
  %2556 = vmatpush1.msra.mxu0 0.0
  %2557 = vmatprep.subr.mxu0 0.0
  %2558 = vmatpush1.msra.mxu0 0.0
  %2559 = vmatprep.subr.mxu0 0.0
  %2560 = vmatpush1.msra.mxu0 0.0
  %2561 = vmatprep.subr.mxu0 0.0
  %2562 = vmatpush1.msra.mxu0 0.0
  %2563 = vmatprep.subr.mxu0 0.0
  %2564 = vmatpush1.msra.mxu0 %v2529
  %2565 = vmatprep.subr.mxu0 0.0
  %2566 = vmatpush1.msra.mxu0 %v2528
  %2567 = vmatprep.subr.mxu0 0.0
  %2568 = vmatpush1.msra.mxu0 %v2527
  %2569 = vmatprep.subr.mxu0 0.0
  %2570 = vmatpush1.msra.mxu0 %v2526
  %2571 = vmatprep.subr.mxu0 0.0
  %2572 = vmatpush2.msra.mxu0 0.0
  %2573 = vmatprep.subr.mxu0 0.0
  %2574 = vmatpush2.msra.mxu0 0.0
  %2575 = vmatprep.subr.mxu0 0.0
  %2576 = vmatpush2.msra.mxu0 0.0
  %2577 = vmatprep.subr.mxu0 0.0
  %2578 = vmatpush2.msra.mxu0 0.0
  %2579 = vmatprep.subr.mxu0 0.0
  %2580 = vmatpush2.msra.mxu0 0.0
  %2581 = vmatprep.subr.mxu0 0.0
  %2582 = vmatpush2.msra.mxu0 0.0
  %2583 = vmatprep.subr.mxu0 0.0
  %2584 = vmatpush2.msra.mxu0 0.0
  %2585 = vmatprep.subr.mxu0 0.0
  %2586 = vmatpush2.msra.mxu0 0.0
  %2587 = vmatprep.subr.mxu0 0.0
  %2588 = vmatpush2.msra.mxu0 0.0
  %2589 = vmatprep.subr.mxu0 0.0
  %2590 = vmatpush2.msra.mxu0 0.0
  %2591 = vmatprep.subr.mxu0 0.0
  %2592 = vmatpush2.msra.mxu0 0.0
  %2593 = vmatprep.subr.mxu0 0.0
  %2594 = vmatpush2.msra.mxu0 0.0
  %2595 = vmatprep.subr.mxu0 0.0
  %2596 = vmatpush2.msra.mxu0 0.0
  %2597 = vmatprep.subr.mxu0 0.0
  %2598 = vmatpush2.msra.mxu0 0.0
  %2599 = vmatprep.subr.mxu0 0.0
  %2600 = vmatpush2.msra.mxu0 0.0
  %2601 = vmatprep.subr.mxu0 0.0
  %2602 = vmatpush2.msra.mxu0 0.0
  %2603 = vmatprep.mubr.f32.mxu0 0.0
  %2604 = vmatmul.mubr.f32.gmra.mxu0 %v2531
  %v2605 = vpop.f32.mrf.mxu0
  %v2606 = vadd.f32 0.0, %v2605
  %v2607 = vpop.f32.mrf.mxu0
  %2608 = vmatprep.mubr.f32.mxu0 0.0
  %2609 = vmatmul.mubr.f32.gmra.mxu0 %v2534
  %v2610 = vpop.f32.mrf.mxu0
  %v2611 = vadd.f32 0.0, %v2610
  %v2612 = vpop.f32.mrf.mxu0
  %2613 = vmatprep.mubr.f32.mxu0 0.0
  %2614 = vmatmul.mubr.f32.gmra.mxu0 %v2537
  %v2615 = vpop.f32.mrf.mxu0
  %v2616 = vadd.f32 0.0, %v2615
  %v2617 = vpop.f32.mrf.mxu0
  %2618 = vdwg.mxu0
  %v2619 = vadd.f32 %v2438, %v2606
  %v2620 = vadd.f32 %v2439, %v2611
  %v2621 = vadd.f32 %v2440, %v2616
  %s2622 = scalar_lea.vmem %s3, 312
  %v2623 = vld [vmem:[%s2622] sm:$0xff]
  %v2624 = vld [vmem:[%s2622 + $0x8] sm:$0xff]
  %v2625 = vld [vmem:[%s2622 + $0x10] sm:$0xff]
  %2626 = vmatprep.subr.mxu0 0.0
  %2627 = vmatpush1.msra.mxu0 %v275
  %2628 = vmatprep.subr.mxu0 0.0
  %2629 = vmatpush1.msra.mxu0 %v274
  %2630 = vmatprep.subr.mxu0 0.0
  %2631 = vmatpush1.msra.mxu0 %v273
  %2632 = vmatprep.subr.mxu0 0.0
  %2633 = vmatpush1.msra.mxu0 %v272
  %2634 = vmatprep.subr.mxu0 0.0
  %2635 = vmatpush1.msra.mxu0 %v271
  %2636 = vmatprep.subr.mxu0 0.0
  %2637 = vmatpush1.msra.mxu0 %v270
  %2638 = vmatprep.subr.mxu0 0.0
  %2639 = vmatpush1.msra.mxu0 %v269
  %2640 = vmatprep.subr.mxu0 0.0
  %2641 = vmatpush1.msra.mxu0 %v268
  %2642 = vmatprep.subr.mxu0 0.0
  %2643 = vmatpush1.msra.mxu0 %v267
  %2644 = vmatprep.subr.mxu0 0.0
  %2645 = vmatpush1.msra.mxu0 %v266
  %2646 = vmatprep.subr.mxu0 0.0
  %2647 = vmatpush1.msra.mxu0 %v265
  %2648 = vmatprep.subr.mxu0 0.0
  %2649 = vmatpush1.msra.mxu0 %v264
  %2650 = vmatprep.subr.mxu0 0.0
  %2651 = vmatpush1.msra.mxu0 %v263
  %2652 = vmatprep.subr.mxu0 0.0
  %2653 = vmatpush1.msra.mxu0 %v262
  %2654 = vmatprep.subr.mxu0 0.0
  %2655 = vmatpush1.msra.mxu0 %v261
  %2656 = vmatprep.subr.mxu0 0.0
  %2657 = vmatpush1.msra.mxu0 %v260
  %2658 = vmatprep.subr.mxu0 0.0
  %2659 = vmatpush2.msra.mxu0 0.0
  %2660 = vmatprep.subr.mxu0 0.0
  %2661 = vmatpush2.msra.mxu0 0.0
  %2662 = vmatprep.subr.mxu0 0.0
  %2663 = vmatpush2.msra.mxu0 0.0
  %2664 = vmatprep.subr.mxu0 0.0
  %2665 = vmatpush2.msra.mxu0 0.0
  %2666 = vmatprep.subr.mxu0 0.0
  %2667 = vmatpush2.msra.mxu0 0.0
  %2668 = vmatprep.subr.mxu0 0.0
  %2669 = vmatpush2.msra.mxu0 0.0
  %2670 = vmatprep.subr.mxu0 0.0
  %2671 = vmatpush2.msra.mxu0 0.0
  %2672 = vmatprep.subr.mxu0 0.0
  %2673 = vmatpush2.msra.mxu0 0.0
  %2674 = vmatprep.subr.mxu0 0.0
  %2675 = vmatpush2.msra.mxu0 0.0
  %2676 = vmatprep.subr.mxu0 0.0
  %2677 = vmatpush2.msra.mxu0 0.0
  %2678 = vmatprep.subr.mxu0 0.0
  %2679 = vmatpush2.msra.mxu0 0.0
  %2680 = vmatprep.subr.mxu0 0.0
  %2681 = vmatpush2.msra.mxu0 0.0
  %2682 = vmatprep.subr.mxu0 0.0
  %2683 = vmatpush2.msra.mxu0 0.0
  %2684 = vmatprep.subr.mxu0 0.0
  %2685 = vmatpush2.msra.mxu0 0.0
  %2686 = vmatprep.subr.mxu0 0.0
  %2687 = vmatpush2.msra.mxu0 0.0
  %2688 = vmatprep.subr.mxu0 0.0
  %2689 = vmatpush2.msra.mxu0 0.0
  %2690 = vmatprep.mubr.f32.mxu0 0.0
  %2691 = vmatmul.mubr.f32.gmra.mxu0 %v2623
  %v2692 = vpop.f32.mrf.mxu0
  %v2693 = vadd.f32 0.0, %v2692
  %v2694 = vpop.f32.mrf.mxu0
  %2695 = vmatprep.mubr.f32.mxu0 0.0
  %2696 = vmatmul.mubr.f32.gmra.mxu0 %v2624
  %v2697 = vpop.f32.mrf.mxu0
  %v2698 = vadd.f32 0.0, %v2697
  %v2699 = vpop.f32.mrf.mxu0
  %2700 = vmatprep.mubr.f32.mxu0 0.0
  %2701 = vmatmul.mubr.f32.gmra.mxu0 %v2625
  %v2702 = vpop.f32.mrf.mxu0
  %v2703 = vadd.f32 0.0, %v2702
  %v2704 = vpop.f32.mrf.mxu0
  %2705 = vdwg.mxu0
  %s2706 = scalar_lea.vmem %s4, 416
  %v2707 = vld [vmem:[%s2706] sm:$0xff]
  %v2708 = vld [vmem:[%s2706 + $0x8] sm:$0xff]
  %v2709 = vld [vmem:[%s2706 + $0x10] sm:$0xff]
  %v2710 = vld [vmem:[%s2706 + $0x18] sm:$0xff]
  %v2712 = vsel %vm452, %v2693, 0
  %v2715 = vsel %vm452, %v2698, 0
  %v2718 = vsel %vm452, %v2703, 0
  %2720 = vmatprep.subr.mxu0 0.0
  %2721 = vmatpush1.msra.mxu0 0.0
  %2722 = vmatprep.subr.mxu0 0.0
  %2723 = vmatpush1.msra.mxu0 0.0
  %2724 = vmatprep.subr.mxu0 0.0
  %2725 = vmatpush1.msra.mxu0 0.0
  %2726 = vmatprep.subr.mxu0 0.0
  %2727 = vmatpush1.msra.mxu0 0.0
  %2728 = vmatprep.subr.mxu0 0.0
  %2729 = vmatpush1.msra.mxu0 0.0
  %2730 = vmatprep.subr.mxu0 0.0
  %2731 = vmatpush1.msra.mxu0 0.0
  %2732 = vmatprep.subr.mxu0 0.0
  %2733 = vmatpush1.msra.mxu0 0.0
  %2734 = vmatprep.subr.mxu0 0.0
  %2735 = vmatpush1.msra.mxu0 0.0
  %2736 = vmatprep.subr.mxu0 0.0
  %2737 = vmatpush1.msra.mxu0 0.0
  %2738 = vmatprep.subr.mxu0 0.0
  %2739 = vmatpush1.msra.mxu0 0.0
  %2740 = vmatprep.subr.mxu0 0.0
  %2741 = vmatpush1.msra.mxu0 0.0
  %2742 = vmatprep.subr.mxu0 0.0
  %2743 = vmatpush1.msra.mxu0 0.0
  %2744 = vmatprep.subr.mxu0 0.0
  %2745 = vmatpush1.msra.mxu0 %v2710
  %2746 = vmatprep.subr.mxu0 0.0
  %2747 = vmatpush1.msra.mxu0 %v2709
  %2748 = vmatprep.subr.mxu0 0.0
  %2749 = vmatpush1.msra.mxu0 %v2708
  %2750 = vmatprep.subr.mxu0 0.0
  %2751 = vmatpush1.msra.mxu0 %v2707
  %2752 = vmatprep.subr.mxu0 0.0
  %2753 = vmatpush2.msra.mxu0 0.0
  %2754 = vmatprep.subr.mxu0 0.0
  %2755 = vmatpush2.msra.mxu0 0.0
  %2756 = vmatprep.subr.mxu0 0.0
  %2757 = vmatpush2.msra.mxu0 0.0
  %2758 = vmatprep.subr.mxu0 0.0
  %2759 = vmatpush2.msra.mxu0 0.0
  %2760 = vmatprep.subr.mxu0 0.0
  %2761 = vmatpush2.msra.mxu0 0.0
  %2762 = vmatprep.subr.mxu0 0.0
  %2763 = vmatpush2.msra.mxu0 0.0
  %2764 = vmatprep.subr.mxu0 0.0
  %2765 = vmatpush2.msra.mxu0 0.0
  %2766 = vmatprep.subr.mxu0 0.0
  %2767 = vmatpush2.msra.mxu0 0.0
  %2768 = vmatprep.subr.mxu0 0.0
  %2769 = vmatpush2.msra.mxu0 0.0
  %2770 = vmatprep.subr.mxu0 0.0
  %2771 = vmatpush2.msra.mxu0 0.0
  %2772 = vmatprep.subr.mxu0 0.0
  %2773 = vmatpush2.msra.mxu0 0.0
  %2774 = vmatprep.subr.mxu0 0.0
  %2775 = vmatpush2.msra.mxu0 0.0
  %2776 = vmatprep.subr.mxu0 0.0
  %2777 = vmatpush2.msra.mxu0 0.0
  %2778 = vmatprep.subr.mxu0 0.0
  %2779 = vmatpush2.msra.mxu0 0.0
  %2780 = vmatprep.subr.mxu0 0.0
  %2781 = vmatpush2.msra.mxu0 0.0
  %2782 = vmatprep.subr.mxu0 0.0
  %2783 = vmatpush2.msra.mxu0 0.0
  %2784 = vmatprep.mubr.f32.mxu0 0.0
  %2785 = vmatmul.mubr.f32.gmra.mxu0 %v2712
  %v2786 = vpop.f32.mrf.mxu0
  %v2787 = vadd.f32 0.0, %v2786
  %v2788 = vpop.f32.mrf.mxu0
  %2789 = vmatprep.mubr.f32.mxu0 0.0
  %2790 = vmatmul.mubr.f32.gmra.mxu0 %v2715
  %v2791 = vpop.f32.mrf.mxu0
  %v2792 = vadd.f32 0.0, %v2791
  %v2793 = vpop.f32.mrf.mxu0
  %2794 = vmatprep.mubr.f32.mxu0 0.0
  %2795 = vmatmul.mubr.f32.gmra.mxu0 %v2718
  %v2796 = vpop.f32.mrf.mxu0
  %v2797 = vadd.f32 0.0, %v2796
  %v2798 = vpop.f32.mrf.mxu0
  %2799 = vdwg.mxu0
  %v2800 = vadd.f32 %v2619, %v2787
  %v2801 = vadd.f32 %v2620, %v2792
  %v2802 = vadd.f32 %v2621, %v2797
  %s2803 = scalar_lea.vmem %s3, 336
  %v2804 = vld [vmem:[%s2803] sm:$0xff]
  %v2805 = vld [vmem:[%s2803 + $0x8] sm:$0xff]
  %v2806 = vld [vmem:[%s2803 + $0x10] sm:$0xff]
  %2807 = vmatprep.subr.mxu0 0.0
  %2808 = vmatpush1.msra.mxu0 %v275
  %2809 = vmatprep.subr.mxu0 0.0
  %2810 = vmatpush1.msra.mxu0 %v274
  %2811 = vmatprep.subr.mxu0 0.0
  %2812 = vmatpush1.msra.mxu0 %v273
  %2813 = vmatprep.subr.mxu0 0.0
  %2814 = vmatpush1.msra.mxu0 %v272
  %2815 = vmatprep.subr.mxu0 0.0
  %2816 = vmatpush1.msra.mxu0 %v271
  %2817 = vmatprep.subr.mxu0 0.0
  %2818 = vmatpush1.msra.mxu0 %v270
  %2819 = vmatprep.subr.mxu0 0.0
  %2820 = vmatpush1.msra.mxu0 %v269
  %2821 = vmatprep.subr.mxu0 0.0
  %2822 = vmatpush1.msra.mxu0 %v268
  %2823 = vmatprep.subr.mxu0 0.0
  %2824 = vmatpush1.msra.mxu0 %v267
  %2825 = vmatprep.subr.mxu0 0.0
  %2826 = vmatpush1.msra.mxu0 %v266
  %2827 = vmatprep.subr.mxu0 0.0
  %2828 = vmatpush1.msra.mxu0 %v265
  %2829 = vmatprep.subr.mxu0 0.0
  %2830 = vmatpush1.msra.mxu0 %v264
  %2831 = vmatprep.subr.mxu0 0.0
  %2832 = vmatpush1.msra.mxu0 %v263
  %2833 = vmatprep.subr.mxu0 0.0
  %2834 = vmatpush1.msra.mxu0 %v262
  %2835 = vmatprep.subr.mxu0 0.0
  %2836 = vmatpush1.msra.mxu0 %v261
  %2837 = vmatprep.subr.mxu0 0.0
  %2838 = vmatpush1.msra.mxu0 %v260
  %2839 = vmatprep.subr.mxu0 0.0
  %2840 = vmatpush2.msra.mxu0 0.0
  %2841 = vmatprep.subr.mxu0 0.0
  %2842 = vmatpush2.msra.mxu0 0.0
  %2843 = vmatprep.subr.mxu0 0.0
  %2844 = vmatpush2.msra.mxu0 0.0
  %2845 = vmatprep.subr.mxu0 0.0
  %2846 = vmatpush2.msra.mxu0 0.0
  %2847 = vmatprep.subr.mxu0 0.0
  %2848 = vmatpush2.msra.mxu0 0.0
  %2849 = vmatprep.subr.mxu0 0.0
  %2850 = vmatpush2.msra.mxu0 0.0
  %2851 = vmatprep.subr.mxu0 0.0
  %2852 = vmatpush2.msra.mxu0 0.0
  %2853 = vmatprep.subr.mxu0 0.0
  %2854 = vmatpush2.msra.mxu0 0.0
  %2855 = vmatprep.subr.mxu0 0.0
  %2856 = vmatpush2.msra.mxu0 0.0
  %2857 = vmatprep.subr.mxu0 0.0
  %2858 = vmatpush2.msra.mxu0 0.0
  %2859 = vmatprep.subr.mxu0 0.0
  %2860 = vmatpush2.msra.mxu0 0.0
  %2861 = vmatprep.subr.mxu0 0.0
  %2862 = vmatpush2.msra.mxu0 0.0
  %2863 = vmatprep.subr.mxu0 0.0
  %2864 = vmatpush2.msra.mxu0 0.0
  %2865 = vmatprep.subr.mxu0 0.0
  %2866 = vmatpush2.msra.mxu0 0.0
  %2867 = vmatprep.subr.mxu0 0.0
  %2868 = vmatpush2.msra.mxu0 0.0
  %2869 = vmatprep.subr.mxu0 0.0
  %2870 = vmatpush2.msra.mxu0 0.0
  %2871 = vmatprep.mubr.f32.mxu0 0.0
  %2872 = vmatmul.mubr.f32.gmra.mxu0 %v2804
  %v2873 = vpop.f32.mrf.mxu0
  %v2874 = vadd.f32 0.0, %v2873
  %v2875 = vpop.f32.mrf.mxu0
  %2876 = vmatprep.mubr.f32.mxu0 0.0
  %2877 = vmatmul.mubr.f32.gmra.mxu0 %v2805
  %v2878 = vpop.f32.mrf.mxu0
  %v2879 = vadd.f32 0.0, %v2878
  %v2880 = vpop.f32.mrf.mxu0
  %2881 = vmatprep.mubr.f32.mxu0 0.0
  %2882 = vmatmul.mubr.f32.gmra.mxu0 %v2806
  %v2883 = vpop.f32.mrf.mxu0
  %v2884 = vadd.f32 0.0, %v2883
  %v2885 = vpop.f32.mrf.mxu0
  %2886 = vdwg.mxu0
  %s2887 = scalar_lea.vmem %s4, 448
  %v2888 = vld [vmem:[%s2887] sm:$0xff]
  %v2889 = vld [vmem:[%s2887 + $0x8] sm:$0xff]
  %v2890 = vld [vmem:[%s2887 + $0x10] sm:$0xff]
  %v2891 = vld [vmem:[%s2887 + $0x18] sm:$0xff]
  %v2893 = vsel %vm452, %v2874, 0
  %v2896 = vsel %vm452, %v2879, 0
  %v2899 = vsel %vm452, %v2884, 0
  %2901 = vmatprep.subr.mxu0 0.0
  %2902 = vmatpush1.msra.mxu0 0.0
  %2903 = vmatprep.subr.mxu0 0.0
  %2904 = vmatpush1.msra.mxu0 0.0
  %2905 = vmatprep.subr.mxu0 0.0
  %2906 = vmatpush1.msra.mxu0 0.0
  %2907 = vmatprep.subr.mxu0 0.0
  %2908 = vmatpush1.msra.mxu0 0.0
  %2909 = vmatprep.subr.mxu0 0.0
  %2910 = vmatpush1.msra.mxu0 0.0
  %2911 = vmatprep.subr.mxu0 0.0
  %2912 = vmatpush1.msra.mxu0 0.0
  %2913 = vmatprep.subr.mxu0 0.0
  %2914 = vmatpush1.msra.mxu0 0.0
  %2915 = vmatprep.subr.mxu0 0.0
  %2916 = vmatpush1.msra.mxu0 0.0
  %2917 = vmatprep.subr.mxu0 0.0
  %2918 = vmatpush1.msra.mxu0 0.0
  %2919 = vmatprep.subr.mxu0 0.0
  %2920 = vmatpush1.msra.mxu0 0.0
  %2921 = vmatprep.subr.mxu0 0.0
  %2922 = vmatpush1.msra.mxu0 0.0
  %2923 = vmatprep.subr.mxu0 0.0
  %2924 = vmatpush1.msra.mxu0 0.0
  %2925 = vmatprep.subr.mxu0 0.0
  %2926 = vmatpush1.msra.mxu0 %v2891
  %2927 = vmatprep.subr.mxu0 0.0
  %2928 = vmatpush1.msra.mxu0 %v2890
  %2929 = vmatprep.subr.mxu0 0.0
  %2930 = vmatpush1.msra.mxu0 %v2889
  %2931 = vmatprep.subr.mxu0 0.0
  %2932 = vmatpush1.msra.mxu0 %v2888
  %2933 = vmatprep.subr.mxu0 0.0
  %2934 = vmatpush2.msra.mxu0 0.0
  %2935 = vmatprep.subr.mxu0 0.0
  %2936 = vmatpush2.msra.mxu0 0.0
  %2937 = vmatprep.subr.mxu0 0.0
  %2938 = vmatpush2.msra.mxu0 0.0
  %2939 = vmatprep.subr.mxu0 0.0
  %2940 = vmatpush2.msra.mxu0 0.0
  %2941 = vmatprep.subr.mxu0 0.0
  %2942 = vmatpush2.msra.mxu0 0.0
  %2943 = vmatprep.subr.mxu0 0.0
  %2944 = vmatpush2.msra.mxu0 0.0
  %2945 = vmatprep.subr.mxu0 0.0
  %2946 = vmatpush2.msra.mxu0 0.0
  %2947 = vmatprep.subr.mxu0 0.0
  %2948 = vmatpush2.msra.mxu0 0.0
  %2949 = vmatprep.subr.mxu0 0.0
  %2950 = vmatpush2.msra.mxu0 0.0
  %2951 = vmatprep.subr.mxu0 0.0
  %2952 = vmatpush2.msra.mxu0 0.0
  %2953 = vmatprep.subr.mxu0 0.0
  %2954 = vmatpush2.msra.mxu0 0.0
  %2955 = vmatprep.subr.mxu0 0.0
  %2956 = vmatpush2.msra.mxu0 0.0
  %2957 = vmatprep.subr.mxu0 0.0
  %2958 = vmatpush2.msra.mxu0 0.0
  %2959 = vmatprep.subr.mxu0 0.0
  %2960 = vmatpush2.msra.mxu0 0.0
  %2961 = vmatprep.subr.mxu0 0.0
  %2962 = vmatpush2.msra.mxu0 0.0
  %2963 = vmatprep.subr.mxu0 0.0
  %2964 = vmatpush2.msra.mxu0 0.0
  %2965 = vmatprep.mubr.f32.mxu0 0.0
  %2966 = vmatmul.mubr.f32.gmra.mxu0 %v2893
  %v2967 = vpop.f32.mrf.mxu0
  %v2968 = vadd.f32 0.0, %v2967
  %v2969 = vpop.f32.mrf.mxu0
  %2970 = vmatprep.mubr.f32.mxu0 0.0
  %2971 = vmatmul.mubr.f32.gmra.mxu0 %v2896
  %v2972 = vpop.f32.mrf.mxu0
  %v2973 = vadd.f32 0.0, %v2972
  %v2974 = vpop.f32.mrf.mxu0
  %2975 = vmatprep.mubr.f32.mxu0 0.0
  %2976 = vmatmul.mubr.f32.gmra.mxu0 %v2899
  %v2977 = vpop.f32.mrf.mxu0
  %v2978 = vadd.f32 0.0, %v2977
  %v2979 = vpop.f32.mrf.mxu0
  %2980 = vdwg.mxu0
  %v2981 = vadd.f32 %v2800, %v2968
  %v2982 = vadd.f32 %v2801, %v2973
  %v2983 = vadd.f32 %v2802, %v2978
  %s2984 = scalar_lea.vmem %s3, 360
  %v2985 = vld [vmem:[%s2984] sm:$0xff]
  %v2986 = vld [vmem:[%s2984 + $0x8] sm:$0xff]
  %v2987 = vld [vmem:[%s2984 + $0x10] sm:$0xff]
  %2988 = vmatprep.subr.mxu0 0.0
  %2989 = vmatpush1.msra.mxu0 %v275
  %2990 = vmatprep.subr.mxu0 0.0
  %2991 = vmatpush1.msra.mxu0 %v274
  %2992 = vmatprep.subr.mxu0 0.0
  %2993 = vmatpush1.msra.mxu0 %v273
  %2994 = vmatprep.subr.mxu0 0.0
  %2995 = vmatpush1.msra.mxu0 %v272
  %2996 = vmatprep.subr.mxu0 0.0
  %2997 = vmatpush1.msra.mxu0 %v271
  %2998 = vmatprep.subr.mxu0 0.0
  %2999 = vmatpush1.msra.mxu0 %v270
  %3000 = vmatprep.subr.mxu0 0.0
  %3001 = vmatpush1.msra.mxu0 %v269
  %3002 = vmatprep.subr.mxu0 0.0
  %3003 = vmatpush1.msra.mxu0 %v268
  %3004 = vmatprep.subr.mxu0 0.0
  %3005 = vmatpush1.msra.mxu0 %v267
  %3006 = vmatprep.subr.mxu0 0.0
  %3007 = vmatpush1.msra.mxu0 %v266
  %3008 = vmatprep.subr.mxu0 0.0
  %3009 = vmatpush1.msra.mxu0 %v265
  %3010 = vmatprep.subr.mxu0 0.0
  %3011 = vmatpush1.msra.mxu0 %v264
  %3012 = vmatprep.subr.mxu0 0.0
  %3013 = vmatpush1.msra.mxu0 %v263
  %3014 = vmatprep.subr.mxu0 0.0
  %3015 = vmatpush1.msra.mxu0 %v262
  %3016 = vmatprep.subr.mxu0 0.0
  %3017 = vmatpush1.msra.mxu0 %v261
  %3018 = vmatprep.subr.mxu0 0.0
  %3019 = vmatpush1.msra.mxu0 %v260
  %3020 = vmatprep.subr.mxu0 0.0
  %3021 = vmatpush2.msra.mxu0 0.0
  %3022 = vmatprep.subr.mxu0 0.0
  %3023 = vmatpush2.msra.mxu0 0.0
  %3024 = vmatprep.subr.mxu0 0.0
  %3025 = vmatpush2.msra.mxu0 0.0
  %3026 = vmatprep.subr.mxu0 0.0
  %3027 = vmatpush2.msra.mxu0 0.0
  %3028 = vmatprep.subr.mxu0 0.0
  %3029 = vmatpush2.msra.mxu0 0.0
  %3030 = vmatprep.subr.mxu0 0.0
  %3031 = vmatpush2.msra.mxu0 0.0
  %3032 = vmatprep.subr.mxu0 0.0
  %3033 = vmatpush2.msra.mxu0 0.0
  %3034 = vmatprep.subr.mxu0 0.0
  %3035 = vmatpush2.msra.mxu0 0.0
  %3036 = vmatprep.subr.mxu0 0.0
  %3037 = vmatpush2.msra.mxu0 0.0
  %3038 = vmatprep.subr.mxu0 0.0
  %3039 = vmatpush2.msra.mxu0 0.0
  %3040 = vmatprep.subr.mxu0 0.0
  %3041 = vmatpush2.msra.mxu0 0.0
  %3042 = vmatprep.subr.mxu0 0.0
  %3043 = vmatpush2.msra.mxu0 0.0
  %3044 = vmatprep.subr.mxu0 0.0
  %3045 = vmatpush2.msra.mxu0 0.0
  %3046 = vmatprep.subr.mxu0 0.0
  %3047 = vmatpush2.msra.mxu0 0.0
  %3048 = vmatprep.subr.mxu0 0.0
  %3049 = vmatpush2.msra.mxu0 0.0
  %3050 = vmatprep.subr.mxu0 0.0
  %3051 = vmatpush2.msra.mxu0 0.0
  %3052 = vmatprep.mubr.f32.mxu0 0.0
  %3053 = vmatmul.mubr.f32.gmra.mxu0 %v2985
  %v3054 = vpop.f32.mrf.mxu0
  %v3055 = vadd.f32 0.0, %v3054
  %v3056 = vpop.f32.mrf.mxu0
  %3057 = vmatprep.mubr.f32.mxu0 0.0
  %3058 = vmatmul.mubr.f32.gmra.mxu0 %v2986
  %v3059 = vpop.f32.mrf.mxu0
  %v3060 = vadd.f32 0.0, %v3059
  %v3061 = vpop.f32.mrf.mxu0
  %3062 = vmatprep.mubr.f32.mxu0 0.0
  %3063 = vmatmul.mubr.f32.gmra.mxu0 %v2987
  %v3064 = vpop.f32.mrf.mxu0
  %v3065 = vadd.f32 0.0, %v3064
  %v3066 = vpop.f32.mrf.mxu0
  %3067 = vdwg.mxu0
  %s3068 = scalar_lea.vmem %s4, 480
  %v3069 = vld [vmem:[%s3068] sm:$0xff]
  %v3070 = vld [vmem:[%s3068 + $0x8] sm:$0xff]
  %v3071 = vld [vmem:[%s3068 + $0x10] sm:$0xff]
  %v3072 = vld [vmem:[%s3068 + $0x18] sm:$0xff]
  %v3074 = vsel %vm452, %v3055, 0
  %v3077 = vsel %vm452, %v3060, 0
  %v3080 = vsel %vm452, %v3065, 0
  %3082 = vmatprep.subr.mxu0 0.0
  %3083 = vmatpush1.msra.mxu0 0.0
  %3084 = vmatprep.subr.mxu0 0.0
  %3085 = vmatpush1.msra.mxu0 0.0
  %3086 = vmatprep.subr.mxu0 0.0
  %3087 = vmatpush1.msra.mxu0 0.0
  %3088 = vmatprep.subr.mxu0 0.0
  %3089 = vmatpush1.msra.mxu0 0.0
  %3090 = vmatprep.subr.mxu0 0.0
  %3091 = vmatpush1.msra.mxu0 0.0
  %3092 = vmatprep.subr.mxu0 0.0
  %3093 = vmatpush1.msra.mxu0 0.0
  %3094 = vmatprep.subr.mxu0 0.0
  %3095 = vmatpush1.msra.mxu0 0.0
  %3096 = vmatprep.subr.mxu0 0.0
  %3097 = vmatpush1.msra.mxu0 0.0
  %3098 = vmatprep.subr.mxu0 0.0
  %3099 = vmatpush1.msra.mxu0 0.0
  %3100 = vmatprep.subr.mxu0 0.0
  %3101 = vmatpush1.msra.mxu0 0.0
  %3102 = vmatprep.subr.mxu0 0.0
  %3103 = vmatpush1.msra.mxu0 0.0
  %3104 = vmatprep.subr.mxu0 0.0
  %3105 = vmatpush1.msra.mxu0 0.0
  %3106 = vmatprep.subr.mxu0 0.0
  %3107 = vmatpush1.msra.mxu0 %v3072
  %3108 = vmatprep.subr.mxu0 0.0
  %3109 = vmatpush1.msra.mxu0 %v3071
  %3110 = vmatprep.subr.mxu0 0.0
  %3111 = vmatpush1.msra.mxu0 %v3070
  %3112 = vmatprep.subr.mxu0 0.0
  %3113 = vmatpush1.msra.mxu0 %v3069
  %3114 = vmatprep.subr.mxu0 0.0
  %3115 = vmatpush2.msra.mxu0 0.0
  %3116 = vmatprep.subr.mxu0 0.0
  %3117 = vmatpush2.msra.mxu0 0.0
  %3118 = vmatprep.subr.mxu0 0.0
  %3119 = vmatpush2.msra.mxu0 0.0
  %3120 = vmatprep.subr.mxu0 0.0
  %3121 = vmatpush2.msra.mxu0 0.0
  %3122 = vmatprep.subr.mxu0 0.0
  %3123 = vmatpush2.msra.mxu0 0.0
  %3124 = vmatprep.subr.mxu0 0.0
  %3125 = vmatpush2.msra.mxu0 0.0
  %3126 = vmatprep.subr.mxu0 0.0
  %3127 = vmatpush2.msra.mxu0 0.0
  %3128 = vmatprep.subr.mxu0 0.0
  %3129 = vmatpush2.msra.mxu0 0.0
  %3130 = vmatprep.subr.mxu0 0.0
  %3131 = vmatpush2.msra.mxu0 0.0
  %3132 = vmatprep.subr.mxu0 0.0
  %3133 = vmatpush2.msra.mxu0 0.0
  %3134 = vmatprep.subr.mxu0 0.0
  %3135 = vmatpush2.msra.mxu0 0.0
  %3136 = vmatprep.subr.mxu0 0.0
  %3137 = vmatpush2.msra.mxu0 0.0
  %3138 = vmatprep.subr.mxu0 0.0
  %3139 = vmatpush2.msra.mxu0 0.0
  %3140 = vmatprep.subr.mxu0 0.0
  %3141 = vmatpush2.msra.mxu0 0.0
  %3142 = vmatprep.subr.mxu0 0.0
  %3143 = vmatpush2.msra.mxu0 0.0
  %3144 = vmatprep.subr.mxu0 0.0
  %3145 = vmatpush2.msra.mxu0 0.0
  %3146 = vmatprep.mubr.f32.mxu0 0.0
  %3147 = vmatmul.mubr.f32.gmra.mxu0 %v3074
  %v3148 = vpop.f32.mrf.mxu0
  %v3149 = vadd.f32 0.0, %v3148
  %v3150 = vpop.f32.mrf.mxu0
  %3151 = vmatprep.mubr.f32.mxu0 0.0
  %3152 = vmatmul.mubr.f32.gmra.mxu0 %v3077
  %v3153 = vpop.f32.mrf.mxu0
  %v3154 = vadd.f32 0.0, %v3153
  %v3155 = vpop.f32.mrf.mxu0
  %3156 = vmatprep.mubr.f32.mxu0 0.0
  %3157 = vmatmul.mubr.f32.gmra.mxu0 %v3080
  %v3158 = vpop.f32.mrf.mxu0
  %v3159 = vadd.f32 0.0, %v3158
  %v3160 = vpop.f32.mrf.mxu0
  %3161 = vdwg.mxu0
  %v3162 = vadd.f32 %v2981, %v3149
  %v3163 = vadd.f32 %v2982, %v3154
  %v3164 = vadd.f32 %v2983, %v3159
  %v3165 = vld [vmem:[%s5] sm:$0x1]
  %v3167 = vlaneseq
  %v3168 = vshrl.u32 %v3167, 7
  %v3169 = vsub.s32 0, %v3168
  %v3170 = vrot.slane %v3165, %v3169
  %v3172 = vadd.f32 %v3162, %v3170
  %v3173 = vadd.f32 %v3163, %v3170
  %v3174 = vadd.f32 %v3164, %v3170
  %v3175 = vmax.f32 %v3172, 0.0
  %v3176 = vmax.f32 %v3173, 0.0
  %v3177 = vmax.f32 %v3174, 0.0
  %v3178 = vld [vmem:[%s6] sm:$0xff]
  %vm3179 = vcmask 195584
  %v3181 = vsel %vm3179, %v3178, 0
  %3183 = vmatprep.subr.mxu0 0.0
  %3184 = vmatpush1.msra.mxu0 0.0
  %3185 = vmatprep.subr.mxu0 0.0
  %3186 = vmatpush1.msra.mxu0 0.0
  %3187 = vmatprep.subr.mxu0 0.0
  %3188 = vmatpush1.msra.mxu0 0.0
  %3189 = vmatprep.subr.mxu0 0.0
  %3190 = vmatpush1.msra.mxu0 0.0
  %3191 = vmatprep.subr.mxu0 0.0
  %3192 = vmatpush1.msra.mxu0 0.0
  %3193 = vmatprep.subr.mxu0 0.0
  %3194 = vmatpush1.msra.mxu0 0.0
  %3195 = vmatprep.subr.mxu0 0.0
  %3196 = vmatpush1.msra.mxu0 0.0
  %3197 = vmatprep.subr.mxu0 0.0
  %3198 = vmatpush1.msra.mxu0 0.0
  %3199 = vmatprep.subr.mxu0 0.0
  %3200 = vmatpush1.msra.mxu0 0.0
  %3201 = vmatprep.subr.mxu0 0.0
  %3202 = vmatpush1.msra.mxu0 0.0
  %3203 = vmatprep.subr.mxu0 0.0
  %3204 = vmatpush1.msra.mxu0 0.0
  %3205 = vmatprep.subr.mxu0 0.0
  %3206 = vmatpush1.msra.mxu0 0.0
  %3207 = vmatprep.subr.mxu0 0.0
  %3208 = vmatpush1.msra.mxu0 0.0
  %3209 = vmatprep.subr.mxu0 0.0
  %3210 = vmatpush1.msra.mxu0 %v3177
  %3211 = vmatprep.subr.mxu0 0.0
  %3212 = vmatpush1.msra.mxu0 %v3176
  %3213 = vmatprep.subr.mxu0 0.0
  %3214 = vmatpush1.msra.mxu0 %v3175
  %3215 = vmatprep.subr.mxu0 0.0
  %3216 = vmatpush2.msra.mxu0 0.0
  %3217 = vmatprep.subr.mxu0 0.0
  %3218 = vmatpush2.msra.mxu0 0.0
  %3219 = vmatprep.subr.mxu0 0.0
  %3220 = vmatpush2.msra.mxu0 0.0
  %3221 = vmatprep.subr.mxu0 0.0
  %3222 = vmatpush2.msra.mxu0 0.0
  %3223 = vmatprep.subr.mxu0 0.0
  %3224 = vmatpush2.msra.mxu0 0.0
  %3225 = vmatprep.subr.mxu0 0.0
  %3226 = vmatpush2.msra.mxu0 0.0
  %3227 = vmatprep.subr.mxu0 0.0
  %3228 = vmatpush2.msra.mxu0 0.0
  %3229 = vmatprep.subr.mxu0 0.0
  %3230 = vmatpush2.msra.mxu0 0.0
  %3231 = vmatprep.subr.mxu0 0.0
  %3232 = vmatpush2.msra.mxu0 0.0
  %3233 = vmatprep.subr.mxu0 0.0
  %3234 = vmatpush2.msra.mxu0 0.0
  %3235 = vmatprep.subr.mxu0 0.0
  %3236 = vmatpush2.msra.mxu0 0.0
  %3237 = vmatprep.subr.mxu0 0.0
  %3238 = vmatpush2.msra.mxu0 0.0
  %3239 = vmatprep.subr.mxu0 0.0
  %3240 = vmatpush2.msra.mxu0 0.0
  %3241 = vmatprep.subr.mxu0 0.0
  %3242 = vmatpush2.msra.mxu0 0.0
  %3243 = vmatprep.subr.mxu0 0.0
  %3244 = vmatpush2.msra.mxu0 0.0
  %3245 = vmatprep.subr.mxu0 0.0
  %3246 = vmatpush2.msra.mxu0 0.0
  %3247 = vmatprep.mubr.f32.mxu0 0.0
  %3248 = vmatmul.mubr.f32.gmra.mxu0 %v3181
  %v3249 = vpop.f32.mrf.mxu0
  %v3250 = vadd.f32 0.0, %v3249
  %v3251 = vpop.f32.mrf.mxu0
  %3252 = vdwg.mxu0
  %v3253 = vld [vmem:[%s7] sm:$0xff]
  %v3254 = vld [vmem:[%s7 + $0x8] sm:$0xff]
  %v3255 = vld [vmem:[%s7 + $0x10] sm:$0xff]
  %v3256 = vld [vmem:[%s7 + $0x18] sm:$0xff]
  %v3257 = vld [vmem:[%s7 + $0x20] sm:$0xff]
  %v3258 = vld [vmem:[%s7 + $0x28] sm:$0xff]
  %v3259 = vld [vmem:[%s7 + $0x30] sm:$0xff]
  %v3260 = vld [vmem:[%s7 + $0x38] sm:$0xff]
  %s3261 = scalar_lea.vmem %s6, 8
  %v3262 = vld [vmem:[%s3261] sm:$0xff]
  %v3264 = vsel %vm3179, %v3262, 0
  %3266 = vmatprep.subr.mxu0 0.0
  %3267 = vmatpush1.msra.mxu0 0.0
  %3268 = vmatprep.subr.mxu0 0.0
  %3269 = vmatpush1.msra.mxu0 0.0
  %3270 = vmatprep.subr.mxu0 0.0
  %3271 = vmatpush1.msra.mxu0 0.0
  %3272 = vmatprep.subr.mxu0 0.0
  %3273 = vmatpush1.msra.mxu0 0.0
  %3274 = vmatprep.subr.mxu0 0.0
  %3275 = vmatpush1.msra.mxu0 0.0
  %3276 = vmatprep.subr.mxu0 0.0
  %3277 = vmatpush1.msra.mxu0 0.0
  %3278 = vmatprep.subr.mxu0 0.0
  %3279 = vmatpush1.msra.mxu0 0.0
  %3280 = vmatprep.subr.mxu0 0.0
  %3281 = vmatpush1.msra.mxu0 0.0
  %3282 = vmatprep.subr.mxu0 0.0
  %3283 = vmatpush1.msra.mxu0 0.0
  %3284 = vmatprep.subr.mxu0 0.0
  %3285 = vmatpush1.msra.mxu0 0.0
  %3286 = vmatprep.subr.mxu0 0.0
  %3287 = vmatpush1.msra.mxu0 0.0
  %3288 = vmatprep.subr.mxu0 0.0
  %3289 = vmatpush1.msra.mxu0 0.0
  %3290 = vmatprep.subr.mxu0 0.0
  %3291 = vmatpush1.msra.mxu0 0.0
  %3292 = vmatprep.subr.mxu0 0.0
  %3293 = vmatpush1.msra.mxu0 %v3177
  %3294 = vmatprep.subr.mxu0 0.0
  %3295 = vmatpush1.msra.mxu0 %v3176
  %3296 = vmatprep.subr.mxu0 0.0
  %3297 = vmatpush1.msra.mxu0 %v3175
  %3298 = vmatprep.subr.mxu0 0.0
  %3299 = vmatpush2.msra.mxu0 0.0
  %3300 = vmatprep.subr.mxu0 0.0
  %3301 = vmatpush2.msra.mxu0 0.0
  %3302 = vmatprep.subr.mxu0 0.0
  %3303 = vmatpush2.msra.mxu0 0.0
  %3304 = vmatprep.subr.mxu0 0.0
  %3305 = vmatpush2.msra.mxu0 0.0
  %3306 = vmatprep.subr.mxu0 0.0
  %3307 = vmatpush2.msra.mxu0 0.0
  %3308 = vmatprep.subr.mxu0 0.0
  %3309 = vmatpush2.msra.mxu0 0.0
  %3310 = vmatprep.subr.mxu0 0.0
  %3311 = vmatpush2.msra.mxu0 0.0
  %3312 = vmatprep.subr.mxu0 0.0
  %3313 = vmatpush2.msra.mxu0 0.0
  %3314 = vmatprep.subr.mxu0 0.0
  %3315 = vmatpush2.msra.mxu0 0.0
  %3316 = vmatprep.subr.mxu0 0.0
  %3317 = vmatpush2.msra.mxu0 0.0
  %3318 = vmatprep.subr.mxu0 0.0
  %3319 = vmatpush2.msra.mxu0 0.0
  %3320 = vmatprep.subr.mxu0 0.0
  %3321 = vmatpush2.msra.mxu0 0.0
  %3322 = vmatprep.subr.mxu0 0.0
  %3323 = vmatpush2.msra.mxu0 0.0
  %3324 = vmatprep.subr.mxu0 0.0
  %3325 = vmatpush2.msra.mxu0 0.0
  %3326 = vmatprep.subr.mxu0 0.0
  %3327 = vmatpush2.msra.mxu0 0.0
  %3328 = vmatprep.subr.mxu0 0.0
  %3329 = vmatpush2.msra.mxu0 0.0
  %3330 = vmatprep.mubr.f32.mxu0 0.0
  %3331 = vmatmul.mubr.f32.gmra.mxu0 %v3264
  %v3332 = vpop.f32.mrf.mxu0
  %v3333 = vadd.f32 0.0, %v3332
  %v3334 = vpop.f32.mrf.mxu0
  %3335 = vdwg.mxu0
  %s3336 = scalar_lea.vmem %s7, 64
  %v3337 = vld [vmem:[%s3336] sm:$0xff]
  %v3338 = vld [vmem:[%s3336 + $0x8] sm:$0xff]
  %v3339 = vld [vmem:[%s3336 + $0x10] sm:$0xff]
  %v3340 = vld [vmem:[%s3336 + $0x18] sm:$0xff]
  %v3341 = vld [vmem:[%s3336 + $0x20] sm:$0xff]
  %v3342 = vld [vmem:[%s3336 + $0x28] sm:$0xff]
  %v3343 = vld [vmem:[%s3336 + $0x30] sm:$0xff]
  %v3344 = vld [vmem:[%s3336 + $0x38] sm:$0xff]
  %vm3345 = vcmask 523264
  %v3347 = vsel %vm3345, %v3333, 0
  %3349 = vmatprep.subr.mxu0 0.0
  %3350 = vmatpush1.msra.mxu0 0.0
  %3351 = vmatprep.subr.mxu0 0.0
  %3352 = vmatpush1.msra.mxu0 0.0
  %3353 = vmatprep.subr.mxu0 0.0
  %3354 = vmatpush1.msra.mxu0 0.0
  %3355 = vmatprep.subr.mxu0 0.0
  %3356 = vmatpush1.msra.mxu0 0.0
  %3357 = vmatprep.subr.mxu0 0.0
  %3358 = vmatpush1.msra.mxu0 0.0
  %3359 = vmatprep.subr.mxu0 0.0
  %3360 = vmatpush1.msra.mxu0 0.0
  %3361 = vmatprep.subr.mxu0 0.0
  %3362 = vmatpush1.msra.mxu0 0.0
  %3363 = vmatprep.subr.mxu0 0.0
  %3364 = vmatpush1.msra.mxu0 0.0
  %3365 = vmatprep.subr.mxu0 0.0
  %3366 = vmatpush1.msra.mxu0 %v3344
  %3367 = vmatprep.subr.mxu0 0.0
  %3368 = vmatpush1.msra.mxu0 %v3343
  %3369 = vmatprep.subr.mxu0 0.0
  %3370 = vmatpush1.msra.mxu0 %v3342
  %3371 = vmatprep.subr.mxu0 0.0
  %3372 = vmatpush1.msra.mxu0 %v3341
  %3373 = vmatprep.subr.mxu0 0.0
  %3374 = vmatpush1.msra.mxu0 %v3340
  %3375 = vmatprep.subr.mxu0 0.0
  %3376 = vmatpush1.msra.mxu0 %v3339
  %3377 = vmatprep.subr.mxu0 0.0
  %3378 = vmatpush1.msra.mxu0 %v3338
  %3379 = vmatprep.subr.mxu0 0.0
  %3380 = vmatpush1.msra.mxu0 %v3337
  %3381 = vmatprep.subr.mxu0 0.0
  %3382 = vmatpush2.msra.mxu0 0.0
  %3383 = vmatprep.subr.mxu0 0.0
  %3384 = vmatpush2.msra.mxu0 0.0
  %3385 = vmatprep.subr.mxu0 0.0
  %3386 = vmatpush2.msra.mxu0 0.0
  %3387 = vmatprep.subr.mxu0 0.0
  %3388 = vmatpush2.msra.mxu0 0.0
  %3389 = vmatprep.subr.mxu0 0.0
  %3390 = vmatpush2.msra.mxu0 0.0
  %3391 = vmatprep.subr.mxu0 0.0
  %3392 = vmatpush2.msra.mxu0 0.0
  %3393 = vmatprep.subr.mxu0 0.0
  %3394 = vmatpush2.msra.mxu0 0.0
  %3395 = vmatprep.subr.mxu0 0.0
  %3396 = vmatpush2.msra.mxu0 0.0
  %3397 = vmatprep.subr.mxu0 0.0
  %3398 = vmatpush2.msra.mxu0 0.0
  %3399 = vmatprep.subr.mxu0 0.0
  %3400 = vmatpush2.msra.mxu0 0.0
  %3401 = vmatprep.subr.mxu0 0.0
  %3402 = vmatpush2.msra.mxu0 0.0
  %3403 = vmatprep.subr.mxu0 0.0
  %3404 = vmatpush2.msra.mxu0 0.0
  %3405 = vmatprep.subr.mxu0 0.0
  %3406 = vmatpush2.msra.mxu0 0.0
  %3407 = vmatprep.subr.mxu0 0.0
  %3408 = vmatpush2.msra.mxu0 0.0
  %3409 = vmatprep.subr.mxu0 0.0
  %3410 = vmatpush2.msra.mxu0 0.0
  %3411 = vmatprep.subr.mxu0 0.0
  %3412 = vmatpush2.msra.mxu0 0.0
  %3413 = vmatprep.mubr.f32.mxu0 0.0
  %3414 = vmatmul.mubr.f32.gmra.mxu0 %v3347
  %v3415 = vpop.f32.mrf.mxu0
  %v3416 = vadd.f32 0.0, %v3415
  %v3417 = vpop.f32.mrf.mxu0
  %3418 = vdwg.mxu0
  %v3420 = vsel %vm3345, %v3250, 0
  %3422 = vmatprep.subr.mxu0 0.0
  %3423 = vmatpush1.msra.mxu0 0.0
  %3424 = vmatprep.subr.mxu0 0.0
  %3425 = vmatpush1.msra.mxu0 0.0
  %3426 = vmatprep.subr.mxu0 0.0
  %3427 = vmatpush1.msra.mxu0 0.0
  %3428 = vmatprep.subr.mxu0 0.0
  %3429 = vmatpush1.msra.mxu0 0.0
  %3430 = vmatprep.subr.mxu0 0.0
  %3431 = vmatpush1.msra.mxu0 0.0
  %3432 = vmatprep.subr.mxu0 0.0
  %3433 = vmatpush1.msra.mxu0 0.0
  %3434 = vmatprep.subr.mxu0 0.0
  %3435 = vmatpush1.msra.mxu0 0.0
  %3436 = vmatprep.subr.mxu0 0.0
  %3437 = vmatpush1.msra.mxu0 0.0
  %3438 = vmatprep.subr.mxu0 0.0
  %3439 = vmatpush1.msra.mxu0 %v3260
  %3440 = vmatprep.subr.mxu0 0.0
  %3441 = vmatpush1.msra.mxu0 %v3259
  %3442 = vmatprep.subr.mxu0 0.0
  %3443 = vmatpush1.msra.mxu0 %v3258
  %3444 = vmatprep.subr.mxu0 0.0
  %3445 = vmatpush1.msra.mxu0 %v3257
  %3446 = vmatprep.subr.mxu0 0.0
  %3447 = vmatpush1.msra.mxu0 %v3256
  %3448 = vmatprep.subr.mxu0 0.0
  %3449 = vmatpush1.msra.mxu0 %v3255
  %3450 = vmatprep.subr.mxu0 0.0
  %3451 = vmatpush1.msra.mxu0 %v3254
  %3452 = vmatprep.subr.mxu0 0.0
  %3453 = vmatpush1.msra.mxu0 %v3253
  %3454 = vmatprep.subr.mxu0 0.0
  %3455 = vmatpush2.msra.mxu0 0.0
  %3456 = vmatprep.subr.mxu0 0.0
  %3457 = vmatpush2.msra.mxu0 0.0
  %3458 = vmatprep.subr.mxu0 0.0
  %3459 = vmatpush2.msra.mxu0 0.0
  %3460 = vmatprep.subr.mxu0 0.0
  %3461 = vmatpush2.msra.mxu0 0.0
  %3462 = vmatprep.subr.mxu0 0.0
  %3463 = vmatpush2.msra.mxu0 0.0
  %3464 = vmatprep.subr.mxu0 0.0
  %3465 = vmatpush2.msra.mxu0 0.0
  %3466 = vmatprep.subr.mxu0 0.0
  %3467 = vmatpush2.msra.mxu0 0.0
  %3468 = vmatprep.subr.mxu0 0.0
  %3469 = vmatpush2.msra.mxu0 0.0
  %3470 = vmatprep.subr.mxu0 0.0
  %3471 = vmatpush2.msra.mxu0 0.0
  %3472 = vmatprep.subr.mxu0 0.0
  %3473 = vmatpush2.msra.mxu0 0.0
  %3474 = vmatprep.subr.mxu0 0.0
  %3475 = vmatpush2.msra.mxu0 0.0
  %3476 = vmatprep.subr.mxu0 0.0
  %3477 = vmatpush2.msra.mxu0 0.0
  %3478 = vmatprep.subr.mxu0 0.0
  %3479 = vmatpush2.msra.mxu0 0.0
  %3480 = vmatprep.subr.mxu0 0.0
  %3481 = vmatpush2.msra.mxu0 0.0
  %3482 = vmatprep.subr.mxu0 0.0
  %3483 = vmatpush2.msra.mxu0 0.0
  %3484 = vmatprep.subr.mxu0 0.0
  %3485 = vmatpush2.msra.mxu0 0.0
  %3486 = vmatprep.mubr.f32.mxu0 0.0
  %3487 = vmatmul.mubr.f32.gmra.mxu0 %v3420
  %v3488 = vpop.f32.mrf.mxu0
  %v3489 = vadd.f32 %v3416, %v3488
  %v3490 = vpop.f32.mrf.mxu0
  %3491 = vdwg.mxu0
  %s3492 = scalar_lea.vmem %s6, 16
  %v3493 = vld [vmem:[%s3492] sm:$0xff]
  %v3495 = vsel %vm3179, %v3493, 0
  %3497 = vmatprep.subr.mxu0 0.0
  %3498 = vmatpush1.msra.mxu0 0.0
  %3499 = vmatprep.subr.mxu0 0.0
  %3500 = vmatpush1.msra.mxu0 0.0
  %3501 = vmatprep.subr.mxu0 0.0
  %3502 = vmatpush1.msra.mxu0 0.0
  %3503 = vmatprep.subr.mxu0 0.0
  %3504 = vmatpush1.msra.mxu0 0.0
  %3505 = vmatprep.subr.mxu0 0.0
  %3506 = vmatpush1.msra.mxu0 0.0
  %3507 = vmatprep.subr.mxu0 0.0
  %3508 = vmatpush1.msra.mxu0 0.0
  %3509 = vmatprep.subr.mxu0 0.0
  %3510 = vmatpush1.msra.mxu0 0.0
  %3511 = vmatprep.subr.mxu0 0.0
  %3512 = vmatpush1.msra.mxu0 0.0
  %3513 = vmatprep.subr.mxu0 0.0
  %3514 = vmatpush1.msra.mxu0 0.0
  %3515 = vmatprep.subr.mxu0 0.0
  %3516 = vmatpush1.msra.mxu0 0.0
  %3517 = vmatprep.subr.mxu0 0.0
  %3518 = vmatpush1.msra.mxu0 0.0
  %3519 = vmatprep.subr.mxu0 0.0
  %3520 = vmatpush1.msra.mxu0 0.0
  %3521 = vmatprep.subr.mxu0 0.0
  %3522 = vmatpush1.msra.mxu0 0.0
  %3523 = vmatprep.subr.mxu0 0.0
  %3524 = vmatpush1.msra.mxu0 %v3177
  %3525 = vmatprep.subr.mxu0 0.0
  %3526 = vmatpush1.msra.mxu0 %v3176
  %3527 = vmatprep.subr.mxu0 0.0
  %3528 = vmatpush1.msra.mxu0 %v3175
  %3529 = vmatprep.subr.mxu0 0.0
  %3530 = vmatpush2.msra.mxu0 0.0
  %3531 = vmatprep.subr.mxu0 0.0
  %3532 = vmatpush2.msra.mxu0 0.0
  %3533 = vmatprep.subr.mxu0 0.0
  %3534 = vmatpush2.msra.mxu0 0.0
  %3535 = vmatprep.subr.mxu0 0.0
  %3536 = vmatpush2.msra.mxu0 0.0
  %3537 = vmatprep.subr.mxu0 0.0
  %3538 = vmatpush2.msra.mxu0 0.0
  %3539 = vmatprep.subr.mxu0 0.0
  %3540 = vmatpush2.msra.mxu0 0.0
  %3541 = vmatprep.subr.mxu0 0.0
  %3542 = vmatpush2.msra.mxu0 0.0
  %3543 = vmatprep.subr.mxu0 0.0
  %3544 = vmatpush2.msra.mxu0 0.0
  %3545 = vmatprep.subr.mxu0 0.0
  %3546 = vmatpush2.msra.mxu0 0.0
  %3547 = vmatprep.subr.mxu0 0.0
  %3548 = vmatpush2.msra.mxu0 0.0
  %3549 = vmatprep.subr.mxu0 0.0
  %3550 = vmatpush2.msra.mxu0 0.0
  %3551 = vmatprep.subr.mxu0 0.0
  %3552 = vmatpush2.msra.mxu0 0.0
  %3553 = vmatprep.subr.mxu0 0.0
  %3554 = vmatpush2.msra.mxu0 0.0
  %3555 = vmatprep.subr.mxu0 0.0
  %3556 = vmatpush2.msra.mxu0 0.0
  %3557 = vmatprep.subr.mxu0 0.0
  %3558 = vmatpush2.msra.mxu0 0.0
  %3559 = vmatprep.subr.mxu0 0.0
  %3560 = vmatpush2.msra.mxu0 0.0
  %3561 = vmatprep.mubr.f32.mxu0 0.0
  %3562 = vmatmul.mubr.f32.gmra.mxu0 %v3495
  %v3563 = vpop.f32.mrf.mxu0
  %v3564 = vadd.f32 0.0, %v3563
  %v3565 = vpop.f32.mrf.mxu0
  %3566 = vdwg.mxu0
  %s3567 = scalar_lea.vmem %s7, 128
  %v3568 = vld [vmem:[%s3567] sm:$0xff]
  %v3569 = vld [vmem:[%s3567 + $0x8] sm:$0xff]
  %v3570 = vld [vmem:[%s3567 + $0x10] sm:$0xff]
  %v3571 = vld [vmem:[%s3567 + $0x18] sm:$0xff]
  %v3572 = vld [vmem:[%s3567 + $0x20] sm:$0xff]
  %v3573 = vld [vmem:[%s3567 + $0x28] sm:$0xff]
  %v3574 = vld [vmem:[%s3567 + $0x30] sm:$0xff]
  %v3575 = vld [vmem:[%s3567 + $0x38] sm:$0xff]
  %v3577 = vsel %vm3345, %v3564, 0
  %3579 = vmatprep.subr.mxu0 0.0
  %3580 = vmatpush1.msra.mxu0 0.0
  %3581 = vmatprep.subr.mxu0 0.0
  %3582 = vmatpush1.msra.mxu0 0.0
  %3583 = vmatprep.subr.mxu0 0.0
  %3584 = vmatpush1.msra.mxu0 0.0
  %3585 = vmatprep.subr.mxu0 0.0
  %3586 = vmatpush1.msra.mxu0 0.0
  %3587 = vmatprep.subr.mxu0 0.0
  %3588 = vmatpush1.msra.mxu0 0.0
  %3589 = vmatprep.subr.mxu0 0.0
  %3590 = vmatpush1.msra.mxu0 0.0
  %3591 = vmatprep.subr.mxu0 0.0
  %3592 = vmatpush1.msra.mxu0 0.0
  %3593 = vmatprep.subr.mxu0 0.0
  %3594 = vmatpush1.msra.mxu0 0.0
  %3595 = vmatprep.subr.mxu0 0.0
  %3596 = vmatpush1.msra.mxu0 %v3575
  %3597 = vmatprep.subr.mxu0 0.0
  %3598 = vmatpush1.msra.mxu0 %v3574
  %3599 = vmatprep.subr.mxu0 0.0
  %3600 = vmatpush1.msra.mxu0 %v3573
  %3601 = vmatprep.subr.mxu0 0.0
  %3602 = vmatpush1.msra.mxu0 %v3572
  %3603 = vmatprep.subr.mxu0 0.0
  %3604 = vmatpush1.msra.mxu0 %v3571
  %3605 = vmatprep.subr.mxu0 0.0
  %3606 = vmatpush1.msra.mxu0 %v3570
  %3607 = vmatprep.subr.mxu0 0.0
  %3608 = vmatpush1.msra.mxu0 %v3569
  %3609 = vmatprep.subr.mxu0 0.0
  %3610 = vmatpush1.msra.mxu0 %v3568
  %3611 = vmatprep.subr.mxu0 0.0
  %3612 = vmatpush2.msra.mxu0 0.0
  %3613 = vmatprep.subr.mxu0 0.0
  %3614 = vmatpush2.msra.mxu0 0.0
  %3615 = vmatprep.subr.mxu0 0.0
  %3616 = vmatpush2.msra.mxu0 0.0
  %3617 = vmatprep.subr.mxu0 0.0
  %3618 = vmatpush2.msra.mxu0 0.0
  %3619 = vmatprep.subr.mxu0 0.0
  %3620 = vmatpush2.msra.mxu0 0.0
  %3621 = vmatprep.subr.mxu0 0.0
  %3622 = vmatpush2.msra.mxu0 0.0
  %3623 = vmatprep.subr.mxu0 0.0
  %3624 = vmatpush2.msra.mxu0 0.0
  %3625 = vmatprep.subr.mxu0 0.0
  %3626 = vmatpush2.msra.mxu0 0.0
  %3627 = vmatprep.subr.mxu0 0.0
  %3628 = vmatpush2.msra.mxu0 0.0
  %3629 = vmatprep.subr.mxu0 0.0
  %3630 = vmatpush2.msra.mxu0 0.0
  %3631 = vmatprep.subr.mxu0 0.0
  %3632 = vmatpush2.msra.mxu0 0.0
  %3633 = vmatprep.subr.mxu0 0.0
  %3634 = vmatpush2.msra.mxu0 0.0
  %3635 = vmatprep.subr.mxu0 0.0
  %3636 = vmatpush2.msra.mxu0 0.0
  %3637 = vmatprep.subr.mxu0 0.0
  %3638 = vmatpush2.msra.mxu0 0.0
  %3639 = vmatprep.subr.mxu0 0.0
  %3640 = vmatpush2.msra.mxu0 0.0
  %3641 = vmatprep.subr.mxu0 0.0
  %3642 = vmatpush2.msra.mxu0 0.0
  %3643 = vmatprep.mubr.f32.mxu0 0.0
  %3644 = vmatmul.mubr.f32.gmra.mxu0 %v3577
  %v3645 = vpop.f32.mrf.mxu0
  %v3646 = vadd.f32 0.0, %v3645
  %v3647 = vpop.f32.mrf.mxu0
  %3648 = vdwg.mxu0
  %v3649 = vadd.f32 %v3489, %v3646
  %s3650 = scalar_lea.vmem %s6, 24
  %v3651 = vld [vmem:[%s3650] sm:$0xff]
  %v3653 = vsel %vm3179, %v3651, 0
  %3655 = vmatprep.subr.mxu0 0.0
  %3656 = vmatpush1.msra.mxu0 0.0
  %3657 = vmatprep.subr.mxu0 0.0
  %3658 = vmatpush1.msra.mxu0 0.0
  %3659 = vmatprep.subr.mxu0 0.0
  %3660 = vmatpush1.msra.mxu0 0.0
  %3661 = vmatprep.subr.mxu0 0.0
  %3662 = vmatpush1.msra.mxu0 0.0
  %3663 = vmatprep.subr.mxu0 0.0
  %3664 = vmatpush1.msra.mxu0 0.0
  %3665 = vmatprep.subr.mxu0 0.0
  %3666 = vmatpush1.msra.mxu0 0.0
  %3667 = vmatprep.subr.mxu0 0.0
  %3668 = vmatpush1.msra.mxu0 0.0
  %3669 = vmatprep.subr.mxu0 0.0
  %3670 = vmatpush1.msra.mxu0 0.0
  %3671 = vmatprep.subr.mxu0 0.0
  %3672 = vmatpush1.msra.mxu0 0.0
  %3673 = vmatprep.subr.mxu0 0.0
  %3674 = vmatpush1.msra.mxu0 0.0
  %3675 = vmatprep.subr.mxu0 0.0
  %3676 = vmatpush1.msra.mxu0 0.0
  %3677 = vmatprep.subr.mxu0 0.0
  %3678 = vmatpush1.msra.mxu0 0.0
  %3679 = vmatprep.subr.mxu0 0.0
  %3680 = vmatpush1.msra.mxu0 0.0
  %3681 = vmatprep.subr.mxu0 0.0
  %3682 = vmatpush1.msra.mxu0 %v3177
  %3683 = vmatprep.subr.mxu0 0.0
  %3684 = vmatpush1.msra.mxu0 %v3176
  %3685 = vmatprep.subr.mxu0 0.0
  %3686 = vmatpush1.msra.mxu0 %v3175
  %3687 = vmatprep.subr.mxu0 0.0
  %3688 = vmatpush2.msra.mxu0 0.0
  %3689 = vmatprep.subr.mxu0 0.0
  %3690 = vmatpush2.msra.mxu0 0.0
  %3691 = vmatprep.subr.mxu0 0.0
  %3692 = vmatpush2.msra.mxu0 0.0
  %3693 = vmatprep.subr.mxu0 0.0
  %3694 = vmatpush2.msra.mxu0 0.0
  %3695 = vmatprep.subr.mxu0 0.0
  %3696 = vmatpush2.msra.mxu0 0.0
  %3697 = vmatprep.subr.mxu0 0.0
  %3698 = vmatpush2.msra.mxu0 0.0
  %3699 = vmatprep.subr.mxu0 0.0
  %3700 = vmatpush2.msra.mxu0 0.0
  %3701 = vmatprep.subr.mxu0 0.0
  %3702 = vmatpush2.msra.mxu0 0.0
  %3703 = vmatprep.subr.mxu0 0.0
  %3704 = vmatpush2.msra.mxu0 0.0
  %3705 = vmatprep.subr.mxu0 0.0
  %3706 = vmatpush2.msra.mxu0 0.0
  %3707 = vmatprep.subr.mxu0 0.0
  %3708 = vmatpush2.msra.mxu0 0.0
  %3709 = vmatprep.subr.mxu0 0.0
  %3710 = vmatpush2.msra.mxu0 0.0
  %3711 = vmatprep.subr.mxu0 0.0
  %3712 = vmatpush2.msra.mxu0 0.0
  %3713 = vmatprep.subr.mxu0 0.0
  %3714 = vmatpush2.msra.mxu0 0.0
  %3715 = vmatprep.subr.mxu0 0.0
  %3716 = vmatpush2.msra.mxu0 0.0
  %3717 = vmatprep.subr.mxu0 0.0
  %3718 = vmatpush2.msra.mxu0 0.0
  %3719 = vmatprep.mubr.f32.mxu0 0.0
  %3720 = vmatmul.mubr.f32.gmra.mxu0 %v3653
  %v3721 = vpop.f32.mrf.mxu0
  %v3722 = vadd.f32 0.0, %v3721
  %v3723 = vpop.f32.mrf.mxu0
  %3724 = vdwg.mxu0
  %s3725 = scalar_lea.vmem %s7, 192
  %v3726 = vld [vmem:[%s3725] sm:$0xff]
  %v3727 = vld [vmem:[%s3725 + $0x8] sm:$0xff]
  %v3728 = vld [vmem:[%s3725 + $0x10] sm:$0xff]
  %v3729 = vld [vmem:[%s3725 + $0x18] sm:$0xff]
  %v3730 = vld [vmem:[%s3725 + $0x20] sm:$0xff]
  %v3731 = vld [vmem:[%s3725 + $0x28] sm:$0xff]
  %v3732 = vld [vmem:[%s3725 + $0x30] sm:$0xff]
  %v3733 = vld [vmem:[%s3725 + $0x38] sm:$0xff]
  %v3735 = vsel %vm3345, %v3722, 0
  %3737 = vmatprep.subr.mxu0 0.0
  %3738 = vmatpush1.msra.mxu0 0.0
  %3739 = vmatprep.subr.mxu0 0.0
  %3740 = vmatpush1.msra.mxu0 0.0
  %3741 = vmatprep.subr.mxu0 0.0
  %3742 = vmatpush1.msra.mxu0 0.0
  %3743 = vmatprep.subr.mxu0 0.0
  %3744 = vmatpush1.msra.mxu0 0.0
  %3745 = vmatprep.subr.mxu0 0.0
  %3746 = vmatpush1.msra.mxu0 0.0
  %3747 = vmatprep.subr.mxu0 0.0
  %3748 = vmatpush1.msra.mxu0 0.0
  %3749 = vmatprep.subr.mxu0 0.0
  %3750 = vmatpush1.msra.mxu0 0.0
  %3751 = vmatprep.subr.mxu0 0.0
  %3752 = vmatpush1.msra.mxu0 0.0
  %3753 = vmatprep.subr.mxu0 0.0
  %3754 = vmatpush1.msra.mxu0 %v3733
  %3755 = vmatprep.subr.mxu0 0.0
  %3756 = vmatpush1.msra.mxu0 %v3732
  %3757 = vmatprep.subr.mxu0 0.0
  %3758 = vmatpush1.msra.mxu0 %v3731
  %3759 = vmatprep.subr.mxu0 0.0
  %3760 = vmatpush1.msra.mxu0 %v3730
  %3761 = vmatprep.subr.mxu0 0.0
  %3762 = vmatpush1.msra.mxu0 %v3729
  %3763 = vmatprep.subr.mxu0 0.0
  %3764 = vmatpush1.msra.mxu0 %v3728
  %3765 = vmatprep.subr.mxu0 0.0
  %3766 = vmatpush1.msra.mxu0 %v3727
  %3767 = vmatprep.subr.mxu0 0.0
  %3768 = vmatpush1.msra.mxu0 %v3726
  %3769 = vmatprep.subr.mxu0 0.0
  %3770 = vmatpush2.msra.mxu0 0.0
  %3771 = vmatprep.subr.mxu0 0.0
  %3772 = vmatpush2.msra.mxu0 0.0
  %3773 = vmatprep.subr.mxu0 0.0
  %3774 = vmatpush2.msra.mxu0 0.0
  %3775 = vmatprep.subr.mxu0 0.0
  %3776 = vmatpush2.msra.mxu0 0.0
  %3777 = vmatprep.subr.mxu0 0.0
  %3778 = vmatpush2.msra.mxu0 0.0
  %3779 = vmatprep.subr.mxu0 0.0
  %3780 = vmatpush2.msra.mxu0 0.0
  %3781 = vmatprep.subr.mxu0 0.0
  %3782 = vmatpush2.msra.mxu0 0.0
  %3783 = vmatprep.subr.mxu0 0.0
  %3784 = vmatpush2.msra.mxu0 0.0
  %3785 = vmatprep.subr.mxu0 0.0
  %3786 = vmatpush2.msra.mxu0 0.0
  %3787 = vmatprep.subr.mxu0 0.0
  %3788 = vmatpush2.msra.mxu0 0.0
  %3789 = vmatprep.subr.mxu0 0.0
  %3790 = vmatpush2.msra.mxu0 0.0
  %3791 = vmatprep.subr.mxu0 0.0
  %3792 = vmatpush2.msra.mxu0 0.0
  %3793 = vmatprep.subr.mxu0 0.0
  %3794 = vmatpush2.msra.mxu0 0.0
  %3795 = vmatprep.subr.mxu0 0.0
  %3796 = vmatpush2.msra.mxu0 0.0
  %3797 = vmatprep.subr.mxu0 0.0
  %3798 = vmatpush2.msra.mxu0 0.0
  %3799 = vmatprep.subr.mxu0 0.0
  %3800 = vmatpush2.msra.mxu0 0.0
  %3801 = vmatprep.mubr.f32.mxu0 0.0
  %3802 = vmatmul.mubr.f32.gmra.mxu0 %v3735
  %v3803 = vpop.f32.mrf.mxu0
  %v3804 = vadd.f32 0.0, %v3803
  %v3805 = vpop.f32.mrf.mxu0
  %3806 = vdwg.mxu0
  %v3807 = vadd.f32 %v3649, %v3804
  %s3808 = scalar_lea.vmem %s6, 32
  %v3809 = vld [vmem:[%s3808] sm:$0xff]
  %v3811 = vsel %vm3179, %v3809, 0
  %3813 = vmatprep.subr.mxu0 0.0
  %3814 = vmatpush1.msra.mxu0 0.0
  %3815 = vmatprep.subr.mxu0 0.0
  %3816 = vmatpush1.msra.mxu0 0.0
  %3817 = vmatprep.subr.mxu0 0.0
  %3818 = vmatpush1.msra.mxu0 0.0
  %3819 = vmatprep.subr.mxu0 0.0
  %3820 = vmatpush1.msra.mxu0 0.0
  %3821 = vmatprep.subr.mxu0 0.0
  %3822 = vmatpush1.msra.mxu0 0.0
  %3823 = vmatprep.subr.mxu0 0.0
  %3824 = vmatpush1.msra.mxu0 0.0
  %3825 = vmatprep.subr.mxu0 0.0
  %3826 = vmatpush1.msra.mxu0 0.0
  %3827 = vmatprep.subr.mxu0 0.0
  %3828 = vmatpush1.msra.mxu0 0.0
  %3829 = vmatprep.subr.mxu0 0.0
  %3830 = vmatpush1.msra.mxu0 0.0
  %3831 = vmatprep.subr.mxu0 0.0
  %3832 = vmatpush1.msra.mxu0 0.0
  %3833 = vmatprep.subr.mxu0 0.0
  %3834 = vmatpush1.msra.mxu0 0.0
  %3835 = vmatprep.subr.mxu0 0.0
  %3836 = vmatpush1.msra.mxu0 0.0
  %3837 = vmatprep.subr.mxu0 0.0
  %3838 = vmatpush1.msra.mxu0 0.0
  %3839 = vmatprep.subr.mxu0 0.0
  %3840 = vmatpush1.msra.mxu0 %v3177
  %3841 = vmatprep.subr.mxu0 0.0
  %3842 = vmatpush1.msra.mxu0 %v3176
  %3843 = vmatprep.subr.mxu0 0.0
  %3844 = vmatpush1.msra.mxu0 %v3175
  %3845 = vmatprep.subr.mxu0 0.0
  %3846 = vmatpush2.msra.mxu0 0.0
  %3847 = vmatprep.subr.mxu0 0.0
  %3848 = vmatpush2.msra.mxu0 0.0
  %3849 = vmatprep.subr.mxu0 0.0
  %3850 = vmatpush2.msra.mxu0 0.0
  %3851 = vmatprep.subr.mxu0 0.0
  %3852 = vmatpush2.msra.mxu0 0.0
  %3853 = vmatprep.subr.mxu0 0.0
  %3854 = vmatpush2.msra.mxu0 0.0
  %3855 = vmatprep.subr.mxu0 0.0
  %3856 = vmatpush2.msra.mxu0 0.0
  %3857 = vmatprep.subr.mxu0 0.0
  %3858 = vmatpush2.msra.mxu0 0.0
  %3859 = vmatprep.subr.mxu0 0.0
  %3860 = vmatpush2.msra.mxu0 0.0
  %3861 = vmatprep.subr.mxu0 0.0
  %3862 = vmatpush2.msra.mxu0 0.0
  %3863 = vmatprep.subr.mxu0 0.0
  %3864 = vmatpush2.msra.mxu0 0.0
  %3865 = vmatprep.subr.mxu0 0.0
  %3866 = vmatpush2.msra.mxu0 0.0
  %3867 = vmatprep.subr.mxu0 0.0
  %3868 = vmatpush2.msra.mxu0 0.0
  %3869 = vmatprep.subr.mxu0 0.0
  %3870 = vmatpush2.msra.mxu0 0.0
  %3871 = vmatprep.subr.mxu0 0.0
  %3872 = vmatpush2.msra.mxu0 0.0
  %3873 = vmatprep.subr.mxu0 0.0
  %3874 = vmatpush2.msra.mxu0 0.0
  %3875 = vmatprep.subr.mxu0 0.0
  %3876 = vmatpush2.msra.mxu0 0.0
  %3877 = vmatprep.mubr.f32.mxu0 0.0
  %3878 = vmatmul.mubr.f32.gmra.mxu0 %v3811
  %v3879 = vpop.f32.mrf.mxu0
  %v3880 = vadd.f32 0.0, %v3879
  %v3881 = vpop.f32.mrf.mxu0
  %3882 = vdwg.mxu0
  %s3883 = scalar_lea.vmem %s7, 256
  %v3884 = vld [vmem:[%s3883] sm:$0xff]
  %v3885 = vld [vmem:[%s3883 + $0x8] sm:$0xff]
  %v3886 = vld [vmem:[%s3883 + $0x10] sm:$0xff]
  %v3887 = vld [vmem:[%s3883 + $0x18] sm:$0xff]
  %v3888 = vld [vmem:[%s3883 + $0x20] sm:$0xff]
  %v3889 = vld [vmem:[%s3883 + $0x28] sm:$0xff]
  %v3890 = vld [vmem:[%s3883 + $0x30] sm:$0xff]
  %v3891 = vld [vmem:[%s3883 + $0x38] sm:$0xff]
  %v3893 = vsel %vm3345, %v3880, 0
  %3895 = vmatprep.subr.mxu0 0.0
  %3896 = vmatpush1.msra.mxu0 0.0
  %3897 = vmatprep.subr.mxu0 0.0
  %3898 = vmatpush1.msra.mxu0 0.0
  %3899 = vmatprep.subr.mxu0 0.0
  %3900 = vmatpush1.msra.mxu0 0.0
  %3901 = vmatprep.subr.mxu0 0.0
  %3902 = vmatpush1.msra.mxu0 0.0
  %3903 = vmatprep.subr.mxu0 0.0
  %3904 = vmatpush1.msra.mxu0 0.0
  %3905 = vmatprep.subr.mxu0 0.0
  %3906 = vmatpush1.msra.mxu0 0.0
  %3907 = vmatprep.subr.mxu0 0.0
  %3908 = vmatpush1.msra.mxu0 0.0
  %3909 = vmatprep.subr.mxu0 0.0
  %3910 = vmatpush1.msra.mxu0 0.0
  %3911 = vmatprep.subr.mxu0 0.0
  %3912 = vmatpush1.msra.mxu0 %v3891
  %3913 = vmatprep.subr.mxu0 0.0
  %3914 = vmatpush1.msra.mxu0 %v3890
  %3915 = vmatprep.subr.mxu0 0.0
  %3916 = vmatpush1.msra.mxu0 %v3889
  %3917 = vmatprep.subr.mxu0 0.0
  %3918 = vmatpush1.msra.mxu0 %v3888
  %3919 = vmatprep.subr.mxu0 0.0
  %3920 = vmatpush1.msra.mxu0 %v3887
  %3921 = vmatprep.subr.mxu0 0.0
  %3922 = vmatpush1.msra.mxu0 %v3886
  %3923 = vmatprep.subr.mxu0 0.0
  %3924 = vmatpush1.msra.mxu0 %v3885
  %3925 = vmatprep.subr.mxu0 0.0
  %3926 = vmatpush1.msra.mxu0 %v3884
  %3927 = vmatprep.subr.mxu0 0.0
  %3928 = vmatpush2.msra.mxu0 0.0
  %3929 = vmatprep.subr.mxu0 0.0
  %3930 = vmatpush2.msra.mxu0 0.0
  %3931 = vmatprep.subr.mxu0 0.0
  %3932 = vmatpush2.msra.mxu0 0.0
  %3933 = vmatprep.subr.mxu0 0.0
  %3934 = vmatpush2.msra.mxu0 0.0
  %3935 = vmatprep.subr.mxu0 0.0
  %3936 = vmatpush2.msra.mxu0 0.0
  %3937 = vmatprep.subr.mxu0 0.0
  %3938 = vmatpush2.msra.mxu0 0.0
  %3939 = vmatprep.subr.mxu0 0.0
  %3940 = vmatpush2.msra.mxu0 0.0
  %3941 = vmatprep.subr.mxu0 0.0
  %3942 = vmatpush2.msra.mxu0 0.0
  %3943 = vmatprep.subr.mxu0 0.0
  %3944 = vmatpush2.msra.mxu0 0.0
  %3945 = vmatprep.subr.mxu0 0.0
  %3946 = vmatpush2.msra.mxu0 0.0
  %3947 = vmatprep.subr.mxu0 0.0
  %3948 = vmatpush2.msra.mxu0 0.0
  %3949 = vmatprep.subr.mxu0 0.0
  %3950 = vmatpush2.msra.mxu0 0.0
  %3951 = vmatprep.subr.mxu0 0.0
  %3952 = vmatpush2.msra.mxu0 0.0
  %3953 = vmatprep.subr.mxu0 0.0
  %3954 = vmatpush2.msra.mxu0 0.0
  %3955 = vmatprep.subr.mxu0 0.0
  %3956 = vmatpush2.msra.mxu0 0.0
  %3957 = vmatprep.subr.mxu0 0.0
  %3958 = vmatpush2.msra.mxu0 0.0
  %3959 = vmatprep.mubr.f32.mxu0 0.0
  %3960 = vmatmul.mubr.f32.gmra.mxu0 %v3893
  %v3961 = vpop.f32.mrf.mxu0
  %v3962 = vadd.f32 0.0, %v3961
  %v3963 = vpop.f32.mrf.mxu0
  %3964 = vdwg.mxu0
  %v3965 = vadd.f32 %v3807, %v3962
  %s3966 = scalar_lea.vmem %s6, 40
  %v3967 = vld [vmem:[%s3966] sm:$0xff]
  %v3969 = vsel %vm3179, %v3967, 0
  %3971 = vmatprep.subr.mxu0 0.0
  %3972 = vmatpush1.msra.mxu0 0.0
  %3973 = vmatprep.subr.mxu0 0.0
  %3974 = vmatpush1.msra.mxu0 0.0
  %3975 = vmatprep.subr.mxu0 0.0
  %3976 = vmatpush1.msra.mxu0 0.0
  %3977 = vmatprep.subr.mxu0 0.0
  %3978 = vmatpush1.msra.mxu0 0.0
  %3979 = vmatprep.subr.mxu0 0.0
  %3980 = vmatpush1.msra.mxu0 0.0
  %3981 = vmatprep.subr.mxu0 0.0
  %3982 = vmatpush1.msra.mxu0 0.0
  %3983 = vmatprep.subr.mxu0 0.0
  %3984 = vmatpush1.msra.mxu0 0.0
  %3985 = vmatprep.subr.mxu0 0.0
  %3986 = vmatpush1.msra.mxu0 0.0
  %3987 = vmatprep.subr.mxu0 0.0
  %3988 = vmatpush1.msra.mxu0 0.0
  %3989 = vmatprep.subr.mxu0 0.0
  %3990 = vmatpush1.msra.mxu0 0.0
  %3991 = vmatprep.subr.mxu0 0.0
  %3992 = vmatpush1.msra.mxu0 0.0
  %3993 = vmatprep.subr.mxu0 0.0
  %3994 = vmatpush1.msra.mxu0 0.0
  %3995 = vmatprep.subr.mxu0 0.0
  %3996 = vmatpush1.msra.mxu0 0.0
  %3997 = vmatprep.subr.mxu0 0.0
  %3998 = vmatpush1.msra.mxu0 %v3177
  %3999 = vmatprep.subr.mxu0 0.0
  %4000 = vmatpush1.msra.mxu0 %v3176
  %4001 = vmatprep.subr.mxu0 0.0
  %4002 = vmatpush1.msra.mxu0 %v3175
  %4003 = vmatprep.subr.mxu0 0.0
  %4004 = vmatpush2.msra.mxu0 0.0
  %4005 = vmatprep.subr.mxu0 0.0
  %4006 = vmatpush2.msra.mxu0 0.0
  %4007 = vmatprep.subr.mxu0 0.0
  %4008 = vmatpush2.msra.mxu0 0.0
  %4009 = vmatprep.subr.mxu0 0.0
  %4010 = vmatpush2.msra.mxu0 0.0
  %4011 = vmatprep.subr.mxu0 0.0
  %4012 = vmatpush2.msra.mxu0 0.0
  %4013 = vmatprep.subr.mxu0 0.0
  %4014 = vmatpush2.msra.mxu0 0.0
  %4015 = vmatprep.subr.mxu0 0.0
  %4016 = vmatpush2.msra.mxu0 0.0
  %4017 = vmatprep.subr.mxu0 0.0
  %4018 = vmatpush2.msra.mxu0 0.0
  %4019 = vmatprep.subr.mxu0 0.0
  %4020 = vmatpush2.msra.mxu0 0.0
  %4021 = vmatprep.subr.mxu0 0.0
  %4022 = vmatpush2.msra.mxu0 0.0
  %4023 = vmatprep.subr.mxu0 0.0
  %4024 = vmatpush2.msra.mxu0 0.0
  %4025 = vmatprep.subr.mxu0 0.0
  %4026 = vmatpush2.msra.mxu0 0.0
  %4027 = vmatprep.subr.mxu0 0.0
  %4028 = vmatpush2.msra.mxu0 0.0
  %4029 = vmatprep.subr.mxu0 0.0
  %4030 = vmatpush2.msra.mxu0 0.0
  %4031 = vmatprep.subr.mxu0 0.0
  %4032 = vmatpush2.msra.mxu0 0.0
  %4033 = vmatprep.subr.mxu0 0.0
  %4034 = vmatpush2.msra.mxu0 0.0
  %4035 = vmatprep.mubr.f32.mxu0 0.0
  %4036 = vmatmul.mubr.f32.gmra.mxu0 %v3969
  %v4037 = vpop.f32.mrf.mxu0
  %v4038 = vadd.f32 0.0, %v4037
  %v4039 = vpop.f32.mrf.mxu0
  %4040 = vdwg.mxu0
  %s4041 = scalar_lea.vmem %s7, 320
  %v4042 = vld [vmem:[%s4041] sm:$0xff]
  %v4043 = vld [vmem:[%s4041 + $0x8] sm:$0xff]
  %v4044 = vld [vmem:[%s4041 + $0x10] sm:$0xff]
  %v4045 = vld [vmem:[%s4041 + $0x18] sm:$0xff]
  %v4046 = vld [vmem:[%s4041 + $0x20] sm:$0xff]
  %v4047 = vld [vmem:[%s4041 + $0x28] sm:$0xff]
  %v4048 = vld [vmem:[%s4041 + $0x30] sm:$0xff]
  %v4049 = vld [vmem:[%s4041 + $0x38] sm:$0xff]
  %v4051 = vsel %vm3345, %v4038, 0
  %4053 = vmatprep.subr.mxu0 0.0
  %4054 = vmatpush1.msra.mxu0 0.0
  %4055 = vmatprep.subr.mxu0 0.0
  %4056 = vmatpush1.msra.mxu0 0.0
  %4057 = vmatprep.subr.mxu0 0.0
  %4058 = vmatpush1.msra.mxu0 0.0
  %4059 = vmatprep.subr.mxu0 0.0
  %4060 = vmatpush1.msra.mxu0 0.0
  %4061 = vmatprep.subr.mxu0 0.0
  %4062 = vmatpush1.msra.mxu0 0.0
  %4063 = vmatprep.subr.mxu0 0.0
  %4064 = vmatpush1.msra.mxu0 0.0
  %4065 = vmatprep.subr.mxu0 0.0
  %4066 = vmatpush1.msra.mxu0 0.0
  %4067 = vmatprep.subr.mxu0 0.0
  %4068 = vmatpush1.msra.mxu0 0.0
  %4069 = vmatprep.subr.mxu0 0.0
  %4070 = vmatpush1.msra.mxu0 %v4049
  %4071 = vmatprep.subr.mxu0 0.0
  %4072 = vmatpush1.msra.mxu0 %v4048
  %4073 = vmatprep.subr.mxu0 0.0
  %4074 = vmatpush1.msra.mxu0 %v4047
  %4075 = vmatprep.subr.mxu0 0.0
  %4076 = vmatpush1.msra.mxu0 %v4046
  %4077 = vmatprep.subr.mxu0 0.0
  %4078 = vmatpush1.msra.mxu0 %v4045
  %4079 = vmatprep.subr.mxu0 0.0
  %4080 = vmatpush1.msra.mxu0 %v4044
  %4081 = vmatprep.subr.mxu0 0.0
  %4082 = vmatpush1.msra.mxu0 %v4043
  %4083 = vmatprep.subr.mxu0 0.0
  %4084 = vmatpush1.msra.mxu0 %v4042
  %4085 = vmatprep.subr.mxu0 0.0
  %4086 = vmatpush2.msra.mxu0 0.0
  %4087 = vmatprep.subr.mxu0 0.0
  %4088 = vmatpush2.msra.mxu0 0.0
  %4089 = vmatprep.subr.mxu0 0.0
  %4090 = vmatpush2.msra.mxu0 0.0
  %4091 = vmatprep.subr.mxu0 0.0
  %4092 = vmatpush2.msra.mxu0 0.0
  %4093 = vmatprep.subr.mxu0 0.0
  %4094 = vmatpush2.msra.mxu0 0.0
  %4095 = vmatprep.subr.mxu0 0.0
  %4096 = vmatpush2.msra.mxu0 0.0
  %4097 = vmatprep.subr.mxu0 0.0
  %4098 = vmatpush2.msra.mxu0 0.0
  %4099 = vmatprep.subr.mxu0 0.0
  %4100 = vmatpush2.msra.mxu0 0.0
  %4101 = vmatprep.subr.mxu0 0.0
  %4102 = vmatpush2.msra.mxu0 0.0
  %4103 = vmatprep.subr.mxu0 0.0
  %4104 = vmatpush2.msra.mxu0 0.0
  %4105 = vmatprep.subr.mxu0 0.0
  %4106 = vmatpush2.msra.mxu0 0.0
  %4107 = vmatprep.subr.mxu0 0.0
  %4108 = vmatpush2.msra.mxu0 0.0
  %4109 = vmatprep.subr.mxu0 0.0
  %4110 = vmatpush2.msra.mxu0 0.0
  %4111 = vmatprep.subr.mxu0 0.0
  %4112 = vmatpush2.msra.mxu0 0.0
  %4113 = vmatprep.subr.mxu0 0.0
  %4114 = vmatpush2.msra.mxu0 0.0
  %4115 = vmatprep.subr.mxu0 0.0
  %4116 = vmatpush2.msra.mxu0 0.0
  %4117 = vmatprep.mubr.f32.mxu0 0.0
  %4118 = vmatmul.mubr.f32.gmra.mxu0 %v4051
  %v4119 = vpop.f32.mrf.mxu0
  %v4120 = vadd.f32 0.0, %v4119
  %v4121 = vpop.f32.mrf.mxu0
  %4122 = vdwg.mxu0
  %v4123 = vadd.f32 %v3965, %v4120
  %s4124 = scalar_lea.vmem %s6, 48
  %v4125 = vld [vmem:[%s4124] sm:$0xff]
  %v4127 = vsel %vm3179, %v4125, 0
  %4129 = vmatprep.subr.mxu0 0.0
  %4130 = vmatpush1.msra.mxu0 0.0
  %4131 = vmatprep.subr.mxu0 0.0
  %4132 = vmatpush1.msra.mxu0 0.0
  %4133 = vmatprep.subr.mxu0 0.0
  %4134 = vmatpush1.msra.mxu0 0.0
  %4135 = vmatprep.subr.mxu0 0.0
  %4136 = vmatpush1.msra.mxu0 0.0
  %4137 = vmatprep.subr.mxu0 0.0
  %4138 = vmatpush1.msra.mxu0 0.0
  %4139 = vmatprep.subr.mxu0 0.0
  %4140 = vmatpush1.msra.mxu0 0.0
  %4141 = vmatprep.subr.mxu0 0.0
  %4142 = vmatpush1.msra.mxu0 0.0
  %4143 = vmatprep.subr.mxu0 0.0
  %4144 = vmatpush1.msra.mxu0 0.0
  %4145 = vmatprep.subr.mxu0 0.0
  %4146 = vmatpush1.msra.mxu0 0.0
  %4147 = vmatprep.subr.mxu0 0.0
  %4148 = vmatpush1.msra.mxu0 0.0
  %4149 = vmatprep.subr.mxu0 0.0
  %4150 = vmatpush1.msra.mxu0 0.0
  %4151 = vmatprep.subr.mxu0 0.0
  %4152 = vmatpush1.msra.mxu0 0.0
  %4153 = vmatprep.subr.mxu0 0.0
  %4154 = vmatpush1.msra.mxu0 0.0
  %4155 = vmatprep.subr.mxu0 0.0
  %4156 = vmatpush1.msra.mxu0 %v3177
  %4157 = vmatprep.subr.mxu0 0.0
  %4158 = vmatpush1.msra.mxu0 %v3176
  %4159 = vmatprep.subr.mxu0 0.0
  %4160 = vmatpush1.msra.mxu0 %v3175
  %4161 = vmatprep.subr.mxu0 0.0
  %4162 = vmatpush2.msra.mxu0 0.0
  %4163 = vmatprep.subr.mxu0 0.0
  %4164 = vmatpush2.msra.mxu0 0.0
  %4165 = vmatprep.subr.mxu0 0.0
  %4166 = vmatpush2.msra.mxu0 0.0
  %4167 = vmatprep.subr.mxu0 0.0
  %4168 = vmatpush2.msra.mxu0 0.0
  %4169 = vmatprep.subr.mxu0 0.0
  %4170 = vmatpush2.msra.mxu0 0.0
  %4171 = vmatprep.subr.mxu0 0.0
  %4172 = vmatpush2.msra.mxu0 0.0
  %4173 = vmatprep.subr.mxu0 0.0
  %4174 = vmatpush2.msra.mxu0 0.0
  %4175 = vmatprep.subr.mxu0 0.0
  %4176 = vmatpush2.msra.mxu0 0.0
  %4177 = vmatprep.subr.mxu0 0.0
  %4178 = vmatpush2.msra.mxu0 0.0
  %4179 = vmatprep.subr.mxu0 0.0
  %4180 = vmatpush2.msra.mxu0 0.0
  %4181 = vmatprep.subr.mxu0 0.0
  %4182 = vmatpush2.msra.mxu0 0.0
  %4183 = vmatprep.subr.mxu0 0.0
  %4184 = vmatpush2.msra.mxu0 0.0
  %4185 = vmatprep.subr.mxu0 0.0
  %4186 = vmatpush2.msra.mxu0 0.0
  %4187 = vmatprep.subr.mxu0 0.0
  %4188 = vmatpush2.msra.mxu0 0.0
  %4189 = vmatprep.subr.mxu0 0.0
  %4190 = vmatpush2.msra.mxu0 0.0
  %4191 = vmatprep.subr.mxu0 0.0
  %4192 = vmatpush2.msra.mxu0 0.0
  %4193 = vmatprep.mubr.f32.mxu0 0.0
  %4194 = vmatmul.mubr.f32.gmra.mxu0 %v4127
  %v4195 = vpop.f32.mrf.mxu0
  %v4196 = vadd.f32 0.0, %v4195
  %v4197 = vpop.f32.mrf.mxu0
  %4198 = vdwg.mxu0
  %s4199 = scalar_lea.vmem %s7, 384
  %v4200 = vld [vmem:[%s4199] sm:$0xff]
  %v4201 = vld [vmem:[%s4199 + $0x8] sm:$0xff]
  %v4202 = vld [vmem:[%s4199 + $0x10] sm:$0xff]
  %v4203 = vld [vmem:[%s4199 + $0x18] sm:$0xff]
  %v4204 = vld [vmem:[%s4199 + $0x20] sm:$0xff]
  %v4205 = vld [vmem:[%s4199 + $0x28] sm:$0xff]
  %v4206 = vld [vmem:[%s4199 + $0x30] sm:$0xff]
  %v4207 = vld [vmem:[%s4199 + $0x38] sm:$0xff]
  %v4209 = vsel %vm3345, %v4196, 0
  %4211 = vmatprep.subr.mxu0 0.0
  %4212 = vmatpush1.msra.mxu0 0.0
  %4213 = vmatprep.subr.mxu0 0.0
  %4214 = vmatpush1.msra.mxu0 0.0
  %4215 = vmatprep.subr.mxu0 0.0
  %4216 = vmatpush1.msra.mxu0 0.0
  %4217 = vmatprep.subr.mxu0 0.0
  %4218 = vmatpush1.msra.mxu0 0.0
  %4219 = vmatprep.subr.mxu0 0.0
  %4220 = vmatpush1.msra.mxu0 0.0
  %4221 = vmatprep.subr.mxu0 0.0
  %4222 = vmatpush1.msra.mxu0 0.0
  %4223 = vmatprep.subr.mxu0 0.0
  %4224 = vmatpush1.msra.mxu0 0.0
  %4225 = vmatprep.subr.mxu0 0.0
  %4226 = vmatpush1.msra.mxu0 0.0
  %4227 = vmatprep.subr.mxu0 0.0
  %4228 = vmatpush1.msra.mxu0 %v4207
  %4229 = vmatprep.subr.mxu0 0.0
  %4230 = vmatpush1.msra.mxu0 %v4206
  %4231 = vmatprep.subr.mxu0 0.0
  %4232 = vmatpush1.msra.mxu0 %v4205
  %4233 = vmatprep.subr.mxu0 0.0
  %4234 = vmatpush1.msra.mxu0 %v4204
  %4235 = vmatprep.subr.mxu0 0.0
  %4236 = vmatpush1.msra.mxu0 %v4203
  %4237 = vmatprep.subr.mxu0 0.0
  %4238 = vmatpush1.msra.mxu0 %v4202
  %4239 = vmatprep.subr.mxu0 0.0
  %4240 = vmatpush1.msra.mxu0 %v4201
  %4241 = vmatprep.subr.mxu0 0.0
  %4242 = vmatpush1.msra.mxu0 %v4200
  %4243 = vmatprep.subr.mxu0 0.0
  %4244 = vmatpush2.msra.mxu0 0.0
  %4245 = vmatprep.subr.mxu0 0.0
  %4246 = vmatpush2.msra.mxu0 0.0
  %4247 = vmatprep.subr.mxu0 0.0
  %4248 = vmatpush2.msra.mxu0 0.0
  %4249 = vmatprep.subr.mxu0 0.0
  %4250 = vmatpush2.msra.mxu0 0.0
  %4251 = vmatprep.subr.mxu0 0.0
  %4252 = vmatpush2.msra.mxu0 0.0
  %4253 = vmatprep.subr.mxu0 0.0
  %4254 = vmatpush2.msra.mxu0 0.0
  %4255 = vmatprep.subr.mxu0 0.0
  %4256 = vmatpush2.msra.mxu0 0.0
  %4257 = vmatprep.subr.mxu0 0.0
  %4258 = vmatpush2.msra.mxu0 0.0
  %4259 = vmatprep.subr.mxu0 0.0
  %4260 = vmatpush2.msra.mxu0 0.0
  %4261 = vmatprep.subr.mxu0 0.0
  %4262 = vmatpush2.msra.mxu0 0.0
  %4263 = vmatprep.subr.mxu0 0.0
  %4264 = vmatpush2.msra.mxu0 0.0
  %4265 = vmatprep.subr.mxu0 0.0
  %4266 = vmatpush2.msra.mxu0 0.0
  %4267 = vmatprep.subr.mxu0 0.0
  %4268 = vmatpush2.msra.mxu0 0.0
  %4269 = vmatprep.subr.mxu0 0.0
  %4270 = vmatpush2.msra.mxu0 0.0
  %4271 = vmatprep.subr.mxu0 0.0
  %4272 = vmatpush2.msra.mxu0 0.0
  %4273 = vmatprep.subr.mxu0 0.0
  %4274 = vmatpush2.msra.mxu0 0.0
  %4275 = vmatprep.mubr.f32.mxu0 0.0
  %4276 = vmatmul.mubr.f32.gmra.mxu0 %v4209
  %v4277 = vpop.f32.mrf.mxu0
  %v4278 = vadd.f32 0.0, %v4277
  %v4279 = vpop.f32.mrf.mxu0
  %4280 = vdwg.mxu0
  %v4281 = vadd.f32 %v4123, %v4278
  %s4282 = scalar_lea.vmem %s6, 56
  %v4283 = vld [vmem:[%s4282] sm:$0xff]
  %v4285 = vsel %vm3179, %v4283, 0
  %4287 = vmatprep.subr.mxu0 0.0
  %4288 = vmatpush1.msra.mxu0 0.0
  %4289 = vmatprep.subr.mxu0 0.0
  %4290 = vmatpush1.msra.mxu0 0.0
  %4291 = vmatprep.subr.mxu0 0.0
  %4292 = vmatpush1.msra.mxu0 0.0
  %4293 = vmatprep.subr.mxu0 0.0
  %4294 = vmatpush1.msra.mxu0 0.0
  %4295 = vmatprep.subr.mxu0 0.0
  %4296 = vmatpush1.msra.mxu0 0.0
  %4297 = vmatprep.subr.mxu0 0.0
  %4298 = vmatpush1.msra.mxu0 0.0
  %4299 = vmatprep.subr.mxu0 0.0
  %4300 = vmatpush1.msra.mxu0 0.0
  %4301 = vmatprep.subr.mxu0 0.0
  %4302 = vmatpush1.msra.mxu0 0.0
  %4303 = vmatprep.subr.mxu0 0.0
  %4304 = vmatpush1.msra.mxu0 0.0
  %4305 = vmatprep.subr.mxu0 0.0
  %4306 = vmatpush1.msra.mxu0 0.0
  %4307 = vmatprep.subr.mxu0 0.0
  %4308 = vmatpush1.msra.mxu0 0.0
  %4309 = vmatprep.subr.mxu0 0.0
  %4310 = vmatpush1.msra.mxu0 0.0
  %4311 = vmatprep.subr.mxu0 0.0
  %4312 = vmatpush1.msra.mxu0 0.0
  %4313 = vmatprep.subr.mxu0 0.0
  %4314 = vmatpush1.msra.mxu0 %v3177
  %4315 = vmatprep.subr.mxu0 0.0
  %4316 = vmatpush1.msra.mxu0 %v3176
  %4317 = vmatprep.subr.mxu0 0.0
  %4318 = vmatpush1.msra.mxu0 %v3175
  %4319 = vmatprep.subr.mxu0 0.0
  %4320 = vmatpush2.msra.mxu0 0.0
  %4321 = vmatprep.subr.mxu0 0.0
  %4322 = vmatpush2.msra.mxu0 0.0
  %4323 = vmatprep.subr.mxu0 0.0
  %4324 = vmatpush2.msra.mxu0 0.0
  %4325 = vmatprep.subr.mxu0 0.0
  %4326 = vmatpush2.msra.mxu0 0.0
  %4327 = vmatprep.subr.mxu0 0.0
  %4328 = vmatpush2.msra.mxu0 0.0
  %4329 = vmatprep.subr.mxu0 0.0
  %4330 = vmatpush2.msra.mxu0 0.0
  %4331 = vmatprep.subr.mxu0 0.0
  %4332 = vmatpush2.msra.mxu0 0.0
  %4333 = vmatprep.subr.mxu0 0.0
  %4334 = vmatpush2.msra.mxu0 0.0
  %4335 = vmatprep.subr.mxu0 0.0
  %4336 = vmatpush2.msra.mxu0 0.0
  %4337 = vmatprep.subr.mxu0 0.0
  %4338 = vmatpush2.msra.mxu0 0.0
  %4339 = vmatprep.subr.mxu0 0.0
  %4340 = vmatpush2.msra.mxu0 0.0
  %4341 = vmatprep.subr.mxu0 0.0
  %4342 = vmatpush2.msra.mxu0 0.0
  %4343 = vmatprep.subr.mxu0 0.0
  %4344 = vmatpush2.msra.mxu0 0.0
  %4345 = vmatprep.subr.mxu0 0.0
  %4346 = vmatpush2.msra.mxu0 0.0
  %4347 = vmatprep.subr.mxu0 0.0
  %4348 = vmatpush2.msra.mxu0 0.0
  %4349 = vmatprep.subr.mxu0 0.0
  %4350 = vmatpush2.msra.mxu0 0.0
  %4351 = vmatprep.mubr.f32.mxu0 0.0
  %4352 = vmatmul.mubr.f32.gmra.mxu0 %v4285
  %v4353 = vpop.f32.mrf.mxu0
  %v4354 = vadd.f32 0.0, %v4353
  %v4355 = vpop.f32.mrf.mxu0
  %4356 = vdwg.mxu0
  %s4357 = scalar_lea.vmem %s7, 448
  %v4358 = vld [vmem:[%s4357] sm:$0xff]
  %v4359 = vld [vmem:[%s4357 + $0x8] sm:$0xff]
  %v4360 = vld [vmem:[%s4357 + $0x10] sm:$0xff]
  %v4361 = vld [vmem:[%s4357 + $0x18] sm:$0xff]
  %v4362 = vld [vmem:[%s4357 + $0x20] sm:$0xff]
  %v4363 = vld [vmem:[%s4357 + $0x28] sm:$0xff]
  %v4364 = vld [vmem:[%s4357 + $0x30] sm:$0xff]
  %v4365 = vld [vmem:[%s4357 + $0x38] sm:$0xff]
  %v4367 = vsel %vm3345, %v4354, 0
  %4369 = vmatprep.subr.mxu0 0.0
  %4370 = vmatpush1.msra.mxu0 0.0
  %4371 = vmatprep.subr.mxu0 0.0
  %4372 = vmatpush1.msra.mxu0 0.0
  %4373 = vmatprep.subr.mxu0 0.0
  %4374 = vmatpush1.msra.mxu0 0.0
  %4375 = vmatprep.subr.mxu0 0.0
  %4376 = vmatpush1.msra.mxu0 0.0
  %4377 = vmatprep.subr.mxu0 0.0
  %4378 = vmatpush1.msra.mxu0 0.0
  %4379 = vmatprep.subr.mxu0 0.0
  %4380 = vmatpush1.msra.mxu0 0.0
  %4381 = vmatprep.subr.mxu0 0.0
  %4382 = vmatpush1.msra.mxu0 0.0
  %4383 = vmatprep.subr.mxu0 0.0
  %4384 = vmatpush1.msra.mxu0 0.0
  %4385 = vmatprep.subr.mxu0 0.0
  %4386 = vmatpush1.msra.mxu0 %v4365
  %4387 = vmatprep.subr.mxu0 0.0
  %4388 = vmatpush1.msra.mxu0 %v4364
  %4389 = vmatprep.subr.mxu0 0.0
  %4390 = vmatpush1.msra.mxu0 %v4363
  %4391 = vmatprep.subr.mxu0 0.0
  %4392 = vmatpush1.msra.mxu0 %v4362
  %4393 = vmatprep.subr.mxu0 0.0
  %4394 = vmatpush1.msra.mxu0 %v4361
  %4395 = vmatprep.subr.mxu0 0.0
  %4396 = vmatpush1.msra.mxu0 %v4360
  %4397 = vmatprep.subr.mxu0 0.0
  %4398 = vmatpush1.msra.mxu0 %v4359
  %4399 = vmatprep.subr.mxu0 0.0
  %4400 = vmatpush1.msra.mxu0 %v4358
  %4401 = vmatprep.subr.mxu0 0.0
  %4402 = vmatpush2.msra.mxu0 0.0
  %4403 = vmatprep.subr.mxu0 0.0
  %4404 = vmatpush2.msra.mxu0 0.0
  %4405 = vmatprep.subr.mxu0 0.0
  %4406 = vmatpush2.msra.mxu0 0.0
  %4407 = vmatprep.subr.mxu0 0.0
  %4408 = vmatpush2.msra.mxu0 0.0
  %4409 = vmatprep.subr.mxu0 0.0
  %4410 = vmatpush2.msra.mxu0 0.0
  %4411 = vmatprep.subr.mxu0 0.0
  %4412 = vmatpush2.msra.mxu0 0.0
  %4413 = vmatprep.subr.mxu0 0.0
  %4414 = vmatpush2.msra.mxu0 0.0
  %4415 = vmatprep.subr.mxu0 0.0
  %4416 = vmatpush2.msra.mxu0 0.0
  %4417 = vmatprep.subr.mxu0 0.0
  %4418 = vmatpush2.msra.mxu0 0.0
  %4419 = vmatprep.subr.mxu0 0.0
  %4420 = vmatpush2.msra.mxu0 0.0
  %4421 = vmatprep.subr.mxu0 0.0
  %4422 = vmatpush2.msra.mxu0 0.0
  %4423 = vmatprep.subr.mxu0 0.0
  %4424 = vmatpush2.msra.mxu0 0.0
  %4425 = vmatprep.subr.mxu0 0.0
  %4426 = vmatpush2.msra.mxu0 0.0
  %4427 = vmatprep.subr.mxu0 0.0
  %4428 = vmatpush2.msra.mxu0 0.0
  %4429 = vmatprep.subr.mxu0 0.0
  %4430 = vmatpush2.msra.mxu0 0.0
  %4431 = vmatprep.subr.mxu0 0.0
  %4432 = vmatpush2.msra.mxu0 0.0
  %4433 = vmatprep.mubr.f32.mxu0 0.0
  %4434 = vmatmul.mubr.f32.gmra.mxu0 %v4367
  %v4435 = vpop.f32.mrf.mxu0
  %v4436 = vadd.f32 0.0, %v4435
  %v4437 = vpop.f32.mrf.mxu0
  %4438 = vdwg.mxu0
  %v4439 = vadd.f32 %v4281, %v4436
  %s4440 = scalar_lea.vmem %s6, 64
  %v4441 = vld [vmem:[%s4440] sm:$0xff]
  %v4443 = vsel %vm3179, %v4441, 0
  %4445 = vmatprep.subr.mxu0 0.0
  %4446 = vmatpush1.msra.mxu0 0.0
  %4447 = vmatprep.subr.mxu0 0.0
  %4448 = vmatpush1.msra.mxu0 0.0
  %4449 = vmatprep.subr.mxu0 0.0
  %4450 = vmatpush1.msra.mxu0 0.0
  %4451 = vmatprep.subr.mxu0 0.0
  %4452 = vmatpush1.msra.mxu0 0.0
  %4453 = vmatprep.subr.mxu0 0.0
  %4454 = vmatpush1.msra.mxu0 0.0
  %4455 = vmatprep.subr.mxu0 0.0
  %4456 = vmatpush1.msra.mxu0 0.0
  %4457 = vmatprep.subr.mxu0 0.0
  %4458 = vmatpush1.msra.mxu0 0.0
  %4459 = vmatprep.subr.mxu0 0.0
  %4460 = vmatpush1.msra.mxu0 0.0
  %4461 = vmatprep.subr.mxu0 0.0
  %4462 = vmatpush1.msra.mxu0 0.0
  %4463 = vmatprep.subr.mxu0 0.0
  %4464 = vmatpush1.msra.mxu0 0.0
  %4465 = vmatprep.subr.mxu0 0.0
  %4466 = vmatpush1.msra.mxu0 0.0
  %4467 = vmatprep.subr.mxu0 0.0
  %4468 = vmatpush1.msra.mxu0 0.0
  %4469 = vmatprep.subr.mxu0 0.0
  %4470 = vmatpush1.msra.mxu0 0.0
  %4471 = vmatprep.subr.mxu0 0.0
  %4472 = vmatpush1.msra.mxu0 %v3177
  %4473 = vmatprep.subr.mxu0 0.0
  %4474 = vmatpush1.msra.mxu0 %v3176
  %4475 = vmatprep.subr.mxu0 0.0
  %4476 = vmatpush1.msra.mxu0 %v3175
  %4477 = vmatprep.subr.mxu0 0.0
  %4478 = vmatpush2.msra.mxu0 0.0
  %4479 = vmatprep.subr.mxu0 0.0
  %4480 = vmatpush2.msra.mxu0 0.0
  %4481 = vmatprep.subr.mxu0 0.0
  %4482 = vmatpush2.msra.mxu0 0.0
  %4483 = vmatprep.subr.mxu0 0.0
  %4484 = vmatpush2.msra.mxu0 0.0
  %4485 = vmatprep.subr.mxu0 0.0
  %4486 = vmatpush2.msra.mxu0 0.0
  %4487 = vmatprep.subr.mxu0 0.0
  %4488 = vmatpush2.msra.mxu0 0.0
  %4489 = vmatprep.subr.mxu0 0.0
  %4490 = vmatpush2.msra.mxu0 0.0
  %4491 = vmatprep.subr.mxu0 0.0
  %4492 = vmatpush2.msra.mxu0 0.0
  %4493 = vmatprep.subr.mxu0 0.0
  %4494 = vmatpush2.msra.mxu0 0.0
  %4495 = vmatprep.subr.mxu0 0.0
  %4496 = vmatpush2.msra.mxu0 0.0
  %4497 = vmatprep.subr.mxu0 0.0
  %4498 = vmatpush2.msra.mxu0 0.0
  %4499 = vmatprep.subr.mxu0 0.0
  %4500 = vmatpush2.msra.mxu0 0.0
  %4501 = vmatprep.subr.mxu0 0.0
  %4502 = vmatpush2.msra.mxu0 0.0
  %4503 = vmatprep.subr.mxu0 0.0
  %4504 = vmatpush2.msra.mxu0 0.0
  %4505 = vmatprep.subr.mxu0 0.0
  %4506 = vmatpush2.msra.mxu0 0.0
  %4507 = vmatprep.subr.mxu0 0.0
  %4508 = vmatpush2.msra.mxu0 0.0
  %4509 = vmatprep.mubr.f32.mxu0 0.0
  %4510 = vmatmul.mubr.f32.gmra.mxu0 %v4443
  %v4511 = vpop.f32.mrf.mxu0
  %v4512 = vadd.f32 0.0, %v4511
  %v4513 = vpop.f32.mrf.mxu0
  %4514 = vdwg.mxu0
  %s4515 = scalar_lea.vmem %s7, 512
  %v4516 = vld [vmem:[%s4515] sm:$0xff]
  %v4517 = vld [vmem:[%s4515 + $0x8] sm:$0xff]
  %v4518 = vld [vmem:[%s4515 + $0x10] sm:$0xff]
  %v4519 = vld [vmem:[%s4515 + $0x18] sm:$0xff]
  %v4520 = vld [vmem:[%s4515 + $0x20] sm:$0xff]
  %v4521 = vld [vmem:[%s4515 + $0x28] sm:$0xff]
  %v4522 = vld [vmem:[%s4515 + $0x30] sm:$0xff]
  %v4523 = vld [vmem:[%s4515 + $0x38] sm:$0xff]
  %v4525 = vsel %vm3345, %v4512, 0
  %4527 = vmatprep.subr.mxu0 0.0
  %4528 = vmatpush1.msra.mxu0 0.0
  %4529 = vmatprep.subr.mxu0 0.0
  %4530 = vmatpush1.msra.mxu0 0.0
  %4531 = vmatprep.subr.mxu0 0.0
  %4532 = vmatpush1.msra.mxu0 0.0
  %4533 = vmatprep.subr.mxu0 0.0
  %4534 = vmatpush1.msra.mxu0 0.0
  %4535 = vmatprep.subr.mxu0 0.0
  %4536 = vmatpush1.msra.mxu0 0.0
  %4537 = vmatprep.subr.mxu0 0.0
  %4538 = vmatpush1.msra.mxu0 0.0
  %4539 = vmatprep.subr.mxu0 0.0
  %4540 = vmatpush1.msra.mxu0 0.0
  %4541 = vmatprep.subr.mxu0 0.0
  %4542 = vmatpush1.msra.mxu0 0.0
  %4543 = vmatprep.subr.mxu0 0.0
  %4544 = vmatpush1.msra.mxu0 %v4523
  %4545 = vmatprep.subr.mxu0 0.0
  %4546 = vmatpush1.msra.mxu0 %v4522
  %4547 = vmatprep.subr.mxu0 0.0
  %4548 = vmatpush1.msra.mxu0 %v4521
  %4549 = vmatprep.subr.mxu0 0.0
  %4550 = vmatpush1.msra.mxu0 %v4520
  %4551 = vmatprep.subr.mxu0 0.0
  %4552 = vmatpush1.msra.mxu0 %v4519
  %4553 = vmatprep.subr.mxu0 0.0
  %4554 = vmatpush1.msra.mxu0 %v4518
  %4555 = vmatprep.subr.mxu0 0.0
  %4556 = vmatpush1.msra.mxu0 %v4517
  %4557 = vmatprep.subr.mxu0 0.0
  %4558 = vmatpush1.msra.mxu0 %v4516
  %4559 = vmatprep.subr.mxu0 0.0
  %4560 = vmatpush2.msra.mxu0 0.0
  %4561 = vmatprep.subr.mxu0 0.0
  %4562 = vmatpush2.msra.mxu0 0.0
  %4563 = vmatprep.subr.mxu0 0.0
  %4564 = vmatpush2.msra.mxu0 0.0
  %4565 = vmatprep.subr.mxu0 0.0
  %4566 = vmatpush2.msra.mxu0 0.0
  %4567 = vmatprep.subr.mxu0 0.0
  %4568 = vmatpush2.msra.mxu0 0.0
  %4569 = vmatprep.subr.mxu0 0.0
  %4570 = vmatpush2.msra.mxu0 0.0
  %4571 = vmatprep.subr.mxu0 0.0
  %4572 = vmatpush2.msra.mxu0 0.0
  %4573 = vmatprep.subr.mxu0 0.0
  %4574 = vmatpush2.msra.mxu0 0.0
  %4575 = vmatprep.subr.mxu0 0.0
  %4576 = vmatpush2.msra.mxu0 0.0
  %4577 = vmatprep.subr.mxu0 0.0
  %4578 = vmatpush2.msra.mxu0 0.0
  %4579 = vmatprep.subr.mxu0 0.0
  %4580 = vmatpush2.msra.mxu0 0.0
  %4581 = vmatprep.subr.mxu0 0.0
  %4582 = vmatpush2.msra.mxu0 0.0
  %4583 = vmatprep.subr.mxu0 0.0
  %4584 = vmatpush2.msra.mxu0 0.0
  %4585 = vmatprep.subr.mxu0 0.0
  %4586 = vmatpush2.msra.mxu0 0.0
  %4587 = vmatprep.subr.mxu0 0.0
  %4588 = vmatpush2.msra.mxu0 0.0
  %4589 = vmatprep.subr.mxu0 0.0
  %4590 = vmatpush2.msra.mxu0 0.0
  %4591 = vmatprep.mubr.f32.mxu0 0.0
  %4592 = vmatmul.mubr.f32.gmra.mxu0 %v4525
  %v4593 = vpop.f32.mrf.mxu0
  %v4594 = vadd.f32 0.0, %v4593
  %v4595 = vpop.f32.mrf.mxu0
  %4596 = vdwg.mxu0
  %v4597 = vadd.f32 %v4439, %v4594
  %v4598 = vld [vmem:[%s8] sm:$0x1]
  %v4600 = vlaneseq
  %v4601 = vshrl.u32 %v4600, 7
  %v4602 = vsub.s32 0, %v4601
  %v4603 = vrot.slane %v4598, %v4602
  %v4605 = vadd.f32 %v4597, %v4603
  %v4606 = vmax.f32 %v4605, 0.0
  %v4607 = vld [vmem:[%s9] sm:$0xff]
  %v4608 = vld [vmem:[%s9 + $0x8] sm:$0xff]
  %v4609 = vld [vmem:[%s9 + $0x10] sm:$0xff]
  %v4610 = vld [vmem:[%s9 + $0x18] sm:$0xff]
  %v4611 = vld [vmem:[%s9 + $0x20] sm:$0xff]
  %v4612 = vld [vmem:[%s9 + $0x28] sm:$0xff]
  %v4613 = vld [vmem:[%s9 + $0x30] sm:$0xff]
  %v4614 = vld [vmem:[%s9 + $0x38] sm:$0xff]
  %v4615 = vld [vmem:[%s9 + $0x40] sm:$0xff]
  %v4616 = vld [vmem:[%s9 + $0x48] sm:$0xff]
  %v4617 = vld [vmem:[%s9 + $0x50] sm:$0xff]
  %v4618 = vld [vmem:[%s9 + $0x58] sm:$0xff]
  %v4619 = vld [vmem:[%s9 + $0x60] sm:$0xff]
  %v4620 = vld [vmem:[%s9 + $0x68] sm:$0xff]
  %v4621 = vld [vmem:[%s9 + $0x70] sm:$0xff]
  %v4622 = vld [vmem:[%s9 + $0x78] sm:$0xff]
  %v4623 = vld [vmem:[%s10] sm:$0x3]
  %v4625 = vlaneseq
  %v4626 = vshrl.u32 %v4625, 7
  %v4627 = vsub.s32 0, %v4626
  %v4628 = vrot.slane %v4623, %v4627
  %v4629 = vlaneseq
  %v4630 = vshrl.u32 %v4629, 7
  %v4631 = vsub.s32 1, %v4630
  %v4632 = vrot.slane %v4623, %v4631
  %v4636 = vsel %vm3345, %v4606, 0
  %4638 = vmatprep.subr.mxu0 0.0
  %4639 = vmatpush1.msra.mxu0 0.0
  %4640 = vmatprep.subr.mxu0 0.0
  %4641 = vmatpush1.msra.mxu0 0.0
  %4642 = vmatprep.subr.mxu0 0.0
  %4643 = vmatpush1.msra.mxu0 0.0
  %4644 = vmatprep.subr.mxu0 0.0
  %4645 = vmatpush1.msra.mxu0 0.0
  %4646 = vmatprep.subr.mxu0 0.0
  %4647 = vmatpush1.msra.mxu0 0.0
  %4648 = vmatprep.subr.mxu0 0.0
  %4649 = vmatpush1.msra.mxu0 0.0
  %4650 = vmatprep.subr.mxu0 0.0
  %4651 = vmatpush1.msra.mxu0 0.0
  %4652 = vmatprep.subr.mxu0 0.0
  %4653 = vmatpush1.msra.mxu0 0.0
  %4654 = vmatprep.subr.mxu0 %v4622
  %4655 = vmatpush1.msra.mxu0 %v4621
  %4656 = vmatprep.subr.mxu0 %v4620
  %4657 = vmatpush1.msra.mxu0 %v4619
  %4658 = vmatprep.subr.mxu0 %v4618
  %4659 = vmatpush1.msra.mxu0 %v4617
  %4660 = vmatprep.subr.mxu0 %v4616
  %4661 = vmatpush1.msra.mxu0 %v4615
  %4662 = vmatprep.subr.mxu0 %v4614
  %4663 = vmatpush1.msra.mxu0 %v4613
  %4664 = vmatprep.subr.mxu0 %v4612
  %4665 = vmatpush1.msra.mxu0 %v4611
  %4666 = vmatprep.subr.mxu0 %v4610
  %4667 = vmatpush1.msra.mxu0 %v4609
  %4668 = vmatprep.subr.mxu0 %v4608
  %4669 = vmatpush1.msra.mxu0 %v4607
  %4670 = vmatprep.subr.mxu0 0.0
  %4671 = vmatpush2.msra.mxu0 0.0
  %4672 = vmatprep.subr.mxu0 0.0
  %4673 = vmatpush2.msra.mxu0 0.0
  %4674 = vmatprep.subr.mxu0 0.0
  %4675 = vmatpush2.msra.mxu0 0.0
  %4676 = vmatprep.subr.mxu0 0.0
  %4677 = vmatpush2.msra.mxu0 0.0
  %4678 = vmatprep.subr.mxu0 0.0
  %4679 = vmatpush2.msra.mxu0 0.0
  %4680 = vmatprep.subr.mxu0 0.0
  %4681 = vmatpush2.msra.mxu0 0.0
  %4682 = vmatprep.subr.mxu0 0.0
  %4683 = vmatpush2.msra.mxu0 0.0
  %4684 = vmatprep.subr.mxu0 0.0
  %4685 = vmatpush2.msra.mxu0 0.0
  %4686 = vmatprep.subr.mxu0 0.0
  %4687 = vmatpush2.msra.mxu0 0.0
  %4688 = vmatprep.subr.mxu0 0.0
  %4689 = vmatpush2.msra.mxu0 0.0
  %4690 = vmatprep.subr.mxu0 0.0
  %4691 = vmatpush2.msra.mxu0 0.0
  %4692 = vmatprep.subr.mxu0 0.0
  %4693 = vmatpush2.msra.mxu0 0.0
  %4694 = vmatprep.subr.mxu0 0.0
  %4695 = vmatpush2.msra.mxu0 0.0
  %4696 = vmatprep.subr.mxu0 0.0
  %4697 = vmatpush2.msra.mxu0 0.0
  %4698 = vmatprep.subr.mxu0 0.0
  %4699 = vmatpush2.msra.mxu0 0.0
  %4700 = vmatprep.subr.mxu0 0.0
  %4701 = vmatpush2.msra.mxu0 0.0
  %4702 = vmatprep.mubr.f32.mxu0 0.0
  %4703 = vmatmul.mubr.f32.gmra.mxu0 %v4636
  %v4704 = vpop.f32.mrf.mxu0
  %v4705 = vadd.f32 %v4628, %v4704
  %v4706 = vpop.f32.mrf.mxu0
  %v4707 = vadd.f32 %v4632, %v4706
  %4708 = vdwg.mxu0
  %v4709 = vmax.f32 %v4705, 0.0
  %v4710 = vmax.f32 %v4707, 0.0
  %v4711 = vld [vmem:[%s11] sm:$0xff]
  %v4712 = vld [vmem:[%s11 + $0x8] sm:$0xff]
  %v4713 = vld [vmem:[%s11 + $0x10] sm:$0xff]
  %v4714 = vld [vmem:[%s11 + $0x18] sm:$0xff]
  %v4715 = vld [vmem:[%s11 + $0x20] sm:$0xff]
  %v4716 = vld [vmem:[%s11 + $0x28] sm:$0xff]
  %v4717 = vld [vmem:[%s11 + $0x30] sm:$0xff]
  %v4718 = vld [vmem:[%s11 + $0x38] sm:$0xff]
  %v4719 = vld [vmem:[%s11 + $0x40] sm:$0xff]
  %v4720 = vld [vmem:[%s11 + $0x48] sm:$0xff]
  %v4721 = vld [vmem:[%s11 + $0x50] sm:$0xff]
  %v4722 = vld [vmem:[%s11 + $0x58] sm:$0xff]
  %v4723 = vld [vmem:[%s11 + $0x60] sm:$0xff]
  %v4724 = vld [vmem:[%s11 + $0x68] sm:$0xff]
  %v4725 = vld [vmem:[%s11 + $0x70] sm:$0xff]
  %v4726 = vld [vmem:[%s11 + $0x78] sm:$0xff]
  %v4727 = vld [vmem:[%s11 + $0x80] sm:$0xff]
  %v4728 = vld [vmem:[%s11 + $0x88] sm:$0xff]
  %v4729 = vld [vmem:[%s11 + $0x90] sm:$0xff]
  %v4730 = vld [vmem:[%s11 + $0x98] sm:$0xff]
  %v4731 = vld [vmem:[%s11 + $0xa0] sm:$0xff]
  %v4732 = vld [vmem:[%s11 + $0xa8] sm:$0xff]
  %v4733 = vld [vmem:[%s11 + $0xb0] sm:$0xff]
  %v4734 = vld [vmem:[%s11 + $0xb8] sm:$0xff]
  %v4735 = vld [vmem:[%s11 + $0xc0] sm:$0xff]
  %v4736 = vld [vmem:[%s11 + $0xc8] sm:$0xff]
  %v4737 = vld [vmem:[%s11 + $0xd0] sm:$0xff]
  %v4738 = vld [vmem:[%s11 + $0xd8] sm:$0xff]
  %v4739 = vld [vmem:[%s11 + $0xe0] sm:$0xff]
  %v4740 = vld [vmem:[%s11 + $0xe8] sm:$0xff]
  %v4741 = vld [vmem:[%s11 + $0xf0] sm:$0xff]
  %v4742 = vld [vmem:[%s11 + $0xf8] sm:$0xff]
  %v4743 = vld [vmem:[%s12] sm:$0x1]
  %v4745 = vlaneseq
  %v4746 = vshrl.u32 %v4745, 7
  %v4747 = vsub.s32 0, %v4746
  %v4748 = vrot.slane %v4743, %v4747
  %4750 = vmatprep.subr.mxu0 0.0
  %4751 = vmatpush1.msra.mxu0 %v4726
  %4752 = vmatprep.subr.mxu0 0.0
  %4753 = vmatpush1.msra.mxu0 %v4725
  %4754 = vmatprep.subr.mxu0 0.0
  %4755 = vmatpush1.msra.mxu0 %v4724
  %4756 = vmatprep.subr.mxu0 0.0
  %4757 = vmatpush1.msra.mxu0 %v4723
  %4758 = vmatprep.subr.mxu0 0.0
  %4759 = vmatpush1.msra.mxu0 %v4722
  %4760 = vmatprep.subr.mxu0 0.0
  %4761 = vmatpush1.msra.mxu0 %v4721
  %4762 = vmatprep.subr.mxu0 0.0
  %4763 = vmatpush1.msra.mxu0 %v4720
  %4764 = vmatprep.subr.mxu0 0.0
  %4765 = vmatpush1.msra.mxu0 %v4719
  %4766 = vmatprep.subr.mxu0 0.0
  %4767 = vmatpush1.msra.mxu0 %v4718
  %4768 = vmatprep.subr.mxu0 0.0
  %4769 = vmatpush1.msra.mxu0 %v4717
  %4770 = vmatprep.subr.mxu0 0.0
  %4771 = vmatpush1.msra.mxu0 %v4716
  %4772 = vmatprep.subr.mxu0 0.0
  %4773 = vmatpush1.msra.mxu0 %v4715
  %4774 = vmatprep.subr.mxu0 0.0
  %4775 = vmatpush1.msra.mxu0 %v4714
  %4776 = vmatprep.subr.mxu0 0.0
  %4777 = vmatpush1.msra.mxu0 %v4713
  %4778 = vmatprep.subr.mxu0 0.0
  %4779 = vmatpush1.msra.mxu0 %v4712
  %4780 = vmatprep.subr.mxu0 0.0
  %4781 = vmatpush1.msra.mxu0 %v4711
  %4782 = vmatprep.subr.mxu0 0.0
  %4783 = vmatpush2.msra.mxu0 %v4742
  %4784 = vmatprep.subr.mxu0 0.0
  %4785 = vmatpush2.msra.mxu0 %v4741
  %4786 = vmatprep.subr.mxu0 0.0
  %4787 = vmatpush2.msra.mxu0 %v4740
  %4788 = vmatprep.subr.mxu0 0.0
  %4789 = vmatpush2.msra.mxu0 %v4739
  %4790 = vmatprep.subr.mxu0 0.0
  %4791 = vmatpush2.msra.mxu0 %v4738
  %4792 = vmatprep.subr.mxu0 0.0
  %4793 = vmatpush2.msra.mxu0 %v4737
  %4794 = vmatprep.subr.mxu0 0.0
  %4795 = vmatpush2.msra.mxu0 %v4736
  %4796 = vmatprep.subr.mxu0 0.0
  %4797 = vmatpush2.msra.mxu0 %v4735
  %4798 = vmatprep.subr.mxu0 0.0
  %4799 = vmatpush2.msra.mxu0 %v4734
  %4800 = vmatprep.subr.mxu0 0.0
  %4801 = vmatpush2.msra.mxu0 %v4733
  %4802 = vmatprep.subr.mxu0 0.0
  %4803 = vmatpush2.msra.mxu0 %v4732
  %4804 = vmatprep.subr.mxu0 0.0
  %4805 = vmatpush2.msra.mxu0 %v4731
  %4806 = vmatprep.subr.mxu0 0.0
  %4807 = vmatpush2.msra.mxu0 %v4730
  %4808 = vmatprep.subr.mxu0 0.0
  %4809 = vmatpush2.msra.mxu0 %v4729
  %4810 = vmatprep.subr.mxu0 0.0
  %4811 = vmatpush2.msra.mxu0 %v4728
  %4812 = vmatprep.subr.mxu0 0.0
  %4813 = vmatpush2.msra.mxu0 %v4727
  %4814 = vmatprep.mubr.f32.mxu0 %v4710
  %4815 = vmatmul.mubr.f32.gmra.mxu0 %v4709
  %v4816 = vpop.f32.mrf.mxu0
  %v4817 = vadd.f32 %v4748, %v4816
  %v4818 = vpop.f32.mrf.mxu0
  %4819 = vdwg.mxu0
  %v4820 = vlaneseq
  %v4821 = vand.u32 %v4820, 127
  %vm4822 = vcmp.lt.s32.totalorder %v4821, 5
  %v4823 = vsel %vm4822, %v4817, -1e+30
  %4824 = vmax.xlane.f32.xlu0 %v4823
  %v4825 = vpop.xlane.xlu0 %4824
  %v4826 = vsub.f32 %v4823, %v4825
  %v4827 = vmul.f32 %v4826, 1.442695
  %v4828 = vpow.pop %v4827
  %4829 = vadd.xlane.f32.xlu0 %v4828
  %v4830 = vpop.xlane.xlu0 %4829
  %v4831 = vrcp.pop %v4830
  %v4832 = vmul.f32 %v4828, %v4831
  %4833 = vst [vmem:[%s13] sm:$0xff] %v4832
  // Predicated region
  $region54: #{forward.1} parent=0 // pred_check
    _
  $region55: #{forward.1} parent=0 // pred_check_branch
    %4835 = sbr.rel (0) target = $region57
  $region56: #{forward.1} parent=0 // pred_region
    _
  $region57: #{forward.1} parent=0 // pred_fallthru
    _
  // Predicated region
  $region58: #{forward.1} parent=0 // pred_check
    _
  $region59: #{forward.1} parent=0 // pred_check_branch
    %4837 = sbr.rel (0) target = $region61
  $region60: #{forward.1} parent=0 // pred_region
    _
  $region61: #{forward.1} parent=0 // pred_fallthru
    _

</llo_original>
